<compile_context>
chip_gen: v7x
topology: tpu7x:2x2x1
jax: 0.10.0
libtpu: 0.0.40
codegen_flags: <defaults>
</compile_context>

<pallas_src>
import jax
import jax.numpy as jnp
import numpy as np
from jax.experimental import pallas as pl
from jax.experimental.pallas import tpu as pltpu  # noqa: F401  (kept for TPU-specific tuning hooks)

BN_EPS = 1e-5
LANE = 128


def _round_up(n, m):
    return ((n + m - 1) // m) * m


# ----------------------------------------------------------------------------
# Single fused kernel: 4 conv blocks + pool + head.
# ----------------------------------------------------------------------------
def cnn_kernel(x_ref,
               w1, wd1, am1, as1,
               w2, wd2, am2, as2,
               w3, wd3, am3, as3,
               w4, wd4, am4, as4,
               hw_ref, hb_ref,
               out_ref):
    # x_ref   : (B, L, 128)            input, channels zero-padded to 128 lanes
    # w{i}    : (K_i*Cin_pad, Cout_pad) im2col conv weights (tap-major rows)
    # wd{i}   : (Cin_pad, Cout_pad)     1x1 downsample weights
    # am{i}/as{i}: (2, Cout_pad)        row0 = scale, row1 = shift (BN (+bias) folded)
    # hw_ref  : (256, S)  head weights; hb_ref: (1, S) head bias
    # out_ref : (B, S)
    B, L, _ = x_ref.shape
    Ks = (5, 5, 3, 3)
    layers = ((w1, wd1, am1, as1), (w2, wd2, am2, as2),
              (w3, wd3, am3, as3), (w4, wd4, am4, as4))

    h = x_ref[...]                                            # (B, L, 128) f32

    for K, (w_ref, wd_ref, am_ref, as_ref) in zip(Ks, layers):
        pad = K // 2
        Cin = h.shape[-1]
        Cout = w_ref.shape[-1]

        # ---- im2col with in-kernel replicate padding:  (B*L, K*Cin) ----
        cols = []
        for b in range(B):                                    # static unroll, B=2
            v = h[b]                                          # (L, Cin)
            vp = jnp.concatenate([v[:1]] * pad + [v] + [v[L - 1:]] * pad, axis=0)
            cols.append(jnp.concatenate([vp[t:t + L] for t in range(K)], axis=1))
        col = jnp.concatenate(cols, axis=0)                   # (B*L, K*Cin)
        hm = h.reshape(B * L, Cin)                            # (B*L, Cin) skip input

        # ---- main path: one deep-contraction MXU matmul + folded BN + LeakyReLU ----
        am = am_ref[...]
        y = jnp.dot(col, w_ref[...], preferred_element_type=jnp.float32)
        y = y * am[0:1, :] + am[1:2, :]
        y = jnp.where(y > 0, y, 0.1 * y)                      # LeakyReLU(0.1)

        # ---- skip path: 1x1 conv + folded BN ----
        asf = as_ref[...]
        z = jnp.dot(hm, wd_ref[...], preferred_element_type=jnp.float32)
        z = z * asf[0:1, :] + asf[1:2, :]

        h = jnp.maximum(y + z, 0.0).reshape(B, L, Cout)       # ReLU

    # ---- head: AdaptiveAvgPool1d(1) + Linear(256, S) + ReLU ----
    pooled = jnp.mean(h, axis=1)                              # (B, 256)
    y = jnp.dot(pooled, hw_ref[...], preferred_element_type=jnp.float32)
    y = y + hb_ref[...]
    out_ref[...] = jnp.maximum(y, 0.0)


@jax.jit
def cnn_forward(x, kparams):
    # x: (B, seq_len, input_dim) -- same layout as the PyTorch module's input.
    B, L, Cin = x.shape
    S = kparams["head_w"].shape[1]
    x128 = jnp.pad(x, ((0, 0), (0, 0), (0, LANE - Cin)))      # lane-dense input
    args = [x128]
    for blk in kparams["blocks"]:
        args += [blk["w"], blk["wd"], blk["aff_main"], blk["aff_skip"]]
    args += [kparams["head_w"], kparams["head_b"]]
    out = pl.pallas_call(
        cnn_kernel,
        out_shape=jax.ShapeDtypeStruct((B, S), jnp.float32),
    )(*args)
    return out.reshape(-1)                                    # .view(-1)


# ----------------------------------------------------------------------------
# Parameter construction (PyTorch-layout) and folding/padding for the kernel.
# ----------------------------------------------------------------------------
def make_torch_block_params(key, cin, cout, k):
    ks = jax.random.split(key, 11)
    return {
        "w":  jax.random.normal(ks[0], (cout, cin, k), jnp.float32) * 0.1,   # Conv1d weight
        "b":  jax.random.normal(ks[1], (cout,), jnp.float32) * 0.1,          # Conv1d bias
        "g1": 1.0 + 0.1 * jax.random.normal(ks[2], (cout,), jnp.float32),    # BN1 gamma
        "b1": 0.1 * jax.random.normal(ks[3], (cout,), jnp.float32),          # BN1 beta
        "m1": 0.1 * jax.random.normal(ks[4], (cout,), jnp.float32),          # BN1 running_mean
        "v1": 1.0 + 0.1 * jnp.abs(jax.random.normal(ks[5], (cout,), jnp.float32)),
        "wd": jax.random.normal(ks[6], (cout, cin, 1), jnp.float32) * 0.1,   # downsample 1x1
        "g2": 1.0 + 0.1 * jax.random.normal(ks[7], (cout,), jnp.float32),
        "b2": 0.1 * jax.random.normal(ks[8], (cout,), jnp.float32),
        "m2": 0.1 * jax.random.normal(ks[9], (cout,), jnp.float32),
        "v2": 1.0 + 0.1 * jnp.abs(jax.random.normal(ks[10], (cout,), jnp.float32)),
    }


def fold_bn(gamma, beta, mean, var, conv_bias=None):
    scale = gamma / jnp.sqrt(var + BN_EPS)
    bias = conv_bias if conv_bias is not None else jnp.zeros_like(mean)
    shift = (bias - mean) * scale + beta
    return jnp.stack([scale, shift], axis=0)                  # (2, Cout)


def fold_block_for_kernel(tblk, cin_pad, cout_pad):
    cout, cin, k = tblk["w"].shape
    w = jnp.transpose(tblk["w"], (2, 1, 0))                   # (K, Cin, Cout)
    w = jnp.pad(w, ((0, 0), (0, cin_pad - cin), (0, cout_pad - cout)))
    w = w.reshape(k * cin_pad, cout_pad)                      # tap-major im2col layout
    wd = jnp.pad(jnp.transpose(tblk["wd"][:, :, 0], (1, 0)),
                 ((0, cin_pad - cin), (0, cout_pad - cout)))  # (Cin_pad, Cout_pad)
    am = jnp.pad(fold_bn(tblk["g1"], tblk["b1"], tblk["m1"], tblk["v1"], tblk["b"]),
                 ((0, 0), (0, cout_pad - cout)))
    asf = jnp.pad(fold_bn(tblk["g2"], tblk["b2"], tblk["m2"], tblk["v2"]),
                  ((0, 0), (0, cout_pad - cout)))
    return {"w": w, "wd": wd, "aff_main": am, "aff_skip": asf}


# ----------------------------------------------------------------------------
# Pure-JAX reference (uses the raw PyTorch-layout parameters, unfolded BN)
# ----------------------------------------------------------------------------
def reference_forward(x, tparams):
    h = x                                                     # (B, L, Cin) channels-last
    for blk in tparams["blocks"]:
        B, L, _ = h.shape
        w = blk["w"]                                          # (Cout, Cin, K)
        K = w.shape[2]
        pad = K // 2
        hp = jnp.pad(h, ((0, 0), (pad, pad), (0, 0)), mode="edge")   # replicate pad
        y = jnp.zeros((B, L, w.shape[0]), jnp.float32)
        for t in range(K):
            y = y + jnp.einsum("blc,oc->blo", hp[:, t:t + L, :], w[:, :, t])
        y = y + blk["b"]
        y = (y - blk["m1"]) / jnp.sqrt(blk["v1"] + BN_EPS) * blk["g1"] + blk["b1"]
        y = jnp.where(y > 0, y, 0.1 * y)
        z = jnp.einsum("blc,oc->blo", h, blk["wd"][:, :, 0])
        z = (z - blk["m2"]) / jnp.sqrt(blk["v2"] + BN_EPS) * blk["g2"] + blk["b2"]
        h = jnp.maximum(y + z, 0.0)
    pooled = jnp.mean(h, axis=1)                              # (B, 256)
    y = jnp.maximum(pooled @ tparams["head_w"].T + tparams["head_b"], 0.0)
    return y.reshape(-1)


if __name__ == "__main__":
    B, SEQ_LEN, INPUT_DIM = 2, 16, 4

    key = jax.random.PRNGKey(0)
    keys = jax.random.split(key, 8)
    x = jax.random.normal(keys[0], (B, SEQ_LEN, INPUT_DIM), jnp.float32)

    blocks_cfg = [(INPUT_DIM, 64, 5), (64, 96, 5), (96, 128, 3), (128, 256, 3)]
    tblocks = [make_torch_block_params(keys[1 + i], cin, cout, k)
               for i, (cin, cout, k) in enumerate(blocks_cfg)]

    # Head: nn.Linear(256, seq_len) -- PyTorch weight shape (S, 256)
    head_w_torch = jax.random.normal(keys[5], (SEQ_LEN, 256), jnp.float32) * 0.05
    head_b_torch = jax.random.normal(keys[6], (SEQ_LEN,), jnp.float32) * 0.05

    kblocks = [fold_block_for_kernel(tb, _round_up(cin, LANE), _round_up(cout, LANE))
               for tb, (cin, cout, k) in zip(tblocks, blocks_cfg)]
    kparams = {
        "blocks": kblocks,
        "head_w": head_w_torch.T,                 # (256, S) for channels-last matmul
        "head_b": head_b_torch.reshape(1, SEQ_LEN),
    }
    tparams = {"blocks": tblocks, "head_w": head_w_torch, "head_b": head_b_torch}

    out = jax.block_until_ready(cnn_forward(x, kparams))
    ref = jax.block_until_ready(reference_forward(x, tparams))

    assert out.shape == (B * SEQ_LEN,), out.shape
    assert np.allclose(np.asarray(out), np.asarray(ref), rtol=2e-3, atol=2e-3), \
        "Pallas output mismatch vs JAX reference"
    print("KERNEL_OK")
</pallas_src>

<mosaic_0001>
module attributes {stable_mosaic.version = 11 : i64} {
  func.func @cnn_kernel(%arg0: memref<2x16x128xf32, #tpu.memory_space<vmem>>, %arg1: memref<640x128xf32, #tpu.memory_space<vmem>>, %arg2: memref<128x128xf32, #tpu.memory_space<vmem>>, %arg3: memref<2x128xf32, #tpu.memory_space<vmem>>, %arg4: memref<2x128xf32, #tpu.memory_space<vmem>>, %arg5: memref<640x128xf32, #tpu.memory_space<vmem>>, %arg6: memref<128x128xf32, #tpu.memory_space<vmem>>, %arg7: memref<2x128xf32, #tpu.memory_space<vmem>>, %arg8: memref<2x128xf32, #tpu.memory_space<vmem>>, %arg9: memref<384x128xf32, #tpu.memory_space<vmem>>, %arg10: memref<128x128xf32, #tpu.memory_space<vmem>>, %arg11: memref<2x128xf32, #tpu.memory_space<vmem>>, %arg12: memref<2x128xf32, #tpu.memory_space<vmem>>, %arg13: memref<384x256xf32, #tpu.memory_space<vmem>>, %arg14: memref<128x256xf32, #tpu.memory_space<vmem>>, %arg15: memref<2x256xf32, #tpu.memory_space<vmem>>, %arg16: memref<2x256xf32, #tpu.memory_space<vmem>>, %arg17: memref<256x16xf32, #tpu.memory_space<vmem>>, %arg18: memref<1x16xf32, #tpu.memory_space<vmem>>, %arg19: memref<2x16xf32, #tpu.memory_space<vmem>>) attributes {dimension_semantics = [], scalar_prefetch = 0 : i64, scratch_operands = 0 : i64, tpu.core_type = #tpu.core_type<tc>} {
    %c0 = arith.constant 0 : index
    %c0_0 = arith.constant 0 : index
    %c0_1 = arith.constant 0 : index
    %0 = vector.load %arg0[%c0, %c0_0, %c0_1] : memref<2x16x128xf32, #tpu.memory_space<vmem>>, vector<2x16x128xf32>
    %1 = vector.extract_strided_slice %0 {offsets = [0, 0, 0], sizes = [1, 16, 128], strides = [1, 1, 1]} : vector<2x16x128xf32> to vector<1x16x128xf32>
    %2 = vector.shape_cast %1 : vector<1x16x128xf32> to vector<16x128xf32>
    %3 = vector.extract_strided_slice %2 {offsets = [0, 0], sizes = [1, 128], strides = [1, 1]} : vector<16x128xf32> to vector<1x128xf32>
    %4 = vector.extract_strided_slice %2 {offsets = [15, 0], sizes = [1, 128], strides = [1, 1]} : vector<16x128xf32> to vector<1x128xf32>
    %5 = tpu.concatenate %3, %3, %2, %4, %4 in 0 : vector<1x128xf32>, vector<1x128xf32>, vector<16x128xf32>, vector<1x128xf32>, vector<1x128xf32> -> vector<20x128xf32>
    %6 = vector.extract_strided_slice %5 {offsets = [0, 0], sizes = [16, 128], strides = [1, 1]} : vector<20x128xf32> to vector<16x128xf32>
    %7 = vector.extract_strided_slice %5 {offsets = [1, 0], sizes = [16, 128], strides = [1, 1]} : vector<20x128xf32> to vector<16x128xf32>
    %8 = vector.extract_strided_slice %5 {offsets = [2, 0], sizes = [16, 128], strides = [1, 1]} : vector<20x128xf32> to vector<16x128xf32>
    %9 = vector.extract_strided_slice %5 {offsets = [3, 0], sizes = [16, 128], strides = [1, 1]} : vector<20x128xf32> to vector<16x128xf32>
    %10 = vector.extract_strided_slice %5 {offsets = [4, 0], sizes = [16, 128], strides = [1, 1]} : vector<20x128xf32> to vector<16x128xf32>
    %11 = tpu.concatenate %6, %7, %8, %9, %10 in 1 : vector<16x128xf32>, vector<16x128xf32>, vector<16x128xf32>, vector<16x128xf32>, vector<16x128xf32> -> vector<16x640xf32>
    %12 = vector.extract_strided_slice %0 {offsets = [1, 0, 0], sizes = [1, 16, 128], strides = [1, 1, 1]} : vector<2x16x128xf32> to vector<1x16x128xf32>
    %13 = vector.shape_cast %12 : vector<1x16x128xf32> to vector<16x128xf32>
    %14 = vector.extract_strided_slice %13 {offsets = [0, 0], sizes = [1, 128], strides = [1, 1]} : vector<16x128xf32> to vector<1x128xf32>
    %15 = vector.extract_strided_slice %13 {offsets = [15, 0], sizes = [1, 128], strides = [1, 1]} : vector<16x128xf32> to vector<1x128xf32>
    %16 = tpu.concatenate %14, %14, %13, %15, %15 in 0 : vector<1x128xf32>, vector<1x128xf32>, vector<16x128xf32>, vector<1x128xf32>, vector<1x128xf32> -> vector<20x128xf32>
    %17 = vector.extract_strided_slice %16 {offsets = [0, 0], sizes = [16, 128], strides = [1, 1]} : vector<20x128xf32> to vector<16x128xf32>
    %18 = vector.extract_strided_slice %16 {offsets = [1, 0], sizes = [16, 128], strides = [1, 1]} : vector<20x128xf32> to vector<16x128xf32>
    %19 = vector.extract_strided_slice %16 {offsets = [2, 0], sizes = [16, 128], strides = [1, 1]} : vector<20x128xf32> to vector<16x128xf32>
    %20 = vector.extract_strided_slice %16 {offsets = [3, 0], sizes = [16, 128], strides = [1, 1]} : vector<20x128xf32> to vector<16x128xf32>
    %21 = vector.extract_strided_slice %16 {offsets = [4, 0], sizes = [16, 128], strides = [1, 1]} : vector<20x128xf32> to vector<16x128xf32>
    %22 = tpu.concatenate %17, %18, %19, %20, %21 in 1 : vector<16x128xf32>, vector<16x128xf32>, vector<16x128xf32>, vector<16x128xf32>, vector<16x128xf32> -> vector<16x640xf32>
    %23 = tpu.concatenate %11, %22 in 0 : vector<16x640xf32>, vector<16x640xf32> -> vector<32x640xf32>
    %24 = vector.shape_cast %0 : vector<2x16x128xf32> to vector<32x128xf32>
    %c0_2 = arith.constant 0 : index
    %c0_3 = arith.constant 0 : index
    %25 = vector.load %arg3[%c0_2, %c0_3] : memref<2x128xf32, #tpu.memory_space<vmem>>, vector<2x128xf32>
    %c0_4 = arith.constant 0 : index
    %c0_5 = arith.constant 0 : index
    %26 = vector.load %arg1[%c0_4, %c0_5] : memref<640x128xf32, #tpu.memory_space<vmem>>, vector<640x128xf32>
    %cst = arith.constant dense<0.000000e+00> : vector<32x128xf32>
    %27 = tpu.matmul %23, %26, %cst {dimension_numbers = #tpu.dot_dimension_numbers<[1], [0], [0], [1], [0, 0, 1, 1], [], []>} : vector<32x640xf32>, vector<640x128xf32>, vector<32x128xf32> -> vector<32x128xf32>
    %28 = vector.extract_strided_slice %25 {offsets = [0, 0], sizes = [1, 128], strides = [1, 1]} : vector<2x128xf32> to vector<1x128xf32>
    %29 = vector.broadcast %28 : vector<1x128xf32> to vector<32x128xf32>
    %30 = arith.mulf %27, %29 : vector<32x128xf32>
    %31 = vector.extract_strided_slice %25 {offsets = [1, 0], sizes = [1, 128], strides = [1, 1]} : vector<2x128xf32> to vector<1x128xf32>
    %32 = vector.broadcast %31 : vector<1x128xf32> to vector<32x128xf32>
    %33 = arith.addf %30, %32 : vector<32x128xf32>
    %cst_6 = arith.constant 0.000000e+00 : f32
    %34 = vector.broadcast %cst_6 : f32 to vector<32x128xf32>
    %35 = arith.cmpf ogt, %33, %34 : vector<32x128xf32>
    %cst_7 = arith.constant 1.000000e-01 : f32
    %36 = vector.broadcast %cst_7 : f32 to vector<32x128xf32>
    %37 = arith.mulf %36, %33 : vector<32x128xf32>
    %38 = arith.select %35, %33, %37 : vector<32x128xi1>, vector<32x128xf32>
    %c0_8 = arith.constant 0 : index
    %c0_9 = arith.constant 0 : index
    %39 = vector.load %arg4[%c0_8, %c0_9] : memref<2x128xf32, #tpu.memory_space<vmem>>, vector<2x128xf32>
    %c0_10 = arith.constant 0 : index
    %c0_11 = arith.constant 0 : index
    %40 = vector.load %arg2[%c0_10, %c0_11] : memref<128x128xf32, #tpu.memory_space<vmem>>, vector<128x128xf32>
    %cst_12 = arith.constant dense<0.000000e+00> : vector<32x128xf32>
    %41 = tpu.matmul %24, %40, %cst_12 {dimension_numbers = #tpu.dot_dimension_numbers<[1], [0], [0], [1], [0, 0, 1, 1], [], []>} : vector<32x128xf32>, vector<128x128xf32>, vector<32x128xf32> -> vector<32x128xf32>
    %42 = vector.extract_strided_slice %39 {offsets = [0, 0], sizes = [1, 128], strides = [1, 1]} : vector<2x128xf32> to vector<1x128xf32>
    %43 = vector.broadcast %42 : vector<1x128xf32> to vector<32x128xf32>
    %44 = arith.mulf %41, %43 : vector<32x128xf32>
    %45 = vector.extract_strided_slice %39 {offsets = [1, 0], sizes = [1, 128], strides = [1, 1]} : vector<2x128xf32> to vector<1x128xf32>
    %46 = vector.broadcast %45 : vector<1x128xf32> to vector<32x128xf32>
    %47 = arith.addf %44, %46 : vector<32x128xf32>
    %48 = arith.addf %38, %47 : vector<32x128xf32>
    %cst_13 = arith.constant 0.000000e+00 : f32
    %49 = vector.broadcast %cst_13 : f32 to vector<32x128xf32>
    %50 = arith.maximumf %48, %49 : vector<32x128xf32>
    %51 = vector.shape_cast %50 : vector<32x128xf32> to vector<2x16x128xf32>
    %52 = vector.extract_strided_slice %51 {offsets = [0, 0, 0], sizes = [1, 16, 128], strides = [1, 1, 1]} : vector<2x16x128xf32> to vector<1x16x128xf32>
    %53 = vector.shape_cast %52 : vector<1x16x128xf32> to vector<16x128xf32>
    %54 = vector.extract_strided_slice %53 {offsets = [0, 0], sizes = [1, 128], strides = [1, 1]} : vector<16x128xf32> to vector<1x128xf32>
    %55 = vector.extract_strided_slice %53 {offsets = [15, 0], sizes = [1, 128], strides = [1, 1]} : vector<16x128xf32> to vector<1x128xf32>
    %56 = tpu.concatenate %54, %54, %53, %55, %55 in 0 : vector<1x128xf32>, vector<1x128xf32>, vector<16x128xf32>, vector<1x128xf32>, vector<1x128xf32> -> vector<20x128xf32>
    %57 = vector.extract_strided_slice %56 {offsets = [0, 0], sizes = [16, 128], strides = [1, 1]} : vector<20x128xf32> to vector<16x128xf32>
    %58 = vector.extract_strided_slice %56 {offsets = [1, 0], sizes = [16, 128], strides = [1, 1]} : vector<20x128xf32> to vector<16x128xf32>
    %59 = vector.extract_strided_slice %56 {offsets = [2, 0], sizes = [16, 128], strides = [1, 1]} : vector<20x128xf32> to vector<16x128xf32>
    %60 = vector.extract_strided_slice %56 {offsets = [3, 0], sizes = [16, 128], strides = [1, 1]} : vector<20x128xf32> to vector<16x128xf32>
    %61 = vector.extract_strided_slice %56 {offsets = [4, 0], sizes = [16, 128], strides = [1, 1]} : vector<20x128xf32> to vector<16x128xf32>
    %62 = tpu.concatenate %57, %58, %59, %60, %61 in 1 : vector<16x128xf32>, vector<16x128xf32>, vector<16x128xf32>, vector<16x128xf32>, vector<16x128xf32> -> vector<16x640xf32>
    %63 = vector.extract_strided_slice %51 {offsets = [1, 0, 0], sizes = [1, 16, 128], strides = [1, 1, 1]} : vector<2x16x128xf32> to vector<1x16x128xf32>
    %64 = vector.shape_cast %63 : vector<1x16x128xf32> to vector<16x128xf32>
    %65 = vector.extract_strided_slice %64 {offsets = [0, 0], sizes = [1, 128], strides = [1, 1]} : vector<16x128xf32> to vector<1x128xf32>
    %66 = vector.extract_strided_slice %64 {offsets = [15, 0], sizes = [1, 128], strides = [1, 1]} : vector<16x128xf32> to vector<1x128xf32>
    %67 = tpu.concatenate %65, %65, %64, %66, %66 in 0 : vector<1x128xf32>, vector<1x128xf32>, vector<16x128xf32>, vector<1x128xf32>, vector<1x128xf32> -> vector<20x128xf32>
    %68 = vector.extract_strided_slice %67 {offsets = [0, 0], sizes = [16, 128], strides = [1, 1]} : vector<20x128xf32> to vector<16x128xf32>
    %69 = vector.extract_strided_slice %67 {offsets = [1, 0], sizes = [16, 128], strides = [1, 1]} : vector<20x128xf32> to vector<16x128xf32>
    %70 = vector.extract_strided_slice %67 {offsets = [2, 0], sizes = [16, 128], strides = [1, 1]} : vector<20x128xf32> to vector<16x128xf32>
    %71 = vector.extract_strided_slice %67 {offsets = [3, 0], sizes = [16, 128], strides = [1, 1]} : vector<20x128xf32> to vector<16x128xf32>
    %72 = vector.extract_strided_slice %67 {offsets = [4, 0], sizes = [16, 128], strides = [1, 1]} : vector<20x128xf32> to vector<16x128xf32>
    %73 = tpu.concatenate %68, %69, %70, %71, %72 in 1 : vector<16x128xf32>, vector<16x128xf32>, vector<16x128xf32>, vector<16x128xf32>, vector<16x128xf32> -> vector<16x640xf32>
    %74 = tpu.concatenate %62, %73 in 0 : vector<16x640xf32>, vector<16x640xf32> -> vector<32x640xf32>
    %75 = vector.shape_cast %51 : vector<2x16x128xf32> to vector<32x128xf32>
    %c0_14 = arith.constant 0 : index
    %c0_15 = arith.constant 0 : index
    %76 = vector.load %arg7[%c0_14, %c0_15] : memref<2x128xf32, #tpu.memory_space<vmem>>, vector<2x128xf32>
    %c0_16 = arith.constant 0 : index
    %c0_17 = arith.constant 0 : index
    %77 = vector.load %arg5[%c0_16, %c0_17] : memref<640x128xf32, #tpu.memory_space<vmem>>, vector<640x128xf32>
    %cst_18 = arith.constant dense<0.000000e+00> : vector<32x128xf32>
    %78 = tpu.matmul %74, %77, %cst_18 {dimension_numbers = #tpu.dot_dimension_numbers<[1], [0], [0], [1], [0, 0, 1, 1], [], []>} : vector<32x640xf32>, vector<640x128xf32>, vector<32x128xf32> -> vector<32x128xf32>
    %79 = vector.extract_strided_slice %76 {offsets = [0, 0], sizes = [1, 128], strides = [1, 1]} : vector<2x128xf32> to vector<1x128xf32>
    %80 = vector.broadcast %79 : vector<1x128xf32> to vector<32x128xf32>
    %81 = arith.mulf %78, %80 : vector<32x128xf32>
    %82 = vector.extract_strided_slice %76 {offsets = [1, 0], sizes = [1, 128], strides = [1, 1]} : vector<2x128xf32> to vector<1x128xf32>
    %83 = vector.broadcast %82 : vector<1x128xf32> to vector<32x128xf32>
    %84 = arith.addf %81, %83 : vector<32x128xf32>
    %cst_19 = arith.constant 0.000000e+00 : f32
    %85 = vector.broadcast %cst_19 : f32 to vector<32x128xf32>
    %86 = arith.cmpf ogt, %84, %85 : vector<32x128xf32>
    %cst_20 = arith.constant 1.000000e-01 : f32
    %87 = vector.broadcast %cst_20 : f32 to vector<32x128xf32>
    %88 = arith.mulf %87, %84 : vector<32x128xf32>
    %89 = arith.select %86, %84, %88 : vector<32x128xi1>, vector<32x128xf32>
    %c0_21 = arith.constant 0 : index
    %c0_22 = arith.constant 0 : index
    %90 = vector.load %arg8[%c0_21, %c0_22] : memref<2x128xf32, #tpu.memory_space<vmem>>, vector<2x128xf32>
    %c0_23 = arith.constant 0 : index
    %c0_24 = arith.constant 0 : index
    %91 = vector.load %arg6[%c0_23, %c0_24] : memref<128x128xf32, #tpu.memory_space<vmem>>, vector<128x128xf32>
    %cst_25 = arith.constant dense<0.000000e+00> : vector<32x128xf32>
    %92 = tpu.matmul %75, %91, %cst_25 {dimension_numbers = #tpu.dot_dimension_numbers<[1], [0], [0], [1], [0, 0, 1, 1], [], []>} : vector<32x128xf32>, vector<128x128xf32>, vector<32x128xf32> -> vector<32x128xf32>
    %93 = vector.extract_strided_slice %90 {offsets = [0, 0], sizes = [1, 128], strides = [1, 1]} : vector<2x128xf32> to vector<1x128xf32>
    %94 = vector.broadcast %93 : vector<1x128xf32> to vector<32x128xf32>
    %95 = arith.mulf %92, %94 : vector<32x128xf32>
    %96 = vector.extract_strided_slice %90 {offsets = [1, 0], sizes = [1, 128], strides = [1, 1]} : vector<2x128xf32> to vector<1x128xf32>
    %97 = vector.broadcast %96 : vector<1x128xf32> to vector<32x128xf32>
    %98 = arith.addf %95, %97 : vector<32x128xf32>
    %99 = arith.addf %89, %98 : vector<32x128xf32>
    %cst_26 = arith.constant 0.000000e+00 : f32
    %100 = vector.broadcast %cst_26 : f32 to vector<32x128xf32>
    %101 = arith.maximumf %99, %100 : vector<32x128xf32>
    %102 = vector.shape_cast %101 : vector<32x128xf32> to vector<2x16x128xf32>
    %103 = vector.extract_strided_slice %102 {offsets = [0, 0, 0], sizes = [1, 16, 128], strides = [1, 1, 1]} : vector<2x16x128xf32> to vector<1x16x128xf32>
    %104 = vector.shape_cast %103 : vector<1x16x128xf32> to vector<16x128xf32>
    %105 = vector.extract_strided_slice %104 {offsets = [0, 0], sizes = [1, 128], strides = [1, 1]} : vector<16x128xf32> to vector<1x128xf32>
    %106 = vector.extract_strided_slice %104 {offsets = [15, 0], sizes = [1, 128], strides = [1, 1]} : vector<16x128xf32> to vector<1x128xf32>
    %107 = tpu.concatenate %105, %104, %106 in 0 : vector<1x128xf32>, vector<16x128xf32>, vector<1x128xf32> -> vector<18x128xf32>
    %108 = vector.extract_strided_slice %107 {offsets = [0, 0], sizes = [16, 128], strides = [1, 1]} : vector<18x128xf32> to vector<16x128xf32>
    %109 = vector.extract_strided_slice %107 {offsets = [1, 0], sizes = [16, 128], strides = [1, 1]} : vector<18x128xf32> to vector<16x128xf32>
    %110 = vector.extract_strided_slice %107 {offsets = [2, 0], sizes = [16, 128], strides = [1, 1]} : vector<18x128xf32> to vector<16x128xf32>
    %111 = tpu.concatenate %108, %109, %110 in 1 : vector<16x128xf32>, vector<16x128xf32>, vector<16x128xf32> -> vector<16x384xf32>
    %112 = vector.extract_strided_slice %102 {offsets = [1, 0, 0], sizes = [1, 16, 128], strides = [1, 1, 1]} : vector<2x16x128xf32> to vector<1x16x128xf32>
    %113 = vector.shape_cast %112 : vector<1x16x128xf32> to vector<16x128xf32>
    %114 = vector.extract_strided_slice %113 {offsets = [0, 0], sizes = [1, 128], strides = [1, 1]} : vector<16x128xf32> to vector<1x128xf32>
    %115 = vector.extract_strided_slice %113 {offsets = [15, 0], sizes = [1, 128], strides = [1, 1]} : vector<16x128xf32> to vector<1x128xf32>
    %116 = tpu.concatenate %114, %113, %115 in 0 : vector<1x128xf32>, vector<16x128xf32>, vector<1x128xf32> -> vector<18x128xf32>
    %117 = vector.extract_strided_slice %116 {offsets = [0, 0], sizes = [16, 128], strides = [1, 1]} : vector<18x128xf32> to vector<16x128xf32>
    %118 = vector.extract_strided_slice %116 {offsets = [1, 0], sizes = [16, 128], strides = [1, 1]} : vector<18x128xf32> to vector<16x128xf32>
    %119 = vector.extract_strided_slice %116 {offsets = [2, 0], sizes = [16, 128], strides = [1, 1]} : vector<18x128xf32> to vector<16x128xf32>
    %120 = tpu.concatenate %117, %118, %119 in 1 : vector<16x128xf32>, vector<16x128xf32>, vector<16x128xf32> -> vector<16x384xf32>
    %121 = tpu.concatenate %111, %120 in 0 : vector<16x384xf32>, vector<16x384xf32> -> vector<32x384xf32>
    %122 = vector.shape_cast %102 : vector<2x16x128xf32> to vector<32x128xf32>
    %c0_27 = arith.constant 0 : index
    %c0_28 = arith.constant 0 : index
    %123 = vector.load %arg11[%c0_27, %c0_28] : memref<2x128xf32, #tpu.memory_space<vmem>>, vector<2x128xf32>
    %c0_29 = arith.constant 0 : index
    %c0_30 = arith.constant 0 : index
    %124 = vector.load %arg9[%c0_29, %c0_30] : memref<384x128xf32, #tpu.memory_space<vmem>>, vector<384x128xf32>
    %cst_31 = arith.constant dense<0.000000e+00> : vector<32x128xf32>
    %125 = tpu.matmul %121, %124, %cst_31 {dimension_numbers = #tpu.dot_dimension_numbers<[1], [0], [0], [1], [0, 0, 1, 1], [], []>} : vector<32x384xf32>, vector<384x128xf32>, vector<32x128xf32> -> vector<32x128xf32>
    %126 = vector.extract_strided_slice %123 {offsets = [0, 0], sizes = [1, 128], strides = [1, 1]} : vector<2x128xf32> to vector<1x128xf32>
    %127 = vector.broadcast %126 : vector<1x128xf32> to vector<32x128xf32>
    %128 = arith.mulf %125, %127 : vector<32x128xf32>
    %129 = vector.extract_strided_slice %123 {offsets = [1, 0], sizes = [1, 128], strides = [1, 1]} : vector<2x128xf32> to vector<1x128xf32>
    %130 = vector.broadcast %129 : vector<1x128xf32> to vector<32x128xf32>
    %131 = arith.addf %128, %130 : vector<32x128xf32>
    %cst_32 = arith.constant 0.000000e+00 : f32
    %132 = vector.broadcast %cst_32 : f32 to vector<32x128xf32>
    %133 = arith.cmpf ogt, %131, %132 : vector<32x128xf32>
    %cst_33 = arith.constant 1.000000e-01 : f32
    %134 = vector.broadcast %cst_33 : f32 to vector<32x128xf32>
    %135 = arith.mulf %134, %131 : vector<32x128xf32>
    %136 = arith.select %133, %131, %135 : vector<32x128xi1>, vector<32x128xf32>
    %c0_34 = arith.constant 0 : index
    %c0_35 = arith.constant 0 : index
    %137 = vector.load %arg12[%c0_34, %c0_35] : memref<2x128xf32, #tpu.memory_space<vmem>>, vector<2x128xf32>
    %c0_36 = arith.constant 0 : index
    %c0_37 = arith.constant 0 : index
    %138 = vector.load %arg10[%c0_36, %c0_37] : memref<128x128xf32, #tpu.memory_space<vmem>>, vector<128x128xf32>
    %cst_38 = arith.constant dense<0.000000e+00> : vector<32x128xf32>
    %139 = tpu.matmul %122, %138, %cst_38 {dimension_numbers = #tpu.dot_dimension_numbers<[1], [0], [0], [1], [0, 0, 1, 1], [], []>} : vector<32x128xf32>, vector<128x128xf32>, vector<32x128xf32> -> vector<32x128xf32>
    %140 = vector.extract_strided_slice %137 {offsets = [0, 0], sizes = [1, 128], strides = [1, 1]} : vector<2x128xf32> to vector<1x128xf32>
    %141 = vector.broadcast %140 : vector<1x128xf32> to vector<32x128xf32>
    %142 = arith.mulf %139, %141 : vector<32x128xf32>
    %143 = vector.extract_strided_slice %137 {offsets = [1, 0], sizes = [1, 128], strides = [1, 1]} : vector<2x128xf32> to vector<1x128xf32>
    %144 = vector.broadcast %143 : vector<1x128xf32> to vector<32x128xf32>
    %145 = arith.addf %142, %144 : vector<32x128xf32>
    %146 = arith.addf %136, %145 : vector<32x128xf32>
    %cst_39 = arith.constant 0.000000e+00 : f32
    %147 = vector.broadcast %cst_39 : f32 to vector<32x128xf32>
    %148 = arith.maximumf %146, %147 : vector<32x128xf32>
    %149 = vector.shape_cast %148 : vector<32x128xf32> to vector<2x16x128xf32>
    %150 = vector.extract_strided_slice %149 {offsets = [0, 0, 0], sizes = [1, 16, 128], strides = [1, 1, 1]} : vector<2x16x128xf32> to vector<1x16x128xf32>
    %151 = vector.shape_cast %150 : vector<1x16x128xf32> to vector<16x128xf32>
    %152 = vector.extract_strided_slice %151 {offsets = [0, 0], sizes = [1, 128], strides = [1, 1]} : vector<16x128xf32> to vector<1x128xf32>
    %153 = vector.extract_strided_slice %151 {offsets = [15, 0], sizes = [1, 128], strides = [1, 1]} : vector<16x128xf32> to vector<1x128xf32>
    %154 = tpu.concatenate %152, %151, %153 in 0 : vector<1x128xf32>, vector<16x128xf32>, vector<1x128xf32> -> vector<18x128xf32>
    %155 = vector.extract_strided_slice %154 {offsets = [0, 0], sizes = [16, 128], strides = [1, 1]} : vector<18x128xf32> to vector<16x128xf32>
    %156 = vector.extract_strided_slice %154 {offsets = [1, 0], sizes = [16, 128], strides = [1, 1]} : vector<18x128xf32> to vector<16x128xf32>
    %157 = vector.extract_strided_slice %154 {offsets = [2, 0], sizes = [16, 128], strides = [1, 1]} : vector<18x128xf32> to vector<16x128xf32>
    %158 = tpu.concatenate %155, %156, %157 in 1 : vector<16x128xf32>, vector<16x128xf32>, vector<16x128xf32> -> vector<16x384xf32>
    %159 = vector.extract_strided_slice %149 {offsets = [1, 0, 0], sizes = [1, 16, 128], strides = [1, 1, 1]} : vector<2x16x128xf32> to vector<1x16x128xf32>
    %160 = vector.shape_cast %159 : vector<1x16x128xf32> to vector<16x128xf32>
    %161 = vector.extract_strided_slice %160 {offsets = [0, 0], sizes = [1, 128], strides = [1, 1]} : vector<16x128xf32> to vector<1x128xf32>
    %162 = vector.extract_strided_slice %160 {offsets = [15, 0], sizes = [1, 128], strides = [1, 1]} : vector<16x128xf32> to vector<1x128xf32>
    %163 = tpu.concatenate %161, %160, %162 in 0 : vector<1x128xf32>, vector<16x128xf32>, vector<1x128xf32> -> vector<18x128xf32>
    %164 = vector.extract_strided_slice %163 {offsets = [0, 0], sizes = [16, 128], strides = [1, 1]} : vector<18x128xf32> to vector<16x128xf32>
    %165 = vector.extract_strided_slice %163 {offsets = [1, 0], sizes = [16, 128], strides = [1, 1]} : vector<18x128xf32> to vector<16x128xf32>
    %166 = vector.extract_strided_slice %163 {offsets = [2, 0], sizes = [16, 128], strides = [1, 1]} : vector<18x128xf32> to vector<16x128xf32>
    %167 = tpu.concatenate %164, %165, %166 in 1 : vector<16x128xf32>, vector<16x128xf32>, vector<16x128xf32> -> vector<16x384xf32>
    %168 = tpu.concatenate %158, %167 in 0 : vector<16x384xf32>, vector<16x384xf32> -> vector<32x384xf32>
    %169 = vector.shape_cast %149 : vector<2x16x128xf32> to vector<32x128xf32>
    %c0_40 = arith.constant 0 : index
    %c0_41 = arith.constant 0 : index
    %170 = vector.load %arg15[%c0_40, %c0_41] : memref<2x256xf32, #tpu.memory_space<vmem>>, vector<2x256xf32>
    %c0_42 = arith.constant 0 : index
    %c0_43 = arith.constant 0 : index
    %171 = vector.load %arg13[%c0_42, %c0_43] : memref<384x256xf32, #tpu.memory_space<vmem>>, vector<384x256xf32>
    %cst_44 = arith.constant dense<0.000000e+00> : vector<32x256xf32>
    %172 = tpu.matmul %168, %171, %cst_44 {dimension_numbers = #tpu.dot_dimension_numbers<[1], [0], [0], [1], [0, 0, 1, 1], [], []>} : vector<32x384xf32>, vector<384x256xf32>, vector<32x256xf32> -> vector<32x256xf32>
    %173 = vector.extract_strided_slice %170 {offsets = [0, 0], sizes = [1, 256], strides = [1, 1]} : vector<2x256xf32> to vector<1x256xf32>
    %174 = vector.broadcast %173 : vector<1x256xf32> to vector<32x256xf32>
    %175 = arith.mulf %172, %174 : vector<32x256xf32>
    %176 = vector.extract_strided_slice %170 {offsets = [1, 0], sizes = [1, 256], strides = [1, 1]} : vector<2x256xf32> to vector<1x256xf32>
    %177 = vector.broadcast %176 : vector<1x256xf32> to vector<32x256xf32>
    %178 = arith.addf %175, %177 : vector<32x256xf32>
    %cst_45 = arith.constant 0.000000e+00 : f32
    %179 = vector.broadcast %cst_45 : f32 to vector<32x256xf32>
    %180 = arith.cmpf ogt, %178, %179 : vector<32x256xf32>
    %cst_46 = arith.constant 1.000000e-01 : f32
    %181 = vector.broadcast %cst_46 : f32 to vector<32x256xf32>
    %182 = arith.mulf %181, %178 : vector<32x256xf32>
    %183 = arith.select %180, %178, %182 : vector<32x256xi1>, vector<32x256xf32>
    %c0_47 = arith.constant 0 : index
    %c0_48 = arith.constant 0 : index
    %184 = vector.load %arg16[%c0_47, %c0_48] : memref<2x256xf32, #tpu.memory_space<vmem>>, vector<2x256xf32>
    %c0_49 = arith.constant 0 : index
    %c0_50 = arith.constant 0 : index
    %185 = vector.load %arg14[%c0_49, %c0_50] : memref<128x256xf32, #tpu.memory_space<vmem>>, vector<128x256xf32>
    %cst_51 = arith.constant dense<0.000000e+00> : vector<32x256xf32>
    %186 = tpu.matmul %169, %185, %cst_51 {dimension_numbers = #tpu.dot_dimension_numbers<[1], [0], [0], [1], [0, 0, 1, 1], [], []>} : vector<32x128xf32>, vector<128x256xf32>, vector<32x256xf32> -> vector<32x256xf32>
    %187 = vector.extract_strided_slice %184 {offsets = [0, 0], sizes = [1, 256], strides = [1, 1]} : vector<2x256xf32> to vector<1x256xf32>
    %188 = vector.broadcast %187 : vector<1x256xf32> to vector<32x256xf32>
    %189 = arith.mulf %186, %188 : vector<32x256xf32>
    %190 = vector.extract_strided_slice %184 {offsets = [1, 0], sizes = [1, 256], strides = [1, 1]} : vector<2x256xf32> to vector<1x256xf32>
    %191 = vector.broadcast %190 : vector<1x256xf32> to vector<32x256xf32>
    %192 = arith.addf %189, %191 : vector<32x256xf32>
    %193 = arith.addf %183, %192 : vector<32x256xf32>
    %cst_52 = arith.constant 0.000000e+00 : f32
    %194 = vector.broadcast %cst_52 : f32 to vector<32x256xf32>
    %195 = arith.maximumf %193, %194 : vector<32x256xf32>
    %196 = vector.shape_cast %195 : vector<32x256xf32> to vector<2x16x256xf32>
    %cst_53 = arith.constant dense<0.000000e+00> : vector<2x256xf32>
    %197 = vector.multi_reduction <add>, %196, %cst_53 [1] : vector<2x16x256xf32> to vector<2x256xf32>
    %cst_54 = arith.constant 1.600000e+01 : f32
    %198 = vector.broadcast %cst_54 : f32 to vector<2x256xf32>
    %199 = arith.divf %197, %198 : vector<2x256xf32>
    %c0_55 = arith.constant 0 : index
    %c0_56 = arith.constant 0 : index
    %200 = vector.load %arg17[%c0_55, %c0_56] : memref<256x16xf32, #tpu.memory_space<vmem>>, vector<256x16xf32>
    %cst_57 = arith.constant dense<0.000000e+00> : vector<2x16xf32>
    %201 = tpu.matmul %199, %200, %cst_57 {dimension_numbers = #tpu.dot_dimension_numbers<[1], [0], [0], [1], [0, 0, 1, 1], [], []>} : vector<2x256xf32>, vector<256x16xf32>, vector<2x16xf32> -> vector<2x16xf32>
    %c0_58 = arith.constant 0 : index
    %c0_59 = arith.constant 0 : index
    %202 = vector.load %arg18[%c0_58, %c0_59] : memref<1x16xf32, #tpu.memory_space<vmem>>, vector<1x16xf32>
    %203 = vector.broadcast %202 : vector<1x16xf32> to vector<2x16xf32>
    %204 = arith.addf %201, %203 : vector<2x16xf32>
    %cst_60 = arith.constant 0.000000e+00 : f32
    %205 = vector.broadcast %cst_60 : f32 to vector<2x16xf32>
    %206 = arith.maximumf %204, %205 : vector<2x16xf32>
    %c0_61 = arith.constant 0 : index
    %c0_62 = arith.constant 0 : index
    %207 = vector.load %arg19[%c0_61, %c0_62] : memref<2x16xf32, #tpu.memory_space<vmem>>, vector<2x16xf32>
    tpu.vector_store %arg19[%c0_61, %c0_62], %206 {strides = array<i32>} : memref<2x16xf32, #tpu.memory_space<vmem>>, vector<2x16xf32>,
    return
  }
}

</mosaic_0001>

<llo_original>
// kernel: cnn_forward.1
$region0: #{cnn_forward.1}
  #allocation0 [shape = 'u32[]', space=smem, size = 0x4, offset = 0x4, fixed_abs, tag = 'smem constant byte address 0x4 - core index']
  #allocation1 [shape = 'u32[144,128]{1,0:T(1,128)}', space=vmem, size = 0x12000, scoped, tag = 'internal scratch']
  %s0 = inlined_call_operand.vmem [shape: f32[2,16,128], index: 0, kind: input, shape index: {}]
  %s1 = inlined_call_operand.hbm [shape: f32[640,128], index: 1, kind: input, shape index: {}]
  %s2 = inlined_call_operand.hbm [shape: f32[128,128], index: 2, kind: input, shape index: {}]
  %s3 = inlined_call_operand.vmem [shape: f32[2,128], index: 3, kind: input, shape index: {}]
  %s4 = inlined_call_operand.vmem [shape: f32[2,128], index: 4, kind: input, shape index: {}]
  %s5 = inlined_call_operand.hbm [shape: f32[640,128], index: 5, kind: input, shape index: {}]
  %s6 = inlined_call_operand.hbm [shape: f32[128,128], index: 6, kind: input, shape index: {}]
  %s7 = inlined_call_operand.vmem [shape: f32[2,128], index: 7, kind: input, shape index: {}]
  %s8 = inlined_call_operand.vmem [shape: f32[2,128], index: 8, kind: input, shape index: {}]
  %s9 = inlined_call_operand.vmem [shape: f32[384,128], index: 9, kind: input, shape index: {}]
  %s10 = inlined_call_operand.hbm [shape: f32[128,128], index: 10, kind: input, shape index: {}]
  %s11 = inlined_call_operand.vmem [shape: f32[2,128], index: 11, kind: input, shape index: {}]
  %s12 = inlined_call_operand.vmem [shape: f32[2,128], index: 12, kind: input, shape index: {}]
  %s13 = inlined_call_operand.hbm [shape: f32[384,256], index: 13, kind: input, shape index: {}]
  %s14 = inlined_call_operand.hbm [shape: f32[128,256], index: 14, kind: input, shape index: {}]
  %s15 = inlined_call_operand.vmem [shape: f32[2,256], index: 15, kind: input, shape index: {}]
  %s16 = inlined_call_operand.vmem [shape: f32[2,256], index: 16, kind: input, shape index: {}]
  %s17 = inlined_call_operand.vmem [shape: f32[256,16], index: 17, kind: input, shape index: {}]
  %s18 = inlined_call_operand.vmem [shape: f32[1,16], index: 18, kind: input, shape index: {}]
  %s19 = inlined_call_operand.vmem [shape: f32[2,16], index: 19, kind: output, shape index: {}]
  %s20 = sld [smem:[#allocation0]]
  $region114: #{cnn_forward.1} parent=0
    _
  %s22 = ssub.s32 1, %s20
  %s23 = scalar_select 0, %s22, %s20
  $region1: #{cnn_forward.1} parent=0
    #allocation2 [shape = 'u8[327680]{0}', space=vmem, size = 0x50000, scoped, tag = 'input window, operand 1, single buffered']
    #allocation3 [shape = 's32[1]{0}', space=sflag, size = 0x4, scoped, tag = 'scoped memory for cnn_forward.1']
    #allocation4 [shape = 'u8[65536]{0}', space=vmem, size = 0x10000, scoped, tag = 'input window, operand 2, single buffered']
    #allocation5 [shape = 's32[1]{0}', space=sflag, size = 0x4, scoped, tag = 'scoped memory for cnn_forward.1']
    #allocation6 [shape = 'u8[327680]{0}', space=vmem, size = 0x50000, scoped, tag = 'input window, operand 5, single buffered']
    #allocation7 [shape = 'u8[65536]{0}', space=vmem, size = 0x10000, scoped, tag = 'input window, operand 6, single buffered']
    #allocation8 [shape = 's32[1]{0}', space=sflag, size = 0x4, scoped, tag = 'scoped memory for cnn_forward.1']
    #allocation9 [shape = 'u8[65536]{0}', space=vmem, size = 0x10000, scoped, tag = 'input window, operand 10, single buffered']
    #allocation10 [shape = 'u8[393216]{0}', space=vmem, size = 0x60000, scoped, tag = 'input window, operand 13, single buffered']
    #allocation11 [shape = 's32[1]{0}', space=sflag, size = 0x4, scoped, tag = 'scoped memory for cnn_forward.1']
    #allocation12 [shape = 'u8[131072]{0}', space=vmem, size = 0x20000, scoped, tag = 'input window, operand 14, single buffered']
    %24 = vsyncpa [#allocation3], 0
    %25 = vsyncpa [#allocation5], 0
    %26 = vsyncpa [#allocation8], 0
    %27 = vsyncpa [#allocation11], 0
    // Predicated region
    $region2: #{cnn_forward.1} parent=1 // pred_check
      _
    $region3: #{cnn_forward.1} parent=1 // pred_check_branch
      %29 = sbr.rel (0) target = $region5
    $region4: #{cnn_forward.1} parent=1 // pred_region
      _
    $region5: #{cnn_forward.1} parent=1 // pred_fallthru
      _
    // Predicated region
    $region6: #{cnn_forward.1} parent=1 // pred_check
      _
    $region7: #{cnn_forward.1} parent=1 // pred_check_branch
      %31 = sbr.rel (0) target = $region9
    $region8: #{cnn_forward.1} parent=1 // pred_region
      %s33 = ssub.s32 10240, 10240
      %34 = vsyncadd [#allocation3], %s33
      %s35 = sshll.u32 [#allocation2], 4
      %s36 = int_to_ptr.vmem [resolvable:$true] %s35
      %41 = dma.hbm_to_vmem [thread:$0]  %s1, 10240, %s36, [#allocation3], 128, 128, 8
    $region9: #{cnn_forward.1} parent=1 // pred_fallthru
      _
    // Predicated region
    $region10: #{cnn_forward.1} parent=1 // pred_check
      _
    $region11: #{cnn_forward.1} parent=1 // pred_check_branch
      %43 = sbr.rel (0) target = $region13
    $region12: #{cnn_forward.1} parent=1 // pred_region
      %s45 = ssub.s32 2048, 2048
      %46 = vsyncadd [#allocation5], %s45
      %s47 = sshll.u32 [#allocation4], 4
      %s48 = int_to_ptr.vmem [resolvable:$true] %s47
      %53 = dma.hbm_to_vmem [thread:$0]  %s2, 2048, %s48, [#allocation5], 128, 128, 8
    $region13: #{cnn_forward.1} parent=1 // pred_fallthru
      _
    // Predicated region
    $region14: #{cnn_forward.1} parent=1 // pred_check
      _
    $region15: #{cnn_forward.1} parent=1 // pred_check_branch
      %55 = sbr.rel (0) target = $region17
    $region16: #{cnn_forward.1} parent=1 // pred_region
      _
    $region17: #{cnn_forward.1} parent=1 // pred_fallthru
      _
    // Predicated region
    $region18: #{cnn_forward.1} parent=1 // pred_check
      _
    $region19: #{cnn_forward.1} parent=1 // pred_check_branch
      %57 = sbr.rel (0) target = $region21
    $region20: #{cnn_forward.1} parent=1 // pred_region
      _
    $region21: #{cnn_forward.1} parent=1 // pred_fallthru
      _
    // Predicated region
    $region22: #{cnn_forward.1} parent=1 // pred_check
      _
    $region23: #{cnn_forward.1} parent=1 // pred_check_branch
      %59 = sbr.rel (0) target = $region25
    $region24: #{cnn_forward.1} parent=1 // pred_region
      %s61 = ssub.s32 10240, 10240
      %62 = vsyncadd [#allocation5], %s61
      %s63 = sshll.u32 [#allocation6], 4
      %s64 = int_to_ptr.vmem [resolvable:$true] %s63
      %69 = dma.hbm_to_vmem [thread:$0]  %s5, 10240, %s64, [#allocation5], 128, 128, 8
    $region25: #{cnn_forward.1} parent=1 // pred_fallthru
      _
    // Predicated region
    $region26: #{cnn_forward.1} parent=1 // pred_check
      _
    $region27: #{cnn_forward.1} parent=1 // pred_check_branch
      %71 = sbr.rel (0) target = $region29
    $region28: #{cnn_forward.1} parent=1 // pred_region
      %s73 = ssub.s32 2048, 2048
      %74 = vsyncadd [#allocation8], %s73
      %s75 = sshll.u32 [#allocation7], 4
      %s76 = int_to_ptr.vmem [resolvable:$true] %s75
      %81 = dma.hbm_to_vmem [thread:$0]  %s6, 2048, %s76, [#allocation8], 128, 128, 8
    $region29: #{cnn_forward.1} parent=1 // pred_fallthru
      _
    // Predicated region
    $region30: #{cnn_forward.1} parent=1 // pred_check
      _
    $region31: #{cnn_forward.1} parent=1 // pred_check_branch
      %83 = sbr.rel (0) target = $region33
    $region32: #{cnn_forward.1} parent=1 // pred_region
      _
    $region33: #{cnn_forward.1} parent=1 // pred_fallthru
      _
    // Predicated region
    $region34: #{cnn_forward.1} parent=1 // pred_check
      _
    $region35: #{cnn_forward.1} parent=1 // pred_check_branch
      %85 = sbr.rel (0) target = $region37
    $region36: #{cnn_forward.1} parent=1 // pred_region
      _
    $region37: #{cnn_forward.1} parent=1 // pred_fallthru
      _
    // Predicated region
    $region38: #{cnn_forward.1} parent=1 // pred_check
      _
    $region39: #{cnn_forward.1} parent=1 // pred_check_branch
      %87 = sbr.rel (0) target = $region41
    $region40: #{cnn_forward.1} parent=1 // pred_region
      _
    $region41: #{cnn_forward.1} parent=1 // pred_fallthru
      _
    // Predicated region
    $region42: #{cnn_forward.1} parent=1 // pred_check
      _
    $region43: #{cnn_forward.1} parent=1 // pred_check_branch
      %89 = sbr.rel (0) target = $region45
    $region44: #{cnn_forward.1} parent=1 // pred_region
      %s91 = ssub.s32 2048, 2048
      %92 = vsyncadd [#allocation8], %s91
      %s93 = sshll.u32 [#allocation9], 4
      %s94 = int_to_ptr.vmem [resolvable:$true] %s93
      %99 = dma.hbm_to_vmem [thread:$0]  %s10, 2048, %s94, [#allocation8], 128, 128, 8
    $region45: #{cnn_forward.1} parent=1 // pred_fallthru
      _
    // Predicated region
    $region46: #{cnn_forward.1} parent=1 // pred_check
      _
    $region47: #{cnn_forward.1} parent=1 // pred_check_branch
      %101 = sbr.rel (0) target = $region49
    $region48: #{cnn_forward.1} parent=1 // pred_region
      _
    $region49: #{cnn_forward.1} parent=1 // pred_fallthru
      _
    // Predicated region
    $region50: #{cnn_forward.1} parent=1 // pred_check
      _
    $region51: #{cnn_forward.1} parent=1 // pred_check_branch
      %103 = sbr.rel (0) target = $region53
    $region52: #{cnn_forward.1} parent=1 // pred_region
      _
    $region53: #{cnn_forward.1} parent=1 // pred_fallthru
      _
    // Predicated region
    $region54: #{cnn_forward.1} parent=1 // pred_check
      _
    $region55: #{cnn_forward.1} parent=1 // pred_check_branch
      %105 = sbr.rel (0) target = $region57
    $region56: #{cnn_forward.1} parent=1 // pred_region
      %s107 = ssub.s32 12288, 12288
      %108 = vsyncadd [#allocation11], %s107
      %s109 = sshll.u32 [#allocation10], 4
      %s110 = int_to_ptr.vmem [resolvable:$true] %s109
      %115 = dma.hbm_to_vmem [thread:$0]  %s13, 12288, %s110, [#allocation11], 256, 256, 16
    $region57: #{cnn_forward.1} parent=1 // pred_fallthru
      _
    // Predicated region
    $region58: #{cnn_forward.1} parent=1 // pred_check
      _
    $region59: #{cnn_forward.1} parent=1 // pred_check_branch
      %117 = sbr.rel (0) target = $region61
    $region60: #{cnn_forward.1} parent=1 // pred_region
      %s119 = ssub.s32 4096, 4096
      %120 = vsyncadd [#allocation11], %s119
      %s121 = sshll.u32 [#allocation12], 4
      %s122 = int_to_ptr.vmem [resolvable:$true] %s121
      %127 = dma.hbm_to_vmem [thread:$0]  %s14, 4096, %s122, [#allocation11], 256, 256, 16
    $region61: #{cnn_forward.1} parent=1 // pred_fallthru
      _
    // Predicated region
    $region62: #{cnn_forward.1} parent=1 // pred_check
      _
    $region63: #{cnn_forward.1} parent=1 // pred_check_branch
      %129 = sbr.rel (0) target = $region65
    $region64: #{cnn_forward.1} parent=1 // pred_region
      _
    $region65: #{cnn_forward.1} parent=1 // pred_fallthru
      _
    // Predicated region
    $region66: #{cnn_forward.1} parent=1 // pred_check
      _
    $region67: #{cnn_forward.1} parent=1 // pred_check_branch
      %131 = sbr.rel (0) target = $region69
    $region68: #{cnn_forward.1} parent=1 // pred_region
      _
    $region69: #{cnn_forward.1} parent=1 // pred_fallthru
      _
    // Predicated region
    $region70: #{cnn_forward.1} parent=1 // pred_check
      _
    $region71: #{cnn_forward.1} parent=1 // pred_check_branch
      %133 = sbr.rel (0) target = $region73
    $region72: #{cnn_forward.1} parent=1 // pred_region
      _
    $region73: #{cnn_forward.1} parent=1 // pred_fallthru
      _
    // Predicated region
    $region74: #{cnn_forward.1} parent=1 // pred_check
      _
    $region75: #{cnn_forward.1} parent=1 // pred_check_branch
      %135 = sbr.rel (0) target = $region77
    $region76: #{cnn_forward.1} parent=1 // pred_region
      _
    $region77: #{cnn_forward.1} parent=1 // pred_fallthru
      _
    // Predicated region
    $region78: #{cnn_forward.1} parent=1 // pred_check
      _
    $region79: #{cnn_forward.1} parent=1 // pred_check_branch
      %137 = sbr.rel (0) target = $region81
    $region80: #{cnn_forward.1} parent=1 // pred_region
      %138 = dma.done [#allocation3], 10240
    $region81: #{cnn_forward.1} parent=1 // pred_fallthru
      _
    // Predicated region
    $region82: #{cnn_forward.1} parent=1 // pred_check
      _
    $region83: #{cnn_forward.1} parent=1 // pred_check_branch
      %140 = sbr.rel (0) target = $region85
    $region84: #{cnn_forward.1} parent=1 // pred_region
      %141 = dma.done [#allocation5], 2048
    $region85: #{cnn_forward.1} parent=1 // pred_fallthru
      _
    // Predicated region
    $region86: #{cnn_forward.1} parent=1 // pred_check
      _
    $region87: #{cnn_forward.1} parent=1 // pred_check_branch
      %143 = sbr.rel (0) target = $region89
    $region88: #{cnn_forward.1} parent=1 // pred_region
      %144 = dma.done [#allocation5], 10240
    $region89: #{cnn_forward.1} parent=1 // pred_fallthru
      _
    // Predicated region
    $region90: #{cnn_forward.1} parent=1 // pred_check
      _
    $region91: #{cnn_forward.1} parent=1 // pred_check_branch
      %146 = sbr.rel (0) target = $region93
    $region92: #{cnn_forward.1} parent=1 // pred_region
      %147 = dma.done [#allocation8], 2048
    $region93: #{cnn_forward.1} parent=1 // pred_fallthru
      _
    // Predicated region
    $region94: #{cnn_forward.1} parent=1 // pred_check
      _
    $region95: #{cnn_forward.1} parent=1 // pred_check_branch
      %149 = sbr.rel (0) target = $region97
    $region96: #{cnn_forward.1} parent=1 // pred_region
      %150 = dma.done [#allocation8], 2048
    $region97: #{cnn_forward.1} parent=1 // pred_fallthru
      _
    // Predicated region
    $region98: #{cnn_forward.1} parent=1 // pred_check
      _
    $region99: #{cnn_forward.1} parent=1 // pred_check_branch
      %152 = sbr.rel (0) target = $region101
    $region100: #{cnn_forward.1} parent=1 // pred_region
      %153 = dma.done [#allocation11], 12288
    $region101: #{cnn_forward.1} parent=1 // pred_fallthru
      _
    // Predicated region
    $region102: #{cnn_forward.1} parent=1 // pred_check
      _
    $region103: #{cnn_forward.1} parent=1 // pred_check_branch
      %155 = sbr.rel (0) target = $region105
    $region104: #{cnn_forward.1} parent=1 // pred_region
      %156 = dma.done [#allocation11], 4096
    $region105: #{cnn_forward.1} parent=1 // pred_fallthru
      _
    %v157 = vld [vmem:[%s0] sm:$0xff]
    %v158 = vld [vmem:[%s0 + $0x8] sm:$0xff]
    %v159 = vld [vmem:[%s0 + $0x10] sm:$0xff]
    %v160 = vld [vmem:[%s0 + $0x18] sm:$0xff]
    %v162 = vrot.slane %v157, 7
    %vm165 = vcmask 1041408
    %v166 = vrot.slane %v157, 6
    %v167 = vrot.slane %v158, 6
    %v168 = vsel %vm165, %v166, %v167
    %v172 = vrot.slane %v158, 5
    %v174 = vrot.slane %v158, 4
    %vm176 = vcmask 1040384
    %v177 = vsel %vm176, %v157, %v162
    %v178 = vsel %vm165, %v177, %v166
    %v179 = vsel %vm165, %v167, %v172
    %vm180 = vcmask 1042432
    %v181 = vsel %vm180, %v179, %v174
    %vm184 = vcmask 1046528
    %v185 = vrot.slane %v178, 1
    %v186 = vrot.slane %v168, 1
    %v187 = vsel %vm184, %v185, %v186
    %v188 = vrot.slane %v181, 1
    %v189 = vsel %vm184, %v186, %v188
    %vm192 = vcmask 1045504
    %v193 = vrot.slane %v178, 2
    %v194 = vrot.slane %v168, 2
    %v195 = vsel %vm192, %v193, %v194
    %v196 = vrot.slane %v181, 2
    %v197 = vsel %vm192, %v194, %v196
    %vm200 = vcmask 1044480
    %v201 = vrot.slane %v178, 3
    %v202 = vrot.slane %v168, 3
    %v203 = vsel %vm200, %v201, %v202
    %v204 = vrot.slane %v181, 3
    %v205 = vsel %vm200, %v202, %v204
    %vm208 = vcmask 1043456
    %v209 = vrot.slane %v178, 4
    %v210 = vrot.slane %v168, 4
    %v211 = vsel %vm208, %v209, %v210
    %v212 = vrot.slane %v181, 4
    %v213 = vsel %vm208, %v210, %v212
    %v217 = vrot.slane %v159, 7
    %v220 = vrot.slane %v159, 6
    %v221 = vrot.slane %v160, 6
    %v222 = vsel %vm165, %v220, %v221
    %v226 = vrot.slane %v160, 5
    %v228 = vrot.slane %v160, 4
    %v230 = vsel %vm176, %v159, %v217
    %v231 = vsel %vm165, %v230, %v220
    %v232 = vsel %vm165, %v221, %v226
    %v233 = vsel %vm180, %v232, %v228
    %v236 = vrot.slane %v231, 1
    %v237 = vrot.slane %v222, 1
    %v238 = vsel %vm184, %v236, %v237
    %v239 = vrot.slane %v233, 1
    %v240 = vsel %vm184, %v237, %v239
    %v243 = vrot.slane %v231, 2
    %v244 = vrot.slane %v222, 2
    %v245 = vsel %vm192, %v243, %v244
    %v246 = vrot.slane %v233, 2
    %v247 = vsel %vm192, %v244, %v246
    %v250 = vrot.slane %v231, 3
    %v251 = vrot.slane %v222, 3
    %v252 = vsel %vm200, %v250, %v251
    %v253 = vrot.slane %v233, 3
    %v254 = vsel %vm200, %v251, %v253
    %v257 = vrot.slane %v231, 4
    %v258 = vrot.slane %v222, 4
    %v259 = vsel %vm208, %v257, %v258
    %v260 = vrot.slane %v233, 4
    %v261 = vsel %vm208, %v258, %v260
    %v264 = vld [vmem:[%s3] sm:$0x3]
    %v265 = vld [vmem:[#allocation2] sm:$0xff]
    %v266 = vld [vmem:[#allocation2 + $0x8] sm:$0xff]
    %v267 = vld [vmem:[#allocation2 + $0x10] sm:$0xff]
    %v268 = vld [vmem:[#allocation2 + $0x18] sm:$0xff]
    %v269 = vld [vmem:[#allocation2 + $0x20] sm:$0xff]
    %v270 = vld [vmem:[#allocation2 + $0x28] sm:$0xff]
    %v271 = vld [vmem:[#allocation2 + $0x30] sm:$0xff]
    %v272 = vld [vmem:[#allocation2 + $0x38] sm:$0xff]
    %v273 = vld [vmem:[#allocation2 + $0x40] sm:$0xff]
    %v274 = vld [vmem:[#allocation2 + $0x48] sm:$0xff]
    %v275 = vld [vmem:[#allocation2 + $0x50] sm:$0xff]
    %v276 = vld [vmem:[#allocation2 + $0x58] sm:$0xff]
    %v277 = vld [vmem:[#allocation2 + $0x60] sm:$0xff]
    %v278 = vld [vmem:[#allocation2 + $0x68] sm:$0xff]
    %v279 = vld [vmem:[#allocation2 + $0x70] sm:$0xff]
    %v280 = vld [vmem:[#allocation2 + $0x78] sm:$0xff]
    %v281 = vld [vmem:[#allocation2 + $0x80] sm:$0xff]
    %v282 = vld [vmem:[#allocation2 + $0x88] sm:$0xff]
    %v283 = vld [vmem:[#allocation2 + $0x90] sm:$0xff]
    %v284 = vld [vmem:[#allocation2 + $0x98] sm:$0xff]
    %v285 = vld [vmem:[#allocation2 + $0xa0] sm:$0xff]
    %v286 = vld [vmem:[#allocation2 + $0xa8] sm:$0xff]
    %v287 = vld [vmem:[#allocation2 + $0xb0] sm:$0xff]
    %v288 = vld [vmem:[#allocation2 + $0xb8] sm:$0xff]
    %v289 = vld [vmem:[#allocation2 + $0xc0] sm:$0xff]
    %v290 = vld [vmem:[#allocation2 + $0xc8] sm:$0xff]
    %v291 = vld [vmem:[#allocation2 + $0xd0] sm:$0xff]
    %v292 = vld [vmem:[#allocation2 + $0xd8] sm:$0xff]
    %v293 = vld [vmem:[#allocation2 + $0xe0] sm:$0xff]
    %v294 = vld [vmem:[#allocation2 + $0xe8] sm:$0xff]
    %v295 = vld [vmem:[#allocation2 + $0xf0] sm:$0xff]
    %v296 = vld [vmem:[#allocation2 + $0xf8] sm:$0xff]
    %v297 = vld [vmem:[#allocation2 + $0x100] sm:$0xff]
    %v298 = vld [vmem:[#allocation2 + $0x108] sm:$0xff]
    %v299 = vld [vmem:[#allocation2 + $0x110] sm:$0xff]
    %v300 = vld [vmem:[#allocation2 + $0x118] sm:$0xff]
    %v301 = vld [vmem:[#allocation2 + $0x120] sm:$0xff]
    %v302 = vld [vmem:[#allocation2 + $0x128] sm:$0xff]
    %v303 = vld [vmem:[#allocation2 + $0x130] sm:$0xff]
    %v304 = vld [vmem:[#allocation2 + $0x138] sm:$0xff]
    %v305 = vld [vmem:[#allocation2 + $0x140] sm:$0xff]
    %v306 = vld [vmem:[#allocation2 + $0x148] sm:$0xff]
    %v307 = vld [vmem:[#allocation2 + $0x150] sm:$0xff]
    %v308 = vld [vmem:[#allocation2 + $0x158] sm:$0xff]
    %v309 = vld [vmem:[#allocation2 + $0x160] sm:$0xff]
    %v310 = vld [vmem:[#allocation2 + $0x168] sm:$0xff]
    %v311 = vld [vmem:[#allocation2 + $0x170] sm:$0xff]
    %v312 = vld [vmem:[#allocation2 + $0x178] sm:$0xff]
    %v313 = vld [vmem:[#allocation2 + $0x180] sm:$0xff]
    %v314 = vld [vmem:[#allocation2 + $0x188] sm:$0xff]
    %v315 = vld [vmem:[#allocation2 + $0x190] sm:$0xff]
    %v316 = vld [vmem:[#allocation2 + $0x198] sm:$0xff]
    %v317 = vld [vmem:[#allocation2 + $0x1a0] sm:$0xff]
    %v318 = vld [vmem:[#allocation2 + $0x1a8] sm:$0xff]
    %v319 = vld [vmem:[#allocation2 + $0x1b0] sm:$0xff]
    %v320 = vld [vmem:[#allocation2 + $0x1b8] sm:$0xff]
    %v321 = vld [vmem:[#allocation2 + $0x1c0] sm:$0xff]
    %v322 = vld [vmem:[#allocation2 + $0x1c8] sm:$0xff]
    %v323 = vld [vmem:[#allocation2 + $0x1d0] sm:$0xff]
    %v324 = vld [vmem:[#allocation2 + $0x1d8] sm:$0xff]
    %v325 = vld [vmem:[#allocation2 + $0x1e0] sm:$0xff]
    %v326 = vld [vmem:[#allocation2 + $0x1e8] sm:$0xff]
    %v327 = vld [vmem:[#allocation2 + $0x1f0] sm:$0xff]
    %v328 = vld [vmem:[#allocation2 + $0x1f8] sm:$0xff]
    %v329 = vld [vmem:[#allocation2 + $0x200] sm:$0xff]
    %v330 = vld [vmem:[#allocation2 + $0x208] sm:$0xff]
    %v331 = vld [vmem:[#allocation2 + $0x210] sm:$0xff]
    %v332 = vld [vmem:[#allocation2 + $0x218] sm:$0xff]
    %v333 = vld [vmem:[#allocation2 + $0x220] sm:$0xff]
    %v334 = vld [vmem:[#allocation2 + $0x228] sm:$0xff]
    %v335 = vld [vmem:[#allocation2 + $0x230] sm:$0xff]
    %v336 = vld [vmem:[#allocation2 + $0x238] sm:$0xff]
    %v337 = vld [vmem:[#allocation2 + $0x240] sm:$0xff]
    %v338 = vld [vmem:[#allocation2 + $0x248] sm:$0xff]
    %v339 = vld [vmem:[#allocation2 + $0x250] sm:$0xff]
    %v340 = vld [vmem:[#allocation2 + $0x258] sm:$0xff]
    %v341 = vld [vmem:[#allocation2 + $0x260] sm:$0xff]
    %v342 = vld [vmem:[#allocation2 + $0x268] sm:$0xff]
    %v343 = vld [vmem:[#allocation2 + $0x270] sm:$0xff]
    %v344 = vld [vmem:[#allocation2 + $0x278] sm:$0xff]
    %345 = vmatprep.subr.mxu0 0.0
    %346 = vmatpush1.msra.mxu0 %v265
    %347 = vmatprep.subr.mxu0 0.0
    %348 = vmatpush1.msra.mxu0 %v266
    %349 = vmatprep.subr.mxu0 0.0
    %350 = vmatpush1.msra.mxu0 %v267
    %351 = vmatprep.subr.mxu0 0.0
    %352 = vmatpush1.msra.mxu0 %v268
    %353 = vmatprep.subr.mxu0 0.0
    %354 = vmatpush1.msra.mxu0 %v269
    %355 = vmatprep.subr.mxu0 0.0
    %356 = vmatpush1.msra.mxu0 %v270
    %357 = vmatprep.subr.mxu0 0.0
    %358 = vmatpush1.msra.mxu0 %v271
    %359 = vmatprep.subr.mxu0 0.0
    %360 = vmatpush1.msra.mxu0 %v272
    %361 = vmatprep.subr.mxu0 0.0
    %362 = vmatpush1.msra.mxu0 %v273
    %363 = vmatprep.subr.mxu0 0.0
    %364 = vmatpush1.msra.mxu0 %v274
    %365 = vmatprep.subr.mxu0 0.0
    %366 = vmatpush1.msra.mxu0 %v275
    %367 = vmatprep.subr.mxu0 0.0
    %368 = vmatpush1.msra.mxu0 %v276
    %369 = vmatprep.subr.mxu0 0.0
    %370 = vmatpush1.msra.mxu0 %v277
    %371 = vmatprep.subr.mxu0 0.0
    %372 = vmatpush1.msra.mxu0 %v278
    %373 = vmatprep.subr.mxu0 0.0
    %374 = vmatpush1.msra.mxu0 %v279
    %375 = vmatprep.subr.mxu0 0.0
    %376 = vmatpush1.msra.mxu0 %v280
    %377 = vmatprep.subr.mxu0 0.0
    %378 = vmatpush1.msra.mxu0 %v281
    %379 = vmatprep.subr.mxu0 0.0
    %380 = vmatpush1.msra.mxu0 %v282
    %381 = vmatprep.subr.mxu0 0.0
    %382 = vmatpush1.msra.mxu0 %v283
    %383 = vmatprep.subr.mxu0 0.0
    %384 = vmatpush1.msra.mxu0 %v284
    %385 = vmatprep.subr.mxu0 0.0
    %386 = vmatpush1.msra.mxu0 %v285
    %387 = vmatprep.subr.mxu0 0.0
    %388 = vmatpush1.msra.mxu0 %v286
    %389 = vmatprep.subr.mxu0 0.0
    %390 = vmatpush1.msra.mxu0 %v287
    %391 = vmatprep.subr.mxu0 0.0
    %392 = vmatpush1.msra.mxu0 %v288
    %393 = vmatprep.subr.mxu0 0.0
    %394 = vmatpush1.msra.mxu0 %v289
    %395 = vmatprep.subr.mxu0 0.0
    %396 = vmatpush1.msra.mxu0 %v290
    %397 = vmatprep.subr.mxu0 0.0
    %398 = vmatpush1.msra.mxu0 %v291
    %399 = vmatprep.subr.mxu0 0.0
    %400 = vmatpush1.msra.mxu0 %v292
    %401 = vmatprep.subr.mxu0 0.0
    %402 = vmatpush1.msra.mxu0 %v293
    %403 = vmatprep.subr.mxu0 0.0
    %404 = vmatpush1.msra.mxu0 %v294
    %405 = vmatprep.subr.mxu0 0.0
    %406 = vmatpush1.msra.mxu0 %v295
    %407 = vmatprep.subr.mxu0 0.0
    %408 = vmatpush1.msra.mxu0 %v296
    %409 = vmatprep.mubr.f32.mxu0 %v187
    %410 = vmatmul.mubr.f32.gmra.mrb[0].mxu0 %v178
    %v411 = vpop.f32.mrb[0].mxu0
    %v412 = vadd.f32 0.0, %v411
    %v413 = vpop.f32.mrb[0].mxu0
    %414 = vmatprep.mubr.f32.mxu0 %v189
    %415 = vmatmul.mubr.f32.gmra.mrb[0].mxu0 %v168
    %v416 = vpop.f32.mrb[0].mxu0
    %v417 = vadd.f32 0.0, %v416
    %v418 = vpop.f32.mrb[0].mxu0
    %419 = vmatprep.mubr.f32.mxu0 %v238
    %420 = vmatmul.mubr.f32.gmra.mrb[0].mxu0 %v231
    %v421 = vpop.f32.mrb[0].mxu0
    %v422 = vadd.f32 0.0, %v421
    %v423 = vpop.f32.mrb[0].mxu0
    %424 = vmatprep.mubr.f32.mxu0 %v240
    %425 = vmatmul.mubr.f32.gmra.mrb[0].mxu0 %v222
    %v426 = vpop.f32.mrb[0].mxu0
    %v427 = vadd.f32 0.0, %v426
    %v428 = vpop.f32.mrb[0].mxu0
    %429 = vdwg.mxu0
    %430 = vmatprep.subr.mxu0 0.0
    %431 = vmatpush1.msra.mxu0 %v297
    %432 = vmatprep.subr.mxu0 0.0
    %433 = vmatpush1.msra.mxu0 %v298
    %434 = vmatprep.subr.mxu0 0.0
    %435 = vmatpush1.msra.mxu0 %v299
    %436 = vmatprep.subr.mxu0 0.0
    %437 = vmatpush1.msra.mxu0 %v300
    %438 = vmatprep.subr.mxu0 0.0
    %439 = vmatpush1.msra.mxu0 %v301
    %440 = vmatprep.subr.mxu0 0.0
    %441 = vmatpush1.msra.mxu0 %v302
    %442 = vmatprep.subr.mxu0 0.0
    %443 = vmatpush1.msra.mxu0 %v303
    %444 = vmatprep.subr.mxu0 0.0
    %445 = vmatpush1.msra.mxu0 %v304
    %446 = vmatprep.subr.mxu0 0.0
    %447 = vmatpush1.msra.mxu0 %v305
    %448 = vmatprep.subr.mxu0 0.0
    %449 = vmatpush1.msra.mxu0 %v306
    %450 = vmatprep.subr.mxu0 0.0
    %451 = vmatpush1.msra.mxu0 %v307
    %452 = vmatprep.subr.mxu0 0.0
    %453 = vmatpush1.msra.mxu0 %v308
    %454 = vmatprep.subr.mxu0 0.0
    %455 = vmatpush1.msra.mxu0 %v309
    %456 = vmatprep.subr.mxu0 0.0
    %457 = vmatpush1.msra.mxu0 %v310
    %458 = vmatprep.subr.mxu0 0.0
    %459 = vmatpush1.msra.mxu0 %v311
    %460 = vmatprep.subr.mxu0 0.0
    %461 = vmatpush1.msra.mxu0 %v312
    %462 = vmatprep.subr.mxu0 0.0
    %463 = vmatpush1.msra.mxu0 %v313
    %464 = vmatprep.subr.mxu0 0.0
    %465 = vmatpush1.msra.mxu0 %v314
    %466 = vmatprep.subr.mxu0 0.0
    %467 = vmatpush1.msra.mxu0 %v315
    %468 = vmatprep.subr.mxu0 0.0
    %469 = vmatpush1.msra.mxu0 %v316
    %470 = vmatprep.subr.mxu0 0.0
    %471 = vmatpush1.msra.mxu0 %v317
    %472 = vmatprep.subr.mxu0 0.0
    %473 = vmatpush1.msra.mxu0 %v318
    %474 = vmatprep.subr.mxu0 0.0
    %475 = vmatpush1.msra.mxu0 %v319
    %476 = vmatprep.subr.mxu0 0.0
    %477 = vmatpush1.msra.mxu0 %v320
    %478 = vmatprep.subr.mxu0 0.0
    %479 = vmatpush1.msra.mxu0 %v321
    %480 = vmatprep.subr.mxu0 0.0
    %481 = vmatpush1.msra.mxu0 %v322
    %482 = vmatprep.subr.mxu0 0.0
    %483 = vmatpush1.msra.mxu0 %v323
    %484 = vmatprep.subr.mxu0 0.0
    %485 = vmatpush1.msra.mxu0 %v324
    %486 = vmatprep.subr.mxu0 0.0
    %487 = vmatpush1.msra.mxu0 %v325
    %488 = vmatprep.subr.mxu0 0.0
    %489 = vmatpush1.msra.mxu0 %v326
    %490 = vmatprep.subr.mxu0 0.0
    %491 = vmatpush1.msra.mxu0 %v327
    %492 = vmatprep.subr.mxu0 0.0
    %493 = vmatpush1.msra.mxu0 %v328
    %494 = vmatprep.mubr.f32.mxu0 %v203
    %495 = vmatmul.mubr.f32.gmra.mrb[0].mxu0 %v195
    %v496 = vpop.f32.mrb[0].mxu0
    %v497 = vadd.f32 %v412, %v496
    %v498 = vpop.f32.mrb[0].mxu0
    %499 = vmatprep.mubr.f32.mxu0 %v205
    %500 = vmatmul.mubr.f32.gmra.mrb[0].mxu0 %v197
    %v501 = vpop.f32.mrb[0].mxu0
    %v502 = vadd.f32 %v417, %v501
    %v503 = vpop.f32.mrb[0].mxu0
    %504 = vmatprep.mubr.f32.mxu0 %v252
    %505 = vmatmul.mubr.f32.gmra.mrb[0].mxu0 %v245
    %v506 = vpop.f32.mrb[0].mxu0
    %v507 = vadd.f32 %v422, %v506
    %v508 = vpop.f32.mrb[0].mxu0
    %509 = vmatprep.mubr.f32.mxu0 %v254
    %510 = vmatmul.mubr.f32.gmra.mrb[0].mxu0 %v247
    %v511 = vpop.f32.mrb[0].mxu0
    %v512 = vadd.f32 %v427, %v511
    %v513 = vpop.f32.mrb[0].mxu0
    %514 = vdwg.mxu0
    %515 = vmatprep.subr.mxu0 0.0
    %516 = vmatpush1.msra.mxu0 %v329
    %517 = vmatprep.subr.mxu0 0.0
    %518 = vmatpush1.msra.mxu0 %v330
    %519 = vmatprep.subr.mxu0 0.0
    %520 = vmatpush1.msra.mxu0 %v331
    %521 = vmatprep.subr.mxu0 0.0
    %522 = vmatpush1.msra.mxu0 %v332
    %523 = vmatprep.subr.mxu0 0.0
    %524 = vmatpush1.msra.mxu0 %v333
    %525 = vmatprep.subr.mxu0 0.0
    %526 = vmatpush1.msra.mxu0 %v334
    %527 = vmatprep.subr.mxu0 0.0
    %528 = vmatpush1.msra.mxu0 %v335
    %529 = vmatprep.subr.mxu0 0.0
    %530 = vmatpush1.msra.mxu0 %v336
    %531 = vmatprep.subr.mxu0 0.0
    %532 = vmatpush1.msra.mxu0 %v337
    %533 = vmatprep.subr.mxu0 0.0
    %534 = vmatpush1.msra.mxu0 %v338
    %535 = vmatprep.subr.mxu0 0.0
    %536 = vmatpush1.msra.mxu0 %v339
    %537 = vmatprep.subr.mxu0 0.0
    %538 = vmatpush1.msra.mxu0 %v340
    %539 = vmatprep.subr.mxu0 0.0
    %540 = vmatpush1.msra.mxu0 %v341
    %541 = vmatprep.subr.mxu0 0.0
    %542 = vmatpush1.msra.mxu0 %v342
    %543 = vmatprep.subr.mxu0 0.0
    %544 = vmatpush1.msra.mxu0 %v343
    %545 = vmatprep.subr.mxu0 0.0
    %546 = vmatpush1.msra.mxu0 %v344
    %547 = vmatprep.subr.mxu0 0.0
    %548 = vmatpush1.msra.mxu0 0.0
    %549 = vmatprep.subr.mxu0 0.0
    %550 = vmatpush1.msra.mxu0 0.0
    %551 = vmatprep.subr.mxu0 0.0
    %552 = vmatpush1.msra.mxu0 0.0
    %553 = vmatprep.subr.mxu0 0.0
    %554 = vmatpush1.msra.mxu0 0.0
    %555 = vmatprep.subr.mxu0 0.0
    %556 = vmatpush1.msra.mxu0 0.0
    %557 = vmatprep.subr.mxu0 0.0
    %558 = vmatpush1.msra.mxu0 0.0
    %559 = vmatprep.subr.mxu0 0.0
    %560 = vmatpush1.msra.mxu0 0.0
    %561 = vmatprep.subr.mxu0 0.0
    %562 = vmatpush1.msra.mxu0 0.0
    %563 = vmatprep.subr.mxu0 0.0
    %564 = vmatpush1.msra.mxu0 0.0
    %565 = vmatprep.subr.mxu0 0.0
    %566 = vmatpush1.msra.mxu0 0.0
    %567 = vmatprep.subr.mxu0 0.0
    %568 = vmatpush1.msra.mxu0 0.0
    %569 = vmatprep.subr.mxu0 0.0
    %570 = vmatpush1.msra.mxu0 0.0
    %571 = vmatprep.subr.mxu0 0.0
    %572 = vmatpush1.msra.mxu0 0.0
    %573 = vmatprep.subr.mxu0 0.0
    %574 = vmatpush1.msra.mxu0 0.0
    %575 = vmatprep.subr.mxu0 0.0
    %576 = vmatpush1.msra.mxu0 0.0
    %577 = vmatprep.subr.mxu0 0.0
    %578 = vmatpush1.msra.mxu0 0.0
    %579 = vmatprep.mubr.f32.mxu0 0.0
    %580 = vmatmul.mubr.f32.gmra.mrb[0].mxu0 %v211
    %v581 = vpop.f32.mrb[0].mxu0
    %v582 = vadd.f32 %v497, %v581
    %v583 = vpop.f32.mrb[0].mxu0
    %584 = vmatprep.mubr.f32.mxu0 0.0
    %585 = vmatmul.mubr.f32.gmra.mrb[0].mxu0 %v213
    %v586 = vpop.f32.mrb[0].mxu0
    %v587 = vadd.f32 %v502, %v586
    %v588 = vpop.f32.mrb[0].mxu0
    %589 = vmatprep.mubr.f32.mxu0 0.0
    %590 = vmatmul.mubr.f32.gmra.mrb[0].mxu0 %v259
    %v591 = vpop.f32.mrb[0].mxu0
    %v592 = vadd.f32 %v507, %v591
    %v593 = vpop.f32.mrb[0].mxu0
    %594 = vmatprep.mubr.f32.mxu0 0.0
    %595 = vmatmul.mubr.f32.gmra.mrb[0].mxu0 %v261
    %v596 = vpop.f32.mrb[0].mxu0
    %v597 = vadd.f32 %v512, %v596
    %v598 = vpop.f32.mrb[0].mxu0
    %599 = vdwg.mxu0
    %v600 = vlaneseq
    %v601 = vshrl.u32 %v600, 7
    %v602 = vsub.s32 0, %v601
    %v603 = vrot.slane %v264, %v602
    %v604 = vmul.f32 %v582, %v603
    %v605 = vmul.f32 %v587, %v603
    %v606 = vmul.f32 %v592, %v603
    %v607 = vmul.f32 %v597, %v603
    %v608 = vlaneseq
    %v609 = vshrl.u32 %v608, 7
    %v610 = vsub.s32 1, %v609
    %v611 = vrot.slane %v264, %v610
    %v612 = vadd.f32 %v604, %v611
    %v613 = vadd.f32 %v605, %v611
    %v614 = vadd.f32 %v606, %v611
    %v615 = vadd.f32 %v607, %v611
    %vm616 = vcmp.gt.f32.partialorder %v612, 0.0
    %vm617 = vcmp.gt.f32.partialorder %v613, 0.0
    %vm618 = vcmp.gt.f32.partialorder %v614, 0.0
    %vm619 = vcmp.gt.f32.partialorder %v615, 0.0
    %v620 = vmul.f32 %v612, 0.1
    %v621 = vmul.f32 %v613, 0.1
    %v622 = vmul.f32 %v614, 0.1
    %v623 = vmul.f32 %v615, 0.1
    %v624 = vsel %vm616, %v612, %v620
    %v625 = vsel %vm617, %v613, %v621
    %v626 = vsel %vm618, %v614, %v622
    %v627 = vsel %vm619, %v615, %v623
    %v628 = vld [vmem:[%s4] sm:$0x3]
    %v629 = vld [vmem:[#allocation4] sm:$0xff]
    %v630 = vld [vmem:[#allocation4 + $0x8] sm:$0xff]
    %v631 = vld [vmem:[#allocation4 + $0x10] sm:$0xff]
    %v632 = vld [vmem:[#allocation4 + $0x18] sm:$0xff]
    %v633 = vld [vmem:[#allocation4 + $0x20] sm:$0xff]
    %v634 = vld [vmem:[#allocation4 + $0x28] sm:$0xff]
    %v635 = vld [vmem:[#allocation4 + $0x30] sm:$0xff]
    %v636 = vld [vmem:[#allocation4 + $0x38] sm:$0xff]
    %v637 = vld [vmem:[#allocation4 + $0x40] sm:$0xff]
    %v638 = vld [vmem:[#allocation4 + $0x48] sm:$0xff]
    %v639 = vld [vmem:[#allocation4 + $0x50] sm:$0xff]
    %v640 = vld [vmem:[#allocation4 + $0x58] sm:$0xff]
    %v641 = vld [vmem:[#allocation4 + $0x60] sm:$0xff]
    %v642 = vld [vmem:[#allocation4 + $0x68] sm:$0xff]
    %v643 = vld [vmem:[#allocation4 + $0x70] sm:$0xff]
    %v644 = vld [vmem:[#allocation4 + $0x78] sm:$0xff]
    %645 = vmatprep.subr.mxu0 0.0
    %646 = vmatpush1.msra.mxu0 %v629
    %647 = vmatprep.subr.mxu0 0.0
    %648 = vmatpush1.msra.mxu0 %v630
    %649 = vmatprep.subr.mxu0 0.0
    %650 = vmatpush1.msra.mxu0 %v631
    %651 = vmatprep.subr.mxu0 0.0
    %652 = vmatpush1.msra.mxu0 %v632
    %653 = vmatprep.subr.mxu0 0.0
    %654 = vmatpush1.msra.mxu0 %v633
    %655 = vmatprep.subr.mxu0 0.0
    %656 = vmatpush1.msra.mxu0 %v634
    %657 = vmatprep.subr.mxu0 0.0
    %658 = vmatpush1.msra.mxu0 %v635
    %659 = vmatprep.subr.mxu0 0.0
    %660 = vmatpush1.msra.mxu0 %v636
    %661 = vmatprep.subr.mxu0 0.0
    %662 = vmatpush1.msra.mxu0 %v637
    %663 = vmatprep.subr.mxu0 0.0
    %664 = vmatpush1.msra.mxu0 %v638
    %665 = vmatprep.subr.mxu0 0.0
    %666 = vmatpush1.msra.mxu0 %v639
    %667 = vmatprep.subr.mxu0 0.0
    %668 = vmatpush1.msra.mxu0 %v640
    %669 = vmatprep.subr.mxu0 0.0
    %670 = vmatpush1.msra.mxu0 %v641
    %671 = vmatprep.subr.mxu0 0.0
    %672 = vmatpush1.msra.mxu0 %v642
    %673 = vmatprep.subr.mxu0 0.0
    %674 = vmatpush1.msra.mxu0 %v643
    %675 = vmatprep.subr.mxu0 0.0
    %676 = vmatpush1.msra.mxu0 %v644
    %677 = vmatprep.subr.mxu0 0.0
    %678 = vmatpush1.msra.mxu0 0.0
    %679 = vmatprep.subr.mxu0 0.0
    %680 = vmatpush1.msra.mxu0 0.0
    %681 = vmatprep.subr.mxu0 0.0
    %682 = vmatpush1.msra.mxu0 0.0
    %683 = vmatprep.subr.mxu0 0.0
    %684 = vmatpush1.msra.mxu0 0.0
    %685 = vmatprep.subr.mxu0 0.0
    %686 = vmatpush1.msra.mxu0 0.0
    %687 = vmatprep.subr.mxu0 0.0
    %688 = vmatpush1.msra.mxu0 0.0
    %689 = vmatprep.subr.mxu0 0.0
    %690 = vmatpush1.msra.mxu0 0.0
    %691 = vmatprep.subr.mxu0 0.0
    %692 = vmatpush1.msra.mxu0 0.0
    %693 = vmatprep.subr.mxu0 0.0
    %694 = vmatpush1.msra.mxu0 0.0
    %695 = vmatprep.subr.mxu0 0.0
    %696 = vmatpush1.msra.mxu0 0.0
    %697 = vmatprep.subr.mxu0 0.0
    %698 = vmatpush1.msra.mxu0 0.0
    %699 = vmatprep.subr.mxu0 0.0
    %700 = vmatpush1.msra.mxu0 0.0
    %701 = vmatprep.subr.mxu0 0.0
    %702 = vmatpush1.msra.mxu0 0.0
    %703 = vmatprep.subr.mxu0 0.0
    %704 = vmatpush1.msra.mxu0 0.0
    %705 = vmatprep.subr.mxu0 0.0
    %706 = vmatpush1.msra.mxu0 0.0
    %707 = vmatprep.subr.mxu0 0.0
    %708 = vmatpush1.msra.mxu0 0.0
    %709 = vmatprep.mubr.f32.mxu0 0.0
    %710 = vmatmul.mubr.f32.gmra.mrb[0].mxu0 %v157
    %v711 = vpop.f32.mrb[0].mxu0
    %v712 = vadd.f32 0.0, %v711
    %v713 = vpop.f32.mrb[0].mxu0
    %714 = vmatprep.mubr.f32.mxu0 0.0
    %715 = vmatmul.mubr.f32.gmra.mrb[0].mxu0 %v158
    %v716 = vpop.f32.mrb[0].mxu0
    %v717 = vadd.f32 0.0, %v716
    %v718 = vpop.f32.mrb[0].mxu0
    %719 = vmatprep.mubr.f32.mxu0 0.0
    %720 = vmatmul.mubr.f32.gmra.mrb[0].mxu0 %v159
    %v721 = vpop.f32.mrb[0].mxu0
    %v722 = vadd.f32 0.0, %v721
    %v723 = vpop.f32.mrb[0].mxu0
    %724 = vmatprep.mubr.f32.mxu0 0.0
    %725 = vmatmul.mubr.f32.gmra.mrb[0].mxu0 %v160
    %v726 = vpop.f32.mrb[0].mxu0
    %v727 = vadd.f32 0.0, %v726
    %v728 = vpop.f32.mrb[0].mxu0
    %729 = vdwg.mxu0
    %v730 = vlaneseq
    %v731 = vshrl.u32 %v730, 7
    %v732 = vsub.s32 0, %v731
    %v733 = vrot.slane %v628, %v732
    %v734 = vmul.f32 %v712, %v733
    %v735 = vmul.f32 %v717, %v733
    %v736 = vmul.f32 %v722, %v733
    %v737 = vmul.f32 %v727, %v733
    %v738 = vlaneseq
    %v739 = vshrl.u32 %v738, 7
    %v740 = vsub.s32 1, %v739
    %v741 = vrot.slane %v628, %v740
    %v742 = vadd.f32 %v734, %v741
    %v743 = vadd.f32 %v735, %v741
    %v744 = vadd.f32 %v736, %v741
    %v745 = vadd.f32 %v737, %v741
    %v746 = vadd.f32 %v624, %v742
    %v747 = vadd.f32 %v625, %v743
    %v748 = vadd.f32 %v626, %v744
    %v749 = vadd.f32 %v627, %v745
    %v750 = vmax.f32 %v746, 0.0
    %v751 = vmax.f32 %v747, 0.0
    %v752 = vmax.f32 %v748, 0.0
    %v753 = vmax.f32 %v749, 0.0
    %v755 = vrot.slane %v750, 7
    %v758 = vrot.slane %v750, 6
    %v759 = vrot.slane %v751, 6
    %v760 = vsel %vm165, %v758, %v759
    %v764 = vrot.slane %v751, 5
    %v766 = vrot.slane %v751, 4
    %v768 = vsel %vm176, %v750, %v755
    %v769 = vsel %vm165, %v768, %v758
    %v770 = vsel %vm165, %v759, %v764
    %v771 = vsel %vm180, %v770, %v766
    %v774 = vrot.slane %v769, 1
    %v775 = vrot.slane %v760, 1
    %v776 = vsel %vm184, %v774, %v775
    %v777 = vrot.slane %v771, 1
    %v778 = vsel %vm184, %v775, %v777
    %v781 = vrot.slane %v769, 2
    %v782 = vrot.slane %v760, 2
    %v783 = vsel %vm192, %v781, %v782
    %v784 = vrot.slane %v771, 2
    %v785 = vsel %vm192, %v782, %v784
    %v788 = vrot.slane %v769, 3
    %v789 = vrot.slane %v760, 3
    %v790 = vsel %vm200, %v788, %v789
    %v791 = vrot.slane %v771, 3
    %v792 = vsel %vm200, %v789, %v791
    %v795 = vrot.slane %v769, 4
    %v796 = vrot.slane %v760, 4
    %v797 = vsel %vm208, %v795, %v796
    %v798 = vrot.slane %v771, 4
    %v799 = vsel %vm208, %v796, %v798
    %v803 = vrot.slane %v752, 7
    %v806 = vrot.slane %v752, 6
    %v807 = vrot.slane %v753, 6
    %v808 = vsel %vm165, %v806, %v807
    %v812 = vrot.slane %v753, 5
    %v814 = vrot.slane %v753, 4
    %v816 = vsel %vm176, %v752, %v803
    %v817 = vsel %vm165, %v816, %v806
    %v818 = vsel %vm165, %v807, %v812
    %v819 = vsel %vm180, %v818, %v814
    %v822 = vrot.slane %v817, 1
    %v823 = vrot.slane %v808, 1
    %v824 = vsel %vm184, %v822, %v823
    %v825 = vrot.slane %v819, 1
    %v826 = vsel %vm184, %v823, %v825
    %v829 = vrot.slane %v817, 2
    %v830 = vrot.slane %v808, 2
    %v831 = vsel %vm192, %v829, %v830
    %v832 = vrot.slane %v819, 2
    %v833 = vsel %vm192, %v830, %v832
    %v836 = vrot.slane %v817, 3
    %v837 = vrot.slane %v808, 3
    %v838 = vsel %vm200, %v836, %v837
    %v839 = vrot.slane %v819, 3
    %v840 = vsel %vm200, %v837, %v839
    %v843 = vrot.slane %v817, 4
    %v844 = vrot.slane %v808, 4
    %v845 = vsel %vm208, %v843, %v844
    %v846 = vrot.slane %v819, 4
    %v847 = vsel %vm208, %v844, %v846
    %v850 = vld [vmem:[%s7] sm:$0x3]
    %v851 = vld [vmem:[#allocation6] sm:$0xff]
    %v852 = vld [vmem:[#allocation6 + $0x8] sm:$0xff]
    %v853 = vld [vmem:[#allocation6 + $0x10] sm:$0xff]
    %v854 = vld [vmem:[#allocation6 + $0x18] sm:$0xff]
    %v855 = vld [vmem:[#allocation6 + $0x20] sm:$0xff]
    %v856 = vld [vmem:[#allocation6 + $0x28] sm:$0xff]
    %v857 = vld [vmem:[#allocation6 + $0x30] sm:$0xff]
    %v858 = vld [vmem:[#allocation6 + $0x38] sm:$0xff]
    %v859 = vld [vmem:[#allocation6 + $0x40] sm:$0xff]
    %v860 = vld [vmem:[#allocation6 + $0x48] sm:$0xff]
    %v861 = vld [vmem:[#allocation6 + $0x50] sm:$0xff]
    %v862 = vld [vmem:[#allocation6 + $0x58] sm:$0xff]
    %v863 = vld [vmem:[#allocation6 + $0x60] sm:$0xff]
    %v864 = vld [vmem:[#allocation6 + $0x68] sm:$0xff]
    %v865 = vld [vmem:[#allocation6 + $0x70] sm:$0xff]
    %v866 = vld [vmem:[#allocation6 + $0x78] sm:$0xff]
    %v867 = vld [vmem:[#allocation6 + $0x80] sm:$0xff]
    %v868 = vld [vmem:[#allocation6 + $0x88] sm:$0xff]
    %v869 = vld [vmem:[#allocation6 + $0x90] sm:$0xff]
    %v870 = vld [vmem:[#allocation6 + $0x98] sm:$0xff]
    %v871 = vld [vmem:[#allocation6 + $0xa0] sm:$0xff]
    %v872 = vld [vmem:[#allocation6 + $0xa8] sm:$0xff]
    %v873 = vld [vmem:[#allocation6 + $0xb0] sm:$0xff]
    %v874 = vld [vmem:[#allocation6 + $0xb8] sm:$0xff]
    %v875 = vld [vmem:[#allocation6 + $0xc0] sm:$0xff]
    %v876 = vld [vmem:[#allocation6 + $0xc8] sm:$0xff]
    %v877 = vld [vmem:[#allocation6 + $0xd0] sm:$0xff]
    %v878 = vld [vmem:[#allocation6 + $0xd8] sm:$0xff]
    %v879 = vld [vmem:[#allocation6 + $0xe0] sm:$0xff]
    %v880 = vld [vmem:[#allocation6 + $0xe8] sm:$0xff]
    %v881 = vld [vmem:[#allocation6 + $0xf0] sm:$0xff]
    %v882 = vld [vmem:[#allocation6 + $0xf8] sm:$0xff]
    %v883 = vld [vmem:[#allocation6 + $0x100] sm:$0xff]
    %v884 = vld [vmem:[#allocation6 + $0x108] sm:$0xff]
    %v885 = vld [vmem:[#allocation6 + $0x110] sm:$0xff]
    %v886 = vld [vmem:[#allocation6 + $0x118] sm:$0xff]
    %v887 = vld [vmem:[#allocation6 + $0x120] sm:$0xff]
    %v888 = vld [vmem:[#allocation6 + $0x128] sm:$0xff]
    %v889 = vld [vmem:[#allocation6 + $0x130] sm:$0xff]
    %v890 = vld [vmem:[#allocation6 + $0x138] sm:$0xff]
    %v891 = vld [vmem:[#allocation6 + $0x140] sm:$0xff]
    %v892 = vld [vmem:[#allocation6 + $0x148] sm:$0xff]
    %v893 = vld [vmem:[#allocation6 + $0x150] sm:$0xff]
    %v894 = vld [vmem:[#allocation6 + $0x158] sm:$0xff]
    %v895 = vld [vmem:[#allocation6 + $0x160] sm:$0xff]
    %v896 = vld [vmem:[#allocation6 + $0x168] sm:$0xff]
    %v897 = vld [vmem:[#allocation6 + $0x170] sm:$0xff]
    %v898 = vld [vmem:[#allocation6 + $0x178] sm:$0xff]
    %v899 = vld [vmem:[#allocation6 + $0x180] sm:$0xff]
    %v900 = vld [vmem:[#allocation6 + $0x188] sm:$0xff]
    %v901 = vld [vmem:[#allocation6 + $0x190] sm:$0xff]
    %v902 = vld [vmem:[#allocation6 + $0x198] sm:$0xff]
    %v903 = vld [vmem:[#allocation6 + $0x1a0] sm:$0xff]
    %v904 = vld [vmem:[#allocation6 + $0x1a8] sm:$0xff]
    %v905 = vld [vmem:[#allocation6 + $0x1b0] sm:$0xff]
    %v906 = vld [vmem:[#allocation6 + $0x1b8] sm:$0xff]
    %v907 = vld [vmem:[#allocation6 + $0x1c0] sm:$0xff]
    %v908 = vld [vmem:[#allocation6 + $0x1c8] sm:$0xff]
    %v909 = vld [vmem:[#allocation6 + $0x1d0] sm:$0xff]
    %v910 = vld [vmem:[#allocation6 + $0x1d8] sm:$0xff]
    %v911 = vld [vmem:[#allocation6 + $0x1e0] sm:$0xff]
    %v912 = vld [vmem:[#allocation6 + $0x1e8] sm:$0xff]
    %v913 = vld [vmem:[#allocation6 + $0x1f0] sm:$0xff]
    %v914 = vld [vmem:[#allocation6 + $0x1f8] sm:$0xff]
    %v915 = vld [vmem:[#allocation6 + $0x200] sm:$0xff]
    %v916 = vld [vmem:[#allocation6 + $0x208] sm:$0xff]
    %v917 = vld [vmem:[#allocation6 + $0x210] sm:$0xff]
    %v918 = vld [vmem:[#allocation6 + $0x218] sm:$0xff]
    %v919 = vld [vmem:[#allocation6 + $0x220] sm:$0xff]
    %v920 = vld [vmem:[#allocation6 + $0x228] sm:$0xff]
    %v921 = vld [vmem:[#allocation6 + $0x230] sm:$0xff]
    %v922 = vld [vmem:[#allocation6 + $0x238] sm:$0xff]
    %v923 = vld [vmem:[#allocation6 + $0x240] sm:$0xff]
    %v924 = vld [vmem:[#allocation6 + $0x248] sm:$0xff]
    %v925 = vld [vmem:[#allocation6 + $0x250] sm:$0xff]
    %v926 = vld [vmem:[#allocation6 + $0x258] sm:$0xff]
    %v927 = vld [vmem:[#allocation6 + $0x260] sm:$0xff]
    %v928 = vld [vmem:[#allocation6 + $0x268] sm:$0xff]
    %v929 = vld [vmem:[#allocation6 + $0x270] sm:$0xff]
    %v930 = vld [vmem:[#allocation6 + $0x278] sm:$0xff]
    %931 = vmatprep.subr.mxu0 0.0
    %932 = vmatpush1.msra.mxu0 %v851
    %933 = vmatprep.subr.mxu0 0.0
    %934 = vmatpush1.msra.mxu0 %v852
    %935 = vmatprep.subr.mxu0 0.0
    %936 = vmatpush1.msra.mxu0 %v853
    %937 = vmatprep.subr.mxu0 0.0
    %938 = vmatpush1.msra.mxu0 %v854
    %939 = vmatprep.subr.mxu0 0.0
    %940 = vmatpush1.msra.mxu0 %v855
    %941 = vmatprep.subr.mxu0 0.0
    %942 = vmatpush1.msra.mxu0 %v856
    %943 = vmatprep.subr.mxu0 0.0
    %944 = vmatpush1.msra.mxu0 %v857
    %945 = vmatprep.subr.mxu0 0.0
    %946 = vmatpush1.msra.mxu0 %v858
    %947 = vmatprep.subr.mxu0 0.0
    %948 = vmatpush1.msra.mxu0 %v859
    %949 = vmatprep.subr.mxu0 0.0
    %950 = vmatpush1.msra.mxu0 %v860
    %951 = vmatprep.subr.mxu0 0.0
    %952 = vmatpush1.msra.mxu0 %v861
    %953 = vmatprep.subr.mxu0 0.0
    %954 = vmatpush1.msra.mxu0 %v862
    %955 = vmatprep.subr.mxu0 0.0
    %956 = vmatpush1.msra.mxu0 %v863
    %957 = vmatprep.subr.mxu0 0.0
    %958 = vmatpush1.msra.mxu0 %v864
    %959 = vmatprep.subr.mxu0 0.0
    %960 = vmatpush1.msra.mxu0 %v865
    %961 = vmatprep.subr.mxu0 0.0
    %962 = vmatpush1.msra.mxu0 %v866
    %963 = vmatprep.subr.mxu0 0.0
    %964 = vmatpush1.msra.mxu0 %v867
    %965 = vmatprep.subr.mxu0 0.0
    %966 = vmatpush1.msra.mxu0 %v868
    %967 = vmatprep.subr.mxu0 0.0
    %968 = vmatpush1.msra.mxu0 %v869
    %969 = vmatprep.subr.mxu0 0.0
    %970 = vmatpush1.msra.mxu0 %v870
    %971 = vmatprep.subr.mxu0 0.0
    %972 = vmatpush1.msra.mxu0 %v871
    %973 = vmatprep.subr.mxu0 0.0
    %974 = vmatpush1.msra.mxu0 %v872
    %975 = vmatprep.subr.mxu0 0.0
    %976 = vmatpush1.msra.mxu0 %v873
    %977 = vmatprep.subr.mxu0 0.0
    %978 = vmatpush1.msra.mxu0 %v874
    %979 = vmatprep.subr.mxu0 0.0
    %980 = vmatpush1.msra.mxu0 %v875
    %981 = vmatprep.subr.mxu0 0.0
    %982 = vmatpush1.msra.mxu0 %v876
    %983 = vmatprep.subr.mxu0 0.0
    %984 = vmatpush1.msra.mxu0 %v877
    %985 = vmatprep.subr.mxu0 0.0
    %986 = vmatpush1.msra.mxu0 %v878
    %987 = vmatprep.subr.mxu0 0.0
    %988 = vmatpush1.msra.mxu0 %v879
    %989 = vmatprep.subr.mxu0 0.0
    %990 = vmatpush1.msra.mxu0 %v880
    %991 = vmatprep.subr.mxu0 0.0
    %992 = vmatpush1.msra.mxu0 %v881
    %993 = vmatprep.subr.mxu0 0.0
    %994 = vmatpush1.msra.mxu0 %v882
    %995 = vmatprep.mubr.f32.mxu0 %v776
    %996 = vmatmul.mubr.f32.gmra.mrb[0].mxu0 %v769
    %v997 = vpop.f32.mrb[0].mxu0
    %v998 = vadd.f32 0.0, %v997
    %v999 = vpop.f32.mrb[0].mxu0
    %1000 = vmatprep.mubr.f32.mxu0 %v778
    %1001 = vmatmul.mubr.f32.gmra.mrb[0].mxu0 %v760
    %v1002 = vpop.f32.mrb[0].mxu0
    %v1003 = vadd.f32 0.0, %v1002
    %v1004 = vpop.f32.mrb[0].mxu0
    %1005 = vmatprep.mubr.f32.mxu0 %v824
    %1006 = vmatmul.mubr.f32.gmra.mrb[0].mxu0 %v817
    %v1007 = vpop.f32.mrb[0].mxu0
    %v1008 = vadd.f32 0.0, %v1007
    %v1009 = vpop.f32.mrb[0].mxu0
    %1010 = vmatprep.mubr.f32.mxu0 %v826
    %1011 = vmatmul.mubr.f32.gmra.mrb[0].mxu0 %v808
    %v1012 = vpop.f32.mrb[0].mxu0
    %v1013 = vadd.f32 0.0, %v1012
    %v1014 = vpop.f32.mrb[0].mxu0
    %1015 = vdwg.mxu0
    %1016 = vmatprep.subr.mxu0 0.0
    %1017 = vmatpush1.msra.mxu0 %v883
    %1018 = vmatprep.subr.mxu0 0.0
    %1019 = vmatpush1.msra.mxu0 %v884
    %1020 = vmatprep.subr.mxu0 0.0
    %1021 = vmatpush1.msra.mxu0 %v885
    %1022 = vmatprep.subr.mxu0 0.0
    %1023 = vmatpush1.msra.mxu0 %v886
    %1024 = vmatprep.subr.mxu0 0.0
    %1025 = vmatpush1.msra.mxu0 %v887
    %1026 = vmatprep.subr.mxu0 0.0
    %1027 = vmatpush1.msra.mxu0 %v888
    %1028 = vmatprep.subr.mxu0 0.0
    %1029 = vmatpush1.msra.mxu0 %v889
    %1030 = vmatprep.subr.mxu0 0.0
    %1031 = vmatpush1.msra.mxu0 %v890
    %1032 = vmatprep.subr.mxu0 0.0
    %1033 = vmatpush1.msra.mxu0 %v891
    %1034 = vmatprep.subr.mxu0 0.0
    %1035 = vmatpush1.msra.mxu0 %v892
    %1036 = vmatprep.subr.mxu0 0.0
    %1037 = vmatpush1.msra.mxu0 %v893
    %1038 = vmatprep.subr.mxu0 0.0
    %1039 = vmatpush1.msra.mxu0 %v894
    %1040 = vmatprep.subr.mxu0 0.0
    %1041 = vmatpush1.msra.mxu0 %v895
    %1042 = vmatprep.subr.mxu0 0.0
    %1043 = vmatpush1.msra.mxu0 %v896
    %1044 = vmatprep.subr.mxu0 0.0
    %1045 = vmatpush1.msra.mxu0 %v897
    %1046 = vmatprep.subr.mxu0 0.0
    %1047 = vmatpush1.msra.mxu0 %v898
    %1048 = vmatprep.subr.mxu0 0.0
    %1049 = vmatpush1.msra.mxu0 %v899
    %1050 = vmatprep.subr.mxu0 0.0
    %1051 = vmatpush1.msra.mxu0 %v900
    %1052 = vmatprep.subr.mxu0 0.0
    %1053 = vmatpush1.msra.mxu0 %v901
    %1054 = vmatprep.subr.mxu0 0.0
    %1055 = vmatpush1.msra.mxu0 %v902
    %1056 = vmatprep.subr.mxu0 0.0
    %1057 = vmatpush1.msra.mxu0 %v903
    %1058 = vmatprep.subr.mxu0 0.0
    %1059 = vmatpush1.msra.mxu0 %v904
    %1060 = vmatprep.subr.mxu0 0.0
    %1061 = vmatpush1.msra.mxu0 %v905
    %1062 = vmatprep.subr.mxu0 0.0
    %1063 = vmatpush1.msra.mxu0 %v906
    %1064 = vmatprep.subr.mxu0 0.0
    %1065 = vmatpush1.msra.mxu0 %v907
    %1066 = vmatprep.subr.mxu0 0.0
    %1067 = vmatpush1.msra.mxu0 %v908
    %1068 = vmatprep.subr.mxu0 0.0
    %1069 = vmatpush1.msra.mxu0 %v909
    %1070 = vmatprep.subr.mxu0 0.0
    %1071 = vmatpush1.msra.mxu0 %v910
    %1072 = vmatprep.subr.mxu0 0.0
    %1073 = vmatpush1.msra.mxu0 %v911
    %1074 = vmatprep.subr.mxu0 0.0
    %1075 = vmatpush1.msra.mxu0 %v912
    %1076 = vmatprep.subr.mxu0 0.0
    %1077 = vmatpush1.msra.mxu0 %v913
    %1078 = vmatprep.subr.mxu0 0.0
    %1079 = vmatpush1.msra.mxu0 %v914
    %1080 = vmatprep.mubr.f32.mxu0 %v790
    %1081 = vmatmul.mubr.f32.gmra.mrb[0].mxu0 %v783
    %v1082 = vpop.f32.mrb[0].mxu0
    %v1083 = vadd.f32 %v998, %v1082
    %v1084 = vpop.f32.mrb[0].mxu0
    %1085 = vmatprep.mubr.f32.mxu0 %v792
    %1086 = vmatmul.mubr.f32.gmra.mrb[0].mxu0 %v785
    %v1087 = vpop.f32.mrb[0].mxu0
    %v1088 = vadd.f32 %v1003, %v1087
    %v1089 = vpop.f32.mrb[0].mxu0
    %1090 = vmatprep.mubr.f32.mxu0 %v838
    %1091 = vmatmul.mubr.f32.gmra.mrb[0].mxu0 %v831
    %v1092 = vpop.f32.mrb[0].mxu0
    %v1093 = vadd.f32 %v1008, %v1092
    %v1094 = vpop.f32.mrb[0].mxu0
    %1095 = vmatprep.mubr.f32.mxu0 %v840
    %1096 = vmatmul.mubr.f32.gmra.mrb[0].mxu0 %v833
    %v1097 = vpop.f32.mrb[0].mxu0
    %v1098 = vadd.f32 %v1013, %v1097
    %v1099 = vpop.f32.mrb[0].mxu0
    %1100 = vdwg.mxu0
    %1101 = vmatprep.subr.mxu0 0.0
    %1102 = vmatpush1.msra.mxu0 %v915
    %1103 = vmatprep.subr.mxu0 0.0
    %1104 = vmatpush1.msra.mxu0 %v916
    %1105 = vmatprep.subr.mxu0 0.0
    %1106 = vmatpush1.msra.mxu0 %v917
    %1107 = vmatprep.subr.mxu0 0.0
    %1108 = vmatpush1.msra.mxu0 %v918
    %1109 = vmatprep.subr.mxu0 0.0
    %1110 = vmatpush1.msra.mxu0 %v919
    %1111 = vmatprep.subr.mxu0 0.0
    %1112 = vmatpush1.msra.mxu0 %v920
    %1113 = vmatprep.subr.mxu0 0.0
    %1114 = vmatpush1.msra.mxu0 %v921
    %1115 = vmatprep.subr.mxu0 0.0
    %1116 = vmatpush1.msra.mxu0 %v922
    %1117 = vmatprep.subr.mxu0 0.0
    %1118 = vmatpush1.msra.mxu0 %v923
    %1119 = vmatprep.subr.mxu0 0.0
    %1120 = vmatpush1.msra.mxu0 %v924
    %1121 = vmatprep.subr.mxu0 0.0
    %1122 = vmatpush1.msra.mxu0 %v925
    %1123 = vmatprep.subr.mxu0 0.0
    %1124 = vmatpush1.msra.mxu0 %v926
    %1125 = vmatprep.subr.mxu0 0.0
    %1126 = vmatpush1.msra.mxu0 %v927
    %1127 = vmatprep.subr.mxu0 0.0
    %1128 = vmatpush1.msra.mxu0 %v928
    %1129 = vmatprep.subr.mxu0 0.0
    %1130 = vmatpush1.msra.mxu0 %v929
    %1131 = vmatprep.subr.mxu0 0.0
    %1132 = vmatpush1.msra.mxu0 %v930
    %1133 = vmatprep.subr.mxu0 0.0
    %1134 = vmatpush1.msra.mxu0 0.0
    %1135 = vmatprep.subr.mxu0 0.0
    %1136 = vmatpush1.msra.mxu0 0.0
    %1137 = vmatprep.subr.mxu0 0.0
    %1138 = vmatpush1.msra.mxu0 0.0
    %1139 = vmatprep.subr.mxu0 0.0
    %1140 = vmatpush1.msra.mxu0 0.0
    %1141 = vmatprep.subr.mxu0 0.0
    %1142 = vmatpush1.msra.mxu0 0.0
    %1143 = vmatprep.subr.mxu0 0.0
    %1144 = vmatpush1.msra.mxu0 0.0
    %1145 = vmatprep.subr.mxu0 0.0
    %1146 = vmatpush1.msra.mxu0 0.0
    %1147 = vmatprep.subr.mxu0 0.0
    %1148 = vmatpush1.msra.mxu0 0.0
    %1149 = vmatprep.subr.mxu0 0.0
    %1150 = vmatpush1.msra.mxu0 0.0
    %1151 = vmatprep.subr.mxu0 0.0
    %1152 = vmatpush1.msra.mxu0 0.0
    %1153 = vmatprep.subr.mxu0 0.0
    %1154 = vmatpush1.msra.mxu0 0.0
    %1155 = vmatprep.subr.mxu0 0.0
    %1156 = vmatpush1.msra.mxu0 0.0
    %1157 = vmatprep.subr.mxu0 0.0
    %1158 = vmatpush1.msra.mxu0 0.0
    %1159 = vmatprep.subr.mxu0 0.0
    %1160 = vmatpush1.msra.mxu0 0.0
    %1161 = vmatprep.subr.mxu0 0.0
    %1162 = vmatpush1.msra.mxu0 0.0
    %1163 = vmatprep.subr.mxu0 0.0
    %1164 = vmatpush1.msra.mxu0 0.0
    %1165 = vmatprep.mubr.f32.mxu0 0.0
    %1166 = vmatmul.mubr.f32.gmra.mrb[0].mxu0 %v797
    %v1167 = vpop.f32.mrb[0].mxu0
    %v1168 = vadd.f32 %v1083, %v1167
    %v1169 = vpop.f32.mrb[0].mxu0
    %1170 = vmatprep.mubr.f32.mxu0 0.0
    %1171 = vmatmul.mubr.f32.gmra.mrb[0].mxu0 %v799
    %v1172 = vpop.f32.mrb[0].mxu0
    %v1173 = vadd.f32 %v1088, %v1172
    %v1174 = vpop.f32.mrb[0].mxu0
    %1175 = vmatprep.mubr.f32.mxu0 0.0
    %1176 = vmatmul.mubr.f32.gmra.mrb[0].mxu0 %v845
    %v1177 = vpop.f32.mrb[0].mxu0
    %v1178 = vadd.f32 %v1093, %v1177
    %v1179 = vpop.f32.mrb[0].mxu0
    %1180 = vmatprep.mubr.f32.mxu0 0.0
    %1181 = vmatmul.mubr.f32.gmra.mrb[0].mxu0 %v847
    %v1182 = vpop.f32.mrb[0].mxu0
    %v1183 = vadd.f32 %v1098, %v1182
    %v1184 = vpop.f32.mrb[0].mxu0
    %1185 = vdwg.mxu0
    %v1186 = vlaneseq
    %v1187 = vshrl.u32 %v1186, 7
    %v1188 = vsub.s32 0, %v1187
    %v1189 = vrot.slane %v850, %v1188
    %v1190 = vmul.f32 %v1168, %v1189
    %v1191 = vmul.f32 %v1173, %v1189
    %v1192 = vmul.f32 %v1178, %v1189
    %v1193 = vmul.f32 %v1183, %v1189
    %v1194 = vlaneseq
    %v1195 = vshrl.u32 %v1194, 7
    %v1196 = vsub.s32 1, %v1195
    %v1197 = vrot.slane %v850, %v1196
    %v1198 = vadd.f32 %v1190, %v1197
    %v1199 = vadd.f32 %v1191, %v1197
    %v1200 = vadd.f32 %v1192, %v1197
    %v1201 = vadd.f32 %v1193, %v1197
    %vm1202 = vcmp.gt.f32.partialorder %v1198, 0.0
    %vm1203 = vcmp.gt.f32.partialorder %v1199, 0.0
    %vm1204 = vcmp.gt.f32.partialorder %v1200, 0.0
    %vm1205 = vcmp.gt.f32.partialorder %v1201, 0.0
    %v1206 = vmul.f32 %v1198, 0.1
    %v1207 = vmul.f32 %v1199, 0.1
    %v1208 = vmul.f32 %v1200, 0.1
    %v1209 = vmul.f32 %v1201, 0.1
    %v1210 = vsel %vm1202, %v1198, %v1206
    %v1211 = vsel %vm1203, %v1199, %v1207
    %v1212 = vsel %vm1204, %v1200, %v1208
    %v1213 = vsel %vm1205, %v1201, %v1209
    %v1214 = vld [vmem:[%s8] sm:$0x3]
    %v1215 = vld [vmem:[#allocation7] sm:$0xff]
    %v1216 = vld [vmem:[#allocation7 + $0x8] sm:$0xff]
    %v1217 = vld [vmem:[#allocation7 + $0x10] sm:$0xff]
    %v1218 = vld [vmem:[#allocation7 + $0x18] sm:$0xff]
    %v1219 = vld [vmem:[#allocation7 + $0x20] sm:$0xff]
    %v1220 = vld [vmem:[#allocation7 + $0x28] sm:$0xff]
    %v1221 = vld [vmem:[#allocation7 + $0x30] sm:$0xff]
    %v1222 = vld [vmem:[#allocation7 + $0x38] sm:$0xff]
    %v1223 = vld [vmem:[#allocation7 + $0x40] sm:$0xff]
    %v1224 = vld [vmem:[#allocation7 + $0x48] sm:$0xff]
    %v1225 = vld [vmem:[#allocation7 + $0x50] sm:$0xff]
    %v1226 = vld [vmem:[#allocation7 + $0x58] sm:$0xff]
    %v1227 = vld [vmem:[#allocation7 + $0x60] sm:$0xff]
    %v1228 = vld [vmem:[#allocation7 + $0x68] sm:$0xff]
    %v1229 = vld [vmem:[#allocation7 + $0x70] sm:$0xff]
    %v1230 = vld [vmem:[#allocation7 + $0x78] sm:$0xff]
    %1231 = vmatprep.subr.mxu0 0.0
    %1232 = vmatpush1.msra.mxu0 %v1215
    %1233 = vmatprep.subr.mxu0 0.0
    %1234 = vmatpush1.msra.mxu0 %v1216
    %1235 = vmatprep.subr.mxu0 0.0
    %1236 = vmatpush1.msra.mxu0 %v1217
    %1237 = vmatprep.subr.mxu0 0.0
    %1238 = vmatpush1.msra.mxu0 %v1218
    %1239 = vmatprep.subr.mxu0 0.0
    %1240 = vmatpush1.msra.mxu0 %v1219
    %1241 = vmatprep.subr.mxu0 0.0
    %1242 = vmatpush1.msra.mxu0 %v1220
    %1243 = vmatprep.subr.mxu0 0.0
    %1244 = vmatpush1.msra.mxu0 %v1221
    %1245 = vmatprep.subr.mxu0 0.0
    %1246 = vmatpush1.msra.mxu0 %v1222
    %1247 = vmatprep.subr.mxu0 0.0
    %1248 = vmatpush1.msra.mxu0 %v1223
    %1249 = vmatprep.subr.mxu0 0.0
    %1250 = vmatpush1.msra.mxu0 %v1224
    %1251 = vmatprep.subr.mxu0 0.0
    %1252 = vmatpush1.msra.mxu0 %v1225
    %1253 = vmatprep.subr.mxu0 0.0
    %1254 = vmatpush1.msra.mxu0 %v1226
    %1255 = vmatprep.subr.mxu0 0.0
    %1256 = vmatpush1.msra.mxu0 %v1227
    %1257 = vmatprep.subr.mxu0 0.0
    %1258 = vmatpush1.msra.mxu0 %v1228
    %1259 = vmatprep.subr.mxu0 0.0
    %1260 = vmatpush1.msra.mxu0 %v1229
    %1261 = vmatprep.subr.mxu0 0.0
    %1262 = vmatpush1.msra.mxu0 %v1230
    %1263 = vmatprep.subr.mxu0 0.0
    %1264 = vmatpush1.msra.mxu0 0.0
    %1265 = vmatprep.subr.mxu0 0.0
    %1266 = vmatpush1.msra.mxu0 0.0
    %1267 = vmatprep.subr.mxu0 0.0
    %1268 = vmatpush1.msra.mxu0 0.0
    %1269 = vmatprep.subr.mxu0 0.0
    %1270 = vmatpush1.msra.mxu0 0.0
    %1271 = vmatprep.subr.mxu0 0.0
    %1272 = vmatpush1.msra.mxu0 0.0
    %1273 = vmatprep.subr.mxu0 0.0
    %1274 = vmatpush1.msra.mxu0 0.0
    %1275 = vmatprep.subr.mxu0 0.0
    %1276 = vmatpush1.msra.mxu0 0.0
    %1277 = vmatprep.subr.mxu0 0.0
    %1278 = vmatpush1.msra.mxu0 0.0
    %1279 = vmatprep.subr.mxu0 0.0
    %1280 = vmatpush1.msra.mxu0 0.0
    %1281 = vmatprep.subr.mxu0 0.0
    %1282 = vmatpush1.msra.mxu0 0.0
    %1283 = vmatprep.subr.mxu0 0.0
    %1284 = vmatpush1.msra.mxu0 0.0
    %1285 = vmatprep.subr.mxu0 0.0
    %1286 = vmatpush1.msra.mxu0 0.0
    %1287 = vmatprep.subr.mxu0 0.0
    %1288 = vmatpush1.msra.mxu0 0.0
    %1289 = vmatprep.subr.mxu0 0.0
    %1290 = vmatpush1.msra.mxu0 0.0
    %1291 = vmatprep.subr.mxu0 0.0
    %1292 = vmatpush1.msra.mxu0 0.0
    %1293 = vmatprep.subr.mxu0 0.0
    %1294 = vmatpush1.msra.mxu0 0.0
    %1295 = vmatprep.mubr.f32.mxu0 0.0
    %1296 = vmatmul.mubr.f32.gmra.mrb[0].mxu0 %v750
    %v1297 = vpop.f32.mrb[0].mxu0
    %v1298 = vadd.f32 0.0, %v1297
    %v1299 = vpop.f32.mrb[0].mxu0
    %1300 = vmatprep.mubr.f32.mxu0 0.0
    %1301 = vmatmul.mubr.f32.gmra.mrb[0].mxu0 %v751
    %v1302 = vpop.f32.mrb[0].mxu0
    %v1303 = vadd.f32 0.0, %v1302
    %v1304 = vpop.f32.mrb[0].mxu0
    %1305 = vmatprep.mubr.f32.mxu0 0.0
    %1306 = vmatmul.mubr.f32.gmra.mrb[0].mxu0 %v752
    %v1307 = vpop.f32.mrb[0].mxu0
    %v1308 = vadd.f32 0.0, %v1307
    %v1309 = vpop.f32.mrb[0].mxu0
    %1310 = vmatprep.mubr.f32.mxu0 0.0
    %1311 = vmatmul.mubr.f32.gmra.mrb[0].mxu0 %v753
    %v1312 = vpop.f32.mrb[0].mxu0
    %v1313 = vadd.f32 0.0, %v1312
    %v1314 = vpop.f32.mrb[0].mxu0
    %1315 = vdwg.mxu0
    %v1316 = vlaneseq
    %v1317 = vshrl.u32 %v1316, 7
    %v1318 = vsub.s32 0, %v1317
    %v1319 = vrot.slane %v1214, %v1318
    %v1320 = vmul.f32 %v1298, %v1319
    %v1321 = vmul.f32 %v1303, %v1319
    %v1322 = vmul.f32 %v1308, %v1319
    %v1323 = vmul.f32 %v1313, %v1319
    %v1324 = vlaneseq
    %v1325 = vshrl.u32 %v1324, 7
    %v1326 = vsub.s32 1, %v1325
    %v1327 = vrot.slane %v1214, %v1326
    %v1328 = vadd.f32 %v1320, %v1327
    %v1329 = vadd.f32 %v1321, %v1327
    %v1330 = vadd.f32 %v1322, %v1327
    %v1331 = vadd.f32 %v1323, %v1327
    %v1332 = vadd.f32 %v1210, %v1328
    %v1333 = vadd.f32 %v1211, %v1329
    %v1334 = vadd.f32 %v1212, %v1330
    %v1335 = vadd.f32 %v1213, %v1331
    %v1336 = vmax.f32 %v1332, 0.0
    %v1337 = vmax.f32 %v1333, 0.0
    %v1338 = vmax.f32 %v1334, 0.0
    %v1339 = vmax.f32 %v1335, 0.0
    %v1342 = vrot.slane %v1336, 7
    %v1343 = vrot.slane %v1337, 7
    %v1344 = vsel %vm176, %v1342, %v1343
    %v1348 = vrot.slane %v1337, 6
    %v1350 = vsel %vm176, %v1336, %v1342
    %v1351 = vsel %vm176, %v1343, %v1348
    %v1354 = vrot.slane %v1350, 1
    %v1355 = vrot.slane %v1344, 1
    %v1356 = vsel %vm184, %v1354, %v1355
    %v1357 = vrot.slane %v1351, 1
    %v1358 = vsel %vm184, %v1355, %v1357
    %v1361 = vrot.slane %v1350, 2
    %v1362 = vrot.slane %v1344, 2
    %v1363 = vsel %vm192, %v1361, %v1362
    %v1364 = vrot.slane %v1351, 2
    %v1365 = vsel %vm192, %v1362, %v1364
    %v1370 = vrot.slane %v1338, 7
    %v1371 = vrot.slane %v1339, 7
    %v1372 = vsel %vm176, %v1370, %v1371
    %v1376 = vrot.slane %v1339, 6
    %v1378 = vsel %vm176, %v1338, %v1370
    %v1379 = vsel %vm176, %v1371, %v1376
    %v1382 = vrot.slane %v1378, 1
    %v1383 = vrot.slane %v1372, 1
    %v1384 = vsel %vm184, %v1382, %v1383
    %v1385 = vrot.slane %v1379, 1
    %v1386 = vsel %vm184, %v1383, %v1385
    %v1389 = vrot.slane %v1378, 2
    %v1390 = vrot.slane %v1372, 2
    %v1391 = vsel %vm192, %v1389, %v1390
    %v1392 = vrot.slane %v1379, 2
    %v1393 = vsel %vm192, %v1390, %v1392
    %v1396 = vld [vmem:[%s11] sm:$0x3]
    %v1397 = vld [vmem:[%s9] sm:$0xff]
    %v1398 = vld [vmem:[%s9 + $0x8] sm:$0xff]
    %v1399 = vld [vmem:[%s9 + $0x10] sm:$0xff]
    %v1400 = vld [vmem:[%s9 + $0x18] sm:$0xff]
    %v1401 = vld [vmem:[%s9 + $0x20] sm:$0xff]
    %v1402 = vld [vmem:[%s9 + $0x28] sm:$0xff]
    %v1403 = vld [vmem:[%s9 + $0x30] sm:$0xff]
    %v1404 = vld [vmem:[%s9 + $0x38] sm:$0xff]
    %v1405 = vld [vmem:[%s9 + $0x40] sm:$0xff]
    %v1406 = vld [vmem:[%s9 + $0x48] sm:$0xff]
    %v1407 = vld [vmem:[%s9 + $0x50] sm:$0xff]
    %v1408 = vld [vmem:[%s9 + $0x58] sm:$0xff]
    %v1409 = vld [vmem:[%s9 + $0x60] sm:$0xff]
    %v1410 = vld [vmem:[%s9 + $0x68] sm:$0xff]
    %v1411 = vld [vmem:[%s9 + $0x70] sm:$0xff]
    %v1412 = vld [vmem:[%s9 + $0x78] sm:$0xff]
    %v1413 = vld [vmem:[%s9 + $0x80] sm:$0xff]
    %v1414 = vld [vmem:[%s9 + $0x88] sm:$0xff]
    %v1415 = vld [vmem:[%s9 + $0x90] sm:$0xff]
    %v1416 = vld [vmem:[%s9 + $0x98] sm:$0xff]
    %v1417 = vld [vmem:[%s9 + $0xa0] sm:$0xff]
    %v1418 = vld [vmem:[%s9 + $0xa8] sm:$0xff]
    %v1419 = vld [vmem:[%s9 + $0xb0] sm:$0xff]
    %v1420 = vld [vmem:[%s9 + $0xb8] sm:$0xff]
    %v1421 = vld [vmem:[%s9 + $0xc0] sm:$0xff]
    %v1422 = vld [vmem:[%s9 + $0xc8] sm:$0xff]
    %v1423 = vld [vmem:[%s9 + $0xd0] sm:$0xff]
    %v1424 = vld [vmem:[%s9 + $0xd8] sm:$0xff]
    %v1425 = vld [vmem:[%s9 + $0xe0] sm:$0xff]
    %v1426 = vld [vmem:[%s9 + $0xe8] sm:$0xff]
    %v1427 = vld [vmem:[%s9 + $0xf0] sm:$0xff]
    %v1428 = vld [vmem:[%s9 + $0xf8] sm:$0xff]
    %v1429 = vld [vmem:[%s9 + $0x100] sm:$0xff]
    %v1430 = vld [vmem:[%s9 + $0x108] sm:$0xff]
    %v1431 = vld [vmem:[%s9 + $0x110] sm:$0xff]
    %v1432 = vld [vmem:[%s9 + $0x118] sm:$0xff]
    %v1433 = vld [vmem:[%s9 + $0x120] sm:$0xff]
    %v1434 = vld [vmem:[%s9 + $0x128] sm:$0xff]
    %v1435 = vld [vmem:[%s9 + $0x130] sm:$0xff]
    %v1436 = vld [vmem:[%s9 + $0x138] sm:$0xff]
    %v1437 = vld [vmem:[%s9 + $0x140] sm:$0xff]
    %v1438 = vld [vmem:[%s9 + $0x148] sm:$0xff]
    %v1439 = vld [vmem:[%s9 + $0x150] sm:$0xff]
    %v1440 = vld [vmem:[%s9 + $0x158] sm:$0xff]
    %v1441 = vld [vmem:[%s9 + $0x160] sm:$0xff]
    %v1442 = vld [vmem:[%s9 + $0x168] sm:$0xff]
    %v1443 = vld [vmem:[%s9 + $0x170] sm:$0xff]
    %v1444 = vld [vmem:[%s9 + $0x178] sm:$0xff]
    %1445 = vmatprep.subr.mxu0 0.0
    %1446 = vmatpush1.msra.mxu0 %v1397
    %1447 = vmatprep.subr.mxu0 0.0
    %1448 = vmatpush1.msra.mxu0 %v1398
    %1449 = vmatprep.subr.mxu0 0.0
    %1450 = vmatpush1.msra.mxu0 %v1399
    %1451 = vmatprep.subr.mxu0 0.0
    %1452 = vmatpush1.msra.mxu0 %v1400
    %1453 = vmatprep.subr.mxu0 0.0
    %1454 = vmatpush1.msra.mxu0 %v1401
    %1455 = vmatprep.subr.mxu0 0.0
    %1456 = vmatpush1.msra.mxu0 %v1402
    %1457 = vmatprep.subr.mxu0 0.0
    %1458 = vmatpush1.msra.mxu0 %v1403
    %1459 = vmatprep.subr.mxu0 0.0
    %1460 = vmatpush1.msra.mxu0 %v1404
    %1461 = vmatprep.subr.mxu0 0.0
    %1462 = vmatpush1.msra.mxu0 %v1405
    %1463 = vmatprep.subr.mxu0 0.0
    %1464 = vmatpush1.msra.mxu0 %v1406
    %1465 = vmatprep.subr.mxu0 0.0
    %1466 = vmatpush1.msra.mxu0 %v1407
    %1467 = vmatprep.subr.mxu0 0.0
    %1468 = vmatpush1.msra.mxu0 %v1408
    %1469 = vmatprep.subr.mxu0 0.0
    %1470 = vmatpush1.msra.mxu0 %v1409
    %1471 = vmatprep.subr.mxu0 0.0
    %1472 = vmatpush1.msra.mxu0 %v1410
    %1473 = vmatprep.subr.mxu0 0.0
    %1474 = vmatpush1.msra.mxu0 %v1411
    %1475 = vmatprep.subr.mxu0 0.0
    %1476 = vmatpush1.msra.mxu0 %v1412
    %1477 = vmatprep.subr.mxu0 0.0
    %1478 = vmatpush1.msra.mxu0 %v1413
    %1479 = vmatprep.subr.mxu0 0.0
    %1480 = vmatpush1.msra.mxu0 %v1414
    %1481 = vmatprep.subr.mxu0 0.0
    %1482 = vmatpush1.msra.mxu0 %v1415
    %1483 = vmatprep.subr.mxu0 0.0
    %1484 = vmatpush1.msra.mxu0 %v1416
    %1485 = vmatprep.subr.mxu0 0.0
    %1486 = vmatpush1.msra.mxu0 %v1417
    %1487 = vmatprep.subr.mxu0 0.0
    %1488 = vmatpush1.msra.mxu0 %v1418
    %1489 = vmatprep.subr.mxu0 0.0
    %1490 = vmatpush1.msra.mxu0 %v1419
    %1491 = vmatprep.subr.mxu0 0.0
    %1492 = vmatpush1.msra.mxu0 %v1420
    %1493 = vmatprep.subr.mxu0 0.0
    %1494 = vmatpush1.msra.mxu0 %v1421
    %1495 = vmatprep.subr.mxu0 0.0
    %1496 = vmatpush1.msra.mxu0 %v1422
    %1497 = vmatprep.subr.mxu0 0.0
    %1498 = vmatpush1.msra.mxu0 %v1423
    %1499 = vmatprep.subr.mxu0 0.0
    %1500 = vmatpush1.msra.mxu0 %v1424
    %1501 = vmatprep.subr.mxu0 0.0
    %1502 = vmatpush1.msra.mxu0 %v1425
    %1503 = vmatprep.subr.mxu0 0.0
    %1504 = vmatpush1.msra.mxu0 %v1426
    %1505 = vmatprep.subr.mxu0 0.0
    %1506 = vmatpush1.msra.mxu0 %v1427
    %1507 = vmatprep.subr.mxu0 0.0
    %1508 = vmatpush1.msra.mxu0 %v1428
    %1509 = vmatprep.mubr.f32.mxu0 %v1356
    %1510 = vmatmul.mubr.f32.gmra.mrb[0].mxu0 %v1350
    %v1511 = vpop.f32.mrb[0].mxu0
    %v1512 = vadd.f32 0.0, %v1511
    %v1513 = vpop.f32.mrb[0].mxu0
    %1514 = vmatprep.mubr.f32.mxu0 %v1358
    %1515 = vmatmul.mubr.f32.gmra.mrb[0].mxu0 %v1344
    %v1516 = vpop.f32.mrb[0].mxu0
    %v1517 = vadd.f32 0.0, %v1516
    %v1518 = vpop.f32.mrb[0].mxu0
    %1519 = vmatprep.mubr.f32.mxu0 %v1384
    %1520 = vmatmul.mubr.f32.gmra.mrb[0].mxu0 %v1378
    %v1521 = vpop.f32.mrb[0].mxu0
    %v1522 = vadd.f32 0.0, %v1521
    %v1523 = vpop.f32.mrb[0].mxu0
    %1524 = vmatprep.mubr.f32.mxu0 %v1386
    %1525 = vmatmul.mubr.f32.gmra.mrb[0].mxu0 %v1372
    %v1526 = vpop.f32.mrb[0].mxu0
    %v1527 = vadd.f32 0.0, %v1526
    %v1528 = vpop.f32.mrb[0].mxu0
    %1529 = vdwg.mxu0
    %1530 = vmatprep.subr.mxu0 0.0
    %1531 = vmatpush1.msra.mxu0 %v1429
    %1532 = vmatprep.subr.mxu0 0.0
    %1533 = vmatpush1.msra.mxu0 %v1430
    %1534 = vmatprep.subr.mxu0 0.0
    %1535 = vmatpush1.msra.mxu0 %v1431
    %1536 = vmatprep.subr.mxu0 0.0
    %1537 = vmatpush1.msra.mxu0 %v1432
    %1538 = vmatprep.subr.mxu0 0.0
    %1539 = vmatpush1.msra.mxu0 %v1433
    %1540 = vmatprep.subr.mxu0 0.0
    %1541 = vmatpush1.msra.mxu0 %v1434
    %1542 = vmatprep.subr.mxu0 0.0
    %1543 = vmatpush1.msra.mxu0 %v1435
    %1544 = vmatprep.subr.mxu0 0.0
    %1545 = vmatpush1.msra.mxu0 %v1436
    %1546 = vmatprep.subr.mxu0 0.0
    %1547 = vmatpush1.msra.mxu0 %v1437
    %1548 = vmatprep.subr.mxu0 0.0
    %1549 = vmatpush1.msra.mxu0 %v1438
    %1550 = vmatprep.subr.mxu0 0.0
    %1551 = vmatpush1.msra.mxu0 %v1439
    %1552 = vmatprep.subr.mxu0 0.0
    %1553 = vmatpush1.msra.mxu0 %v1440
    %1554 = vmatprep.subr.mxu0 0.0
    %1555 = vmatpush1.msra.mxu0 %v1441
    %1556 = vmatprep.subr.mxu0 0.0
    %1557 = vmatpush1.msra.mxu0 %v1442
    %1558 = vmatprep.subr.mxu0 0.0
    %1559 = vmatpush1.msra.mxu0 %v1443
    %1560 = vmatprep.subr.mxu0 0.0
    %1561 = vmatpush1.msra.mxu0 %v1444
    %1562 = vmatprep.subr.mxu0 0.0
    %1563 = vmatpush1.msra.mxu0 0.0
    %1564 = vmatprep.subr.mxu0 0.0
    %1565 = vmatpush1.msra.mxu0 0.0
    %1566 = vmatprep.subr.mxu0 0.0
    %1567 = vmatpush1.msra.mxu0 0.0
    %1568 = vmatprep.subr.mxu0 0.0
    %1569 = vmatpush1.msra.mxu0 0.0
    %1570 = vmatprep.subr.mxu0 0.0
    %1571 = vmatpush1.msra.mxu0 0.0
    %1572 = vmatprep.subr.mxu0 0.0
    %1573 = vmatpush1.msra.mxu0 0.0
    %1574 = vmatprep.subr.mxu0 0.0
    %1575 = vmatpush1.msra.mxu0 0.0
    %1576 = vmatprep.subr.mxu0 0.0
    %1577 = vmatpush1.msra.mxu0 0.0
    %1578 = vmatprep.subr.mxu0 0.0
    %1579 = vmatpush1.msra.mxu0 0.0
    %1580 = vmatprep.subr.mxu0 0.0
    %1581 = vmatpush1.msra.mxu0 0.0
    %1582 = vmatprep.subr.mxu0 0.0
    %1583 = vmatpush1.msra.mxu0 0.0
    %1584 = vmatprep.subr.mxu0 0.0
    %1585 = vmatpush1.msra.mxu0 0.0
    %1586 = vmatprep.subr.mxu0 0.0
    %1587 = vmatpush1.msra.mxu0 0.0
    %1588 = vmatprep.subr.mxu0 0.0
    %1589 = vmatpush1.msra.mxu0 0.0
    %1590 = vmatprep.subr.mxu0 0.0
    %1591 = vmatpush1.msra.mxu0 0.0
    %1592 = vmatprep.subr.mxu0 0.0
    %1593 = vmatpush1.msra.mxu0 0.0
    %1594 = vmatprep.mubr.f32.mxu0 0.0
    %1595 = vmatmul.mubr.f32.gmra.mrb[0].mxu0 %v1363
    %v1596 = vpop.f32.mrb[0].mxu0
    %v1597 = vadd.f32 %v1512, %v1596
    %v1598 = vpop.f32.mrb[0].mxu0
    %1599 = vmatprep.mubr.f32.mxu0 0.0
    %1600 = vmatmul.mubr.f32.gmra.mrb[0].mxu0 %v1365
    %v1601 = vpop.f32.mrb[0].mxu0
    %v1602 = vadd.f32 %v1517, %v1601
    %v1603 = vpop.f32.mrb[0].mxu0
    %1604 = vmatprep.mubr.f32.mxu0 0.0
    %1605 = vmatmul.mubr.f32.gmra.mrb[0].mxu0 %v1391
    %v1606 = vpop.f32.mrb[0].mxu0
    %v1607 = vadd.f32 %v1522, %v1606
    %v1608 = vpop.f32.mrb[0].mxu0
    %1609 = vmatprep.mubr.f32.mxu0 0.0
    %1610 = vmatmul.mubr.f32.gmra.mrb[0].mxu0 %v1393
    %v1611 = vpop.f32.mrb[0].mxu0
    %v1612 = vadd.f32 %v1527, %v1611
    %v1613 = vpop.f32.mrb[0].mxu0
    %1614 = vdwg.mxu0
    %v1615 = vlaneseq
    %v1616 = vshrl.u32 %v1615, 7
    %v1617 = vsub.s32 0, %v1616
    %v1618 = vrot.slane %v1396, %v1617
    %v1619 = vmul.f32 %v1597, %v1618
    %v1620 = vmul.f32 %v1602, %v1618
    %v1621 = vmul.f32 %v1607, %v1618
    %v1622 = vmul.f32 %v1612, %v1618
    %v1623 = vlaneseq
    %v1624 = vshrl.u32 %v1623, 7
    %v1625 = vsub.s32 1, %v1624
    %v1626 = vrot.slane %v1396, %v1625
    %v1627 = vadd.f32 %v1619, %v1626
    %v1628 = vadd.f32 %v1620, %v1626
    %v1629 = vadd.f32 %v1621, %v1626
    %v1630 = vadd.f32 %v1622, %v1626
    %vm1631 = vcmp.gt.f32.partialorder %v1627, 0.0
    %vm1632 = vcmp.gt.f32.partialorder %v1628, 0.0
    %vm1633 = vcmp.gt.f32.partialorder %v1629, 0.0
    %vm1634 = vcmp.gt.f32.partialorder %v1630, 0.0
    %v1635 = vmul.f32 %v1627, 0.1
    %v1636 = vmul.f32 %v1628, 0.1
    %v1637 = vmul.f32 %v1629, 0.1
    %v1638 = vmul.f32 %v1630, 0.1
    %v1639 = vsel %vm1631, %v1627, %v1635
    %v1640 = vsel %vm1632, %v1628, %v1636
    %v1641 = vsel %vm1633, %v1629, %v1637
    %v1642 = vsel %vm1634, %v1630, %v1638
    %v1643 = vld [vmem:[%s12] sm:$0x3]
    %v1644 = vld [vmem:[#allocation9] sm:$0xff]
    %v1645 = vld [vmem:[#allocation9 + $0x8] sm:$0xff]
    %v1646 = vld [vmem:[#allocation9 + $0x10] sm:$0xff]
    %v1647 = vld [vmem:[#allocation9 + $0x18] sm:$0xff]
    %v1648 = vld [vmem:[#allocation9 + $0x20] sm:$0xff]
    %v1649 = vld [vmem:[#allocation9 + $0x28] sm:$0xff]
    %v1650 = vld [vmem:[#allocation9 + $0x30] sm:$0xff]
    %v1651 = vld [vmem:[#allocation9 + $0x38] sm:$0xff]
    %v1652 = vld [vmem:[#allocation9 + $0x40] sm:$0xff]
    %v1653 = vld [vmem:[#allocation9 + $0x48] sm:$0xff]
    %v1654 = vld [vmem:[#allocation9 + $0x50] sm:$0xff]
    %v1655 = vld [vmem:[#allocation9 + $0x58] sm:$0xff]
    %v1656 = vld [vmem:[#allocation9 + $0x60] sm:$0xff]
    %v1657 = vld [vmem:[#allocation9 + $0x68] sm:$0xff]
    %v1658 = vld [vmem:[#allocation9 + $0x70] sm:$0xff]
    %v1659 = vld [vmem:[#allocation9 + $0x78] sm:$0xff]
    %1660 = vmatprep.subr.mxu0 0.0
    %1661 = vmatpush1.msra.mxu0 %v1644
    %1662 = vmatprep.subr.mxu0 0.0
    %1663 = vmatpush1.msra.mxu0 %v1645
    %1664 = vmatprep.subr.mxu0 0.0
    %1665 = vmatpush1.msra.mxu0 %v1646
    %1666 = vmatprep.subr.mxu0 0.0
    %1667 = vmatpush1.msra.mxu0 %v1647
    %1668 = vmatprep.subr.mxu0 0.0
    %1669 = vmatpush1.msra.mxu0 %v1648
    %1670 = vmatprep.subr.mxu0 0.0
    %1671 = vmatpush1.msra.mxu0 %v1649
    %1672 = vmatprep.subr.mxu0 0.0
    %1673 = vmatpush1.msra.mxu0 %v1650
    %1674 = vmatprep.subr.mxu0 0.0
    %1675 = vmatpush1.msra.mxu0 %v1651
    %1676 = vmatprep.subr.mxu0 0.0
    %1677 = vmatpush1.msra.mxu0 %v1652
    %1678 = vmatprep.subr.mxu0 0.0
    %1679 = vmatpush1.msra.mxu0 %v1653
    %1680 = vmatprep.subr.mxu0 0.0
    %1681 = vmatpush1.msra.mxu0 %v1654
    %1682 = vmatprep.subr.mxu0 0.0
    %1683 = vmatpush1.msra.mxu0 %v1655
    %1684 = vmatprep.subr.mxu0 0.0
    %1685 = vmatpush1.msra.mxu0 %v1656
    %1686 = vmatprep.subr.mxu0 0.0
    %1687 = vmatpush1.msra.mxu0 %v1657
    %1688 = vmatprep.subr.mxu0 0.0
    %1689 = vmatpush1.msra.mxu0 %v1658
    %1690 = vmatprep.subr.mxu0 0.0
    %1691 = vmatpush1.msra.mxu0 %v1659
    %1692 = vmatprep.subr.mxu0 0.0
    %1693 = vmatpush1.msra.mxu0 0.0
    %1694 = vmatprep.subr.mxu0 0.0
    %1695 = vmatpush1.msra.mxu0 0.0
    %1696 = vmatprep.subr.mxu0 0.0
    %1697 = vmatpush1.msra.mxu0 0.0
    %1698 = vmatprep.subr.mxu0 0.0
    %1699 = vmatpush1.msra.mxu0 0.0
    %1700 = vmatprep.subr.mxu0 0.0
    %1701 = vmatpush1.msra.mxu0 0.0
    %1702 = vmatprep.subr.mxu0 0.0
    %1703 = vmatpush1.msra.mxu0 0.0
    %1704 = vmatprep.subr.mxu0 0.0
    %1705 = vmatpush1.msra.mxu0 0.0
    %1706 = vmatprep.subr.mxu0 0.0
    %1707 = vmatpush1.msra.mxu0 0.0
    %1708 = vmatprep.subr.mxu0 0.0
    %1709 = vmatpush1.msra.mxu0 0.0
    %1710 = vmatprep.subr.mxu0 0.0
    %1711 = vmatpush1.msra.mxu0 0.0
    %1712 = vmatprep.subr.mxu0 0.0
    %1713 = vmatpush1.msra.mxu0 0.0
    %1714 = vmatprep.subr.mxu0 0.0
    %1715 = vmatpush1.msra.mxu0 0.0
    %1716 = vmatprep.subr.mxu0 0.0
    %1717 = vmatpush1.msra.mxu0 0.0
    %1718 = vmatprep.subr.mxu0 0.0
    %1719 = vmatpush1.msra.mxu0 0.0
    %1720 = vmatprep.subr.mxu0 0.0
    %1721 = vmatpush1.msra.mxu0 0.0
    %1722 = vmatprep.subr.mxu0 0.0
    %1723 = vmatpush1.msra.mxu0 0.0
    %1724 = vmatprep.mubr.f32.mxu0 0.0
    %1725 = vmatmul.mubr.f32.gmra.mrb[0].mxu0 %v1336
    %v1726 = vpop.f32.mrb[0].mxu0
    %v1727 = vadd.f32 0.0, %v1726
    %v1728 = vpop.f32.mrb[0].mxu0
    %1729 = vmatprep.mubr.f32.mxu0 0.0
    %1730 = vmatmul.mubr.f32.gmra.mrb[0].mxu0 %v1337
    %v1731 = vpop.f32.mrb[0].mxu0
    %v1732 = vadd.f32 0.0, %v1731
    %v1733 = vpop.f32.mrb[0].mxu0
    %1734 = vmatprep.mubr.f32.mxu0 0.0
    %1735 = vmatmul.mubr.f32.gmra.mrb[0].mxu0 %v1338
    %v1736 = vpop.f32.mrb[0].mxu0
    %v1737 = vadd.f32 0.0, %v1736
    %v1738 = vpop.f32.mrb[0].mxu0
    %1739 = vmatprep.mubr.f32.mxu0 0.0
    %1740 = vmatmul.mubr.f32.gmra.mrb[0].mxu0 %v1339
    %v1741 = vpop.f32.mrb[0].mxu0
    %v1742 = vadd.f32 0.0, %v1741
    %v1743 = vpop.f32.mrb[0].mxu0
    %1744 = vdwg.mxu0
    %v1745 = vlaneseq
    %v1746 = vshrl.u32 %v1745, 7
    %v1747 = vsub.s32 0, %v1746
    %v1748 = vrot.slane %v1643, %v1747
    %v1749 = vmul.f32 %v1727, %v1748
    %v1750 = vmul.f32 %v1732, %v1748
    %v1751 = vmul.f32 %v1737, %v1748
    %v1752 = vmul.f32 %v1742, %v1748
    %v1753 = vlaneseq
    %v1754 = vshrl.u32 %v1753, 7
    %v1755 = vsub.s32 1, %v1754
    %v1756 = vrot.slane %v1643, %v1755
    %v1757 = vadd.f32 %v1749, %v1756
    %v1758 = vadd.f32 %v1750, %v1756
    %v1759 = vadd.f32 %v1751, %v1756
    %v1760 = vadd.f32 %v1752, %v1756
    %v1761 = vadd.f32 %v1639, %v1757
    %v1762 = vadd.f32 %v1640, %v1758
    %v1763 = vadd.f32 %v1641, %v1759
    %v1764 = vadd.f32 %v1642, %v1760
    %v1765 = vmax.f32 %v1761, 0.0
    %v1766 = vmax.f32 %v1762, 0.0
    %v1767 = vmax.f32 %v1763, 0.0
    %v1768 = vmax.f32 %v1764, 0.0
    %v1771 = vrot.slane %v1765, 7
    %v1772 = vrot.slane %v1766, 7
    %v1773 = vsel %vm176, %v1771, %v1772
    %v1777 = vrot.slane %v1766, 6
    %v1779 = vsel %vm176, %v1765, %v1771
    %v1780 = vsel %vm176, %v1772, %v1777
    %v1783 = vrot.slane %v1779, 1
    %v1784 = vrot.slane %v1773, 1
    %v1785 = vsel %vm184, %v1783, %v1784
    %v1786 = vrot.slane %v1780, 1
    %v1787 = vsel %vm184, %v1784, %v1786
    %v1790 = vrot.slane %v1779, 2
    %v1791 = vrot.slane %v1773, 2
    %v1792 = vsel %vm192, %v1790, %v1791
    %v1793 = vrot.slane %v1780, 2
    %v1794 = vsel %vm192, %v1791, %v1793
    %v1799 = vrot.slane %v1767, 7
    %v1800 = vrot.slane %v1768, 7
    %v1801 = vsel %vm176, %v1799, %v1800
    %v1805 = vrot.slane %v1768, 6
    %v1807 = vsel %vm176, %v1767, %v1799
    %v1808 = vsel %vm176, %v1800, %v1805
    %v1811 = vrot.slane %v1807, 1
    %v1812 = vrot.slane %v1801, 1
    %v1813 = vsel %vm184, %v1811, %v1812
    %v1814 = vrot.slane %v1808, 1
    %v1815 = vsel %vm184, %v1812, %v1814
    %v1818 = vrot.slane %v1807, 2
    %v1819 = vrot.slane %v1801, 2
    %v1820 = vsel %vm192, %v1818, %v1819
    %v1821 = vrot.slane %v1808, 2
    %v1822 = vsel %vm192, %v1819, %v1821
    %v1825 = vld [vmem:[%s15] sm:$0xf]
    %v1826 = vld [vmem:[#allocation10] sm:$0xff]
    %v1827 = vld [vmem:[#allocation10 + $0x8] sm:$0xff]
    %v1828 = vld [vmem:[#allocation10 + $0x10] sm:$0xff]
    %v1829 = vld [vmem:[#allocation10 + $0x18] sm:$0xff]
    %v1830 = vld [vmem:[#allocation10 + $0x20] sm:$0xff]
    %v1831 = vld [vmem:[#allocation10 + $0x28] sm:$0xff]
    %v1832 = vld [vmem:[#allocation10 + $0x30] sm:$0xff]
    %v1833 = vld [vmem:[#allocation10 + $0x38] sm:$0xff]
    %v1834 = vld [vmem:[#allocation10 + $0x40] sm:$0xff]
    %v1835 = vld [vmem:[#allocation10 + $0x48] sm:$0xff]
    %v1836 = vld [vmem:[#allocation10 + $0x50] sm:$0xff]
    %v1837 = vld [vmem:[#allocation10 + $0x58] sm:$0xff]
    %v1838 = vld [vmem:[#allocation10 + $0x60] sm:$0xff]
    %v1839 = vld [vmem:[#allocation10 + $0x68] sm:$0xff]
    %v1840 = vld [vmem:[#allocation10 + $0x70] sm:$0xff]
    %v1841 = vld [vmem:[#allocation10 + $0x78] sm:$0xff]
    %v1842 = vld [vmem:[#allocation10 + $0x80] sm:$0xff]
    %v1843 = vld [vmem:[#allocation10 + $0x88] sm:$0xff]
    %v1844 = vld [vmem:[#allocation10 + $0x90] sm:$0xff]
    %v1845 = vld [vmem:[#allocation10 + $0x98] sm:$0xff]
    %v1846 = vld [vmem:[#allocation10 + $0xa0] sm:$0xff]
    %v1847 = vld [vmem:[#allocation10 + $0xa8] sm:$0xff]
    %v1848 = vld [vmem:[#allocation10 + $0xb0] sm:$0xff]
    %v1849 = vld [vmem:[#allocation10 + $0xb8] sm:$0xff]
    %v1850 = vld [vmem:[#allocation10 + $0xc0] sm:$0xff]
    %v1851 = vld [vmem:[#allocation10 + $0xc8] sm:$0xff]
    %v1852 = vld [vmem:[#allocation10 + $0xd0] sm:$0xff]
    %v1853 = vld [vmem:[#allocation10 + $0xd8] sm:$0xff]
    %v1854 = vld [vmem:[#allocation10 + $0xe0] sm:$0xff]
    %v1855 = vld [vmem:[#allocation10 + $0xe8] sm:$0xff]
    %v1856 = vld [vmem:[#allocation10 + $0xf0] sm:$0xff]
    %v1857 = vld [vmem:[#allocation10 + $0xf8] sm:$0xff]
    %v1858 = vld [vmem:[#allocation10 + $0x100] sm:$0xff]
    %v1859 = vld [vmem:[#allocation10 + $0x108] sm:$0xff]
    %v1860 = vld [vmem:[#allocation10 + $0x110] sm:$0xff]
    %v1861 = vld [vmem:[#allocation10 + $0x118] sm:$0xff]
    %v1862 = vld [vmem:[#allocation10 + $0x120] sm:$0xff]
    %v1863 = vld [vmem:[#allocation10 + $0x128] sm:$0xff]
    %v1864 = vld [vmem:[#allocation10 + $0x130] sm:$0xff]
    %v1865 = vld [vmem:[#allocation10 + $0x138] sm:$0xff]
    %v1866 = vld [vmem:[#allocation10 + $0x140] sm:$0xff]
    %v1867 = vld [vmem:[#allocation10 + $0x148] sm:$0xff]
    %v1868 = vld [vmem:[#allocation10 + $0x150] sm:$0xff]
    %v1869 = vld [vmem:[#allocation10 + $0x158] sm:$0xff]
    %v1870 = vld [vmem:[#allocation10 + $0x160] sm:$0xff]
    %v1871 = vld [vmem:[#allocation10 + $0x168] sm:$0xff]
    %v1872 = vld [vmem:[#allocation10 + $0x170] sm:$0xff]
    %v1873 = vld [vmem:[#allocation10 + $0x178] sm:$0xff]
    %v1874 = vld [vmem:[#allocation10 + $0x180] sm:$0xff]
    %v1875 = vld [vmem:[#allocation10 + $0x188] sm:$0xff]
    %v1876 = vld [vmem:[#allocation10 + $0x190] sm:$0xff]
    %v1877 = vld [vmem:[#allocation10 + $0x198] sm:$0xff]
    %v1878 = vld [vmem:[#allocation10 + $0x1a0] sm:$0xff]
    %v1879 = vld [vmem:[#allocation10 + $0x1a8] sm:$0xff]
    %v1880 = vld [vmem:[#allocation10 + $0x1b0] sm:$0xff]
    %v1881 = vld [vmem:[#allocation10 + $0x1b8] sm:$0xff]
    %v1882 = vld [vmem:[#allocation10 + $0x1c0] sm:$0xff]
    %v1883 = vld [vmem:[#allocation10 + $0x1c8] sm:$0xff]
    %v1884 = vld [vmem:[#allocation10 + $0x1d0] sm:$0xff]
    %v1885 = vld [vmem:[#allocation10 + $0x1d8] sm:$0xff]
    %v1886 = vld [vmem:[#allocation10 + $0x1e0] sm:$0xff]
    %v1887 = vld [vmem:[#allocation10 + $0x1e8] sm:$0xff]
    %v1888 = vld [vmem:[#allocation10 + $0x1f0] sm:$0xff]
    %v1889 = vld [vmem:[#allocation10 + $0x1f8] sm:$0xff]
    %v1890 = vld [vmem:[#allocation10 + $0x200] sm:$0xff]
    %v1891 = vld [vmem:[#allocation10 + $0x208] sm:$0xff]
    %v1892 = vld [vmem:[#allocation10 + $0x210] sm:$0xff]
    %v1893 = vld [vmem:[#allocation10 + $0x218] sm:$0xff]
    %v1894 = vld [vmem:[#allocation10 + $0x220] sm:$0xff]
    %v1895 = vld [vmem:[#allocation10 + $0x228] sm:$0xff]
    %v1896 = vld [vmem:[#allocation10 + $0x230] sm:$0xff]
    %v1897 = vld [vmem:[#allocation10 + $0x238] sm:$0xff]
    %v1898 = vld [vmem:[#allocation10 + $0x240] sm:$0xff]
    %v1899 = vld [vmem:[#allocation10 + $0x248] sm:$0xff]
    %v1900 = vld [vmem:[#allocation10 + $0x250] sm:$0xff]
    %v1901 = vld [vmem:[#allocation10 + $0x258] sm:$0xff]
    %v1902 = vld [vmem:[#allocation10 + $0x260] sm:$0xff]
    %v1903 = vld [vmem:[#allocation10 + $0x268] sm:$0xff]
    %v1904 = vld [vmem:[#allocation10 + $0x270] sm:$0xff]
    %v1905 = vld [vmem:[#allocation10 + $0x278] sm:$0xff]
    %v1906 = vld [vmem:[#allocation10 + $0x280] sm:$0xff]
    %v1907 = vld [vmem:[#allocation10 + $0x288] sm:$0xff]
    %v1908 = vld [vmem:[#allocation10 + $0x290] sm:$0xff]
    %v1909 = vld [vmem:[#allocation10 + $0x298] sm:$0xff]
    %v1910 = vld [vmem:[#allocation10 + $0x2a0] sm:$0xff]
    %v1911 = vld [vmem:[#allocation10 + $0x2a8] sm:$0xff]
    %v1912 = vld [vmem:[#allocation10 + $0x2b0] sm:$0xff]
    %v1913 = vld [vmem:[#allocation10 + $0x2b8] sm:$0xff]
    %v1914 = vld [vmem:[#allocation10 + $0x2c0] sm:$0xff]
    %v1915 = vld [vmem:[#allocation10 + $0x2c8] sm:$0xff]
    %v1916 = vld [vmem:[#allocation10 + $0x2d0] sm:$0xff]
    %v1917 = vld [vmem:[#allocation10 + $0x2d8] sm:$0xff]
    %v1918 = vld [vmem:[#allocation10 + $0x2e0] sm:$0xff]
    %v1919 = vld [vmem:[#allocation10 + $0x2e8] sm:$0xff]
    %v1920 = vld [vmem:[#allocation10 + $0x2f0] sm:$0xff]
    %v1921 = vld [vmem:[#allocation10 + $0x2f8] sm:$0xff]
    %1922 = vmatprep.subr.mxu0 %v1827
    %1923 = vmatpush1.msra.mxu0 %v1826
    %1924 = vmatprep.subr.mxu0 %v1829
    %1925 = vmatpush1.msra.mxu0 %v1828
    %1926 = vmatprep.subr.mxu0 %v1831
    %1927 = vmatpush1.msra.mxu0 %v1830
    %1928 = vmatprep.subr.mxu0 %v1833
    %1929 = vmatpush1.msra.mxu0 %v1832
    %1930 = vmatprep.subr.mxu0 %v1835
    %1931 = vmatpush1.msra.mxu0 %v1834
    %1932 = vmatprep.subr.mxu0 %v1837
    %1933 = vmatpush1.msra.mxu0 %v1836
    %1934 = vmatprep.subr.mxu0 %v1839
    %1935 = vmatpush1.msra.mxu0 %v1838
    %1936 = vmatprep.subr.mxu0 %v1841
    %1937 = vmatpush1.msra.mxu0 %v1840
    %1938 = vmatprep.subr.mxu0 %v1843
    %1939 = vmatpush1.msra.mxu0 %v1842
    %1940 = vmatprep.subr.mxu0 %v1845
    %1941 = vmatpush1.msra.mxu0 %v1844
    %1942 = vmatprep.subr.mxu0 %v1847
    %1943 = vmatpush1.msra.mxu0 %v1846
    %1944 = vmatprep.subr.mxu0 %v1849
    %1945 = vmatpush1.msra.mxu0 %v1848
    %1946 = vmatprep.subr.mxu0 %v1851
    %1947 = vmatpush1.msra.mxu0 %v1850
    %1948 = vmatprep.subr.mxu0 %v1853
    %1949 = vmatpush1.msra.mxu0 %v1852
    %1950 = vmatprep.subr.mxu0 %v1855
    %1951 = vmatpush1.msra.mxu0 %v1854
    %1952 = vmatprep.subr.mxu0 %v1857
    %1953 = vmatpush1.msra.mxu0 %v1856
    %1954 = vmatprep.subr.mxu0 %v1859
    %1955 = vmatpush1.msra.mxu0 %v1858
    %1956 = vmatprep.subr.mxu0 %v1861
    %1957 = vmatpush1.msra.mxu0 %v1860
    %1958 = vmatprep.subr.mxu0 %v1863
    %1959 = vmatpush1.msra.mxu0 %v1862
    %1960 = vmatprep.subr.mxu0 %v1865
    %1961 = vmatpush1.msra.mxu0 %v1864
    %1962 = vmatprep.subr.mxu0 %v1867
    %1963 = vmatpush1.msra.mxu0 %v1866
    %1964 = vmatprep.subr.mxu0 %v1869
    %1965 = vmatpush1.msra.mxu0 %v1868
    %1966 = vmatprep.subr.mxu0 %v1871
    %1967 = vmatpush1.msra.mxu0 %v1870
    %1968 = vmatprep.subr.mxu0 %v1873
    %1969 = vmatpush1.msra.mxu0 %v1872
    %1970 = vmatprep.subr.mxu0 %v1875
    %1971 = vmatpush1.msra.mxu0 %v1874
    %1972 = vmatprep.subr.mxu0 %v1877
    %1973 = vmatpush1.msra.mxu0 %v1876
    %1974 = vmatprep.subr.mxu0 %v1879
    %1975 = vmatpush1.msra.mxu0 %v1878
    %1976 = vmatprep.subr.mxu0 %v1881
    %1977 = vmatpush1.msra.mxu0 %v1880
    %1978 = vmatprep.subr.mxu0 %v1883
    %1979 = vmatpush1.msra.mxu0 %v1882
    %1980 = vmatprep.subr.mxu0 %v1885
    %1981 = vmatpush1.msra.mxu0 %v1884
    %1982 = vmatprep.subr.mxu0 %v1887
    %1983 = vmatpush1.msra.mxu0 %v1886
    %1984 = vmatprep.subr.mxu0 %v1889
    %1985 = vmatpush1.msra.mxu0 %v1888
    %1986 = vmatprep.mubr.f32.mxu0 %v1785
    %1987 = vmatmul.mubr.f32.gmra.mrb[0].mxu0 %v1779
    %v1988 = vpop.f32.mrb[0].mxu0
    %v1989 = vadd.f32 0.0, %v1988
    %v1990 = vpop.f32.mrb[0].mxu0
    %v1991 = vadd.f32 0.0, %v1990
    %1992 = vmatprep.mubr.f32.mxu0 %v1787
    %1993 = vmatmul.mubr.f32.gmra.mrb[0].mxu0 %v1773
    %v1994 = vpop.f32.mrb[0].mxu0
    %v1995 = vadd.f32 0.0, %v1994
    %v1996 = vpop.f32.mrb[0].mxu0
    %v1997 = vadd.f32 0.0, %v1996
    %1998 = vmatprep.mubr.f32.mxu0 %v1813
    %1999 = vmatmul.mubr.f32.gmra.mrb[0].mxu0 %v1807
    %v2000 = vpop.f32.mrb[0].mxu0
    %v2001 = vadd.f32 0.0, %v2000
    %v2002 = vpop.f32.mrb[0].mxu0
    %v2003 = vadd.f32 0.0, %v2002
    %2004 = vmatprep.mubr.f32.mxu0 %v1815
    %2005 = vmatmul.mubr.f32.gmra.mrb[0].mxu0 %v1801
    %v2006 = vpop.f32.mrb[0].mxu0
    %v2007 = vadd.f32 0.0, %v2006
    %v2008 = vpop.f32.mrb[0].mxu0
    %v2009 = vadd.f32 0.0, %v2008
    %2010 = vdwg.mxu0
    %2011 = vmatprep.subr.mxu0 %v1891
    %2012 = vmatpush1.msra.mxu0 %v1890
    %2013 = vmatprep.subr.mxu0 %v1893
    %2014 = vmatpush1.msra.mxu0 %v1892
    %2015 = vmatprep.subr.mxu0 %v1895
    %2016 = vmatpush1.msra.mxu0 %v1894
    %2017 = vmatprep.subr.mxu0 %v1897
    %2018 = vmatpush1.msra.mxu0 %v1896
    %2019 = vmatprep.subr.mxu0 %v1899
    %2020 = vmatpush1.msra.mxu0 %v1898
    %2021 = vmatprep.subr.mxu0 %v1901
    %2022 = vmatpush1.msra.mxu0 %v1900
    %2023 = vmatprep.subr.mxu0 %v1903
    %2024 = vmatpush1.msra.mxu0 %v1902
    %2025 = vmatprep.subr.mxu0 %v1905
    %2026 = vmatpush1.msra.mxu0 %v1904
    %2027 = vmatprep.subr.mxu0 %v1907
    %2028 = vmatpush1.msra.mxu0 %v1906
    %2029 = vmatprep.subr.mxu0 %v1909
    %2030 = vmatpush1.msra.mxu0 %v1908
    %2031 = vmatprep.subr.mxu0 %v1911
    %2032 = vmatpush1.msra.mxu0 %v1910
    %2033 = vmatprep.subr.mxu0 %v1913
    %2034 = vmatpush1.msra.mxu0 %v1912
    %2035 = vmatprep.subr.mxu0 %v1915
    %2036 = vmatpush1.msra.mxu0 %v1914
    %2037 = vmatprep.subr.mxu0 %v1917
    %2038 = vmatpush1.msra.mxu0 %v1916
    %2039 = vmatprep.subr.mxu0 %v1919
    %2040 = vmatpush1.msra.mxu0 %v1918
    %2041 = vmatprep.subr.mxu0 %v1921
    %2042 = vmatpush1.msra.mxu0 %v1920
    %2043 = vmatprep.subr.mxu0 0.0
    %2044 = vmatpush1.msra.mxu0 0.0
    %2045 = vmatprep.subr.mxu0 0.0
    %2046 = vmatpush1.msra.mxu0 0.0
    %2047 = vmatprep.subr.mxu0 0.0
    %2048 = vmatpush1.msra.mxu0 0.0
    %2049 = vmatprep.subr.mxu0 0.0
    %2050 = vmatpush1.msra.mxu0 0.0
    %2051 = vmatprep.subr.mxu0 0.0
    %2052 = vmatpush1.msra.mxu0 0.0
    %2053 = vmatprep.subr.mxu0 0.0
    %2054 = vmatpush1.msra.mxu0 0.0
    %2055 = vmatprep.subr.mxu0 0.0
    %2056 = vmatpush1.msra.mxu0 0.0
    %2057 = vmatprep.subr.mxu0 0.0
    %2058 = vmatpush1.msra.mxu0 0.0
    %2059 = vmatprep.subr.mxu0 0.0
    %2060 = vmatpush1.msra.mxu0 0.0
    %2061 = vmatprep.subr.mxu0 0.0
    %2062 = vmatpush1.msra.mxu0 0.0
    %2063 = vmatprep.subr.mxu0 0.0
    %2064 = vmatpush1.msra.mxu0 0.0
    %2065 = vmatprep.subr.mxu0 0.0
    %2066 = vmatpush1.msra.mxu0 0.0
    %2067 = vmatprep.subr.mxu0 0.0
    %2068 = vmatpush1.msra.mxu0 0.0
    %2069 = vmatprep.subr.mxu0 0.0
    %2070 = vmatpush1.msra.mxu0 0.0
    %2071 = vmatprep.subr.mxu0 0.0
    %2072 = vmatpush1.msra.mxu0 0.0
    %2073 = vmatprep.subr.mxu0 0.0
    %2074 = vmatpush1.msra.mxu0 0.0
    %2075 = vmatprep.mubr.f32.mxu0 0.0
    %2076 = vmatmul.mubr.f32.gmra.mrb[0].mxu0 %v1792
    %v2077 = vpop.f32.mrb[0].mxu0
    %v2078 = vadd.f32 %v1989, %v2077
    %v2079 = vpop.f32.mrb[0].mxu0
    %v2080 = vadd.f32 %v1991, %v2079
    %2081 = vmatprep.mubr.f32.mxu0 0.0
    %2082 = vmatmul.mubr.f32.gmra.mrb[0].mxu0 %v1794
    %v2083 = vpop.f32.mrb[0].mxu0
    %v2084 = vadd.f32 %v1995, %v2083
    %v2085 = vpop.f32.mrb[0].mxu0
    %v2086 = vadd.f32 %v1997, %v2085
    %2087 = vmatprep.mubr.f32.mxu0 0.0
    %2088 = vmatmul.mubr.f32.gmra.mrb[0].mxu0 %v1820
    %v2089 = vpop.f32.mrb[0].mxu0
    %v2090 = vadd.f32 %v2001, %v2089
    %v2091 = vpop.f32.mrb[0].mxu0
    %v2092 = vadd.f32 %v2003, %v2091
    %2093 = vmatprep.mubr.f32.mxu0 0.0
    %2094 = vmatmul.mubr.f32.gmra.mrb[0].mxu0 %v1822
    %v2095 = vpop.f32.mrb[0].mxu0
    %v2096 = vadd.f32 %v2007, %v2095
    %v2097 = vpop.f32.mrb[0].mxu0
    %v2098 = vadd.f32 %v2009, %v2097
    %2099 = vdwg.mxu0
    %v2101 = vlaneseq
    %v2102 = vshrl.u32 %v2101, 7
    %v2103 = vsub.s32 0, %v2102
    %v2104 = vrot.slane %v1825, %v2103
    %v2105 = vlaneseq
    %v2106 = vshrl.u32 %v2105, 7
    %v2107 = vsub.s32 2, %v2106
    %v2108 = vrot.slane %v1825, %v2107
    %v2111 = vlaneseq
    %v2112 = vshrl.u32 %v2111, 7
    %v2113 = vsub.s32 0, %v2112
    %v2114 = vrot.slane %v2104, %v2113
    %v2115 = vlaneseq
    %v2116 = vshrl.u32 %v2115, 7
    %v2117 = vsub.s32 0, %v2116
    %v2118 = vrot.slane %v2108, %v2117
    %v2119 = vmul.f32 %v2078, %v2114
    %v2120 = vmul.f32 %v2080, %v2118
    %v2121 = vmul.f32 %v2084, %v2114
    %v2122 = vmul.f32 %v2086, %v2118
    %v2123 = vmul.f32 %v2090, %v2114
    %v2124 = vmul.f32 %v2092, %v2118
    %v2125 = vmul.f32 %v2096, %v2114
    %v2126 = vmul.f32 %v2098, %v2118
    %v2127 = vlaneseq
    %v2128 = vshrl.u32 %v2127, 7
    %v2129 = vsub.s32 1, %v2128
    %v2130 = vrot.slane %v1825, %v2129
    %v2131 = vlaneseq
    %v2132 = vshrl.u32 %v2131, 7
    %v2133 = vsub.s32 3, %v2132
    %v2134 = vrot.slane %v1825, %v2133
    %v2137 = vlaneseq
    %v2138 = vshrl.u32 %v2137, 7
    %v2139 = vsub.s32 1, %v2138
    %v2140 = vrot.slane %v2130, %v2139
    %v2141 = vlaneseq
    %v2142 = vshrl.u32 %v2141, 7
    %v2143 = vsub.s32 1, %v2142
    %v2144 = vrot.slane %v2134, %v2143
    %v2145 = vadd.f32 %v2119, %v2140
    %v2146 = vadd.f32 %v2120, %v2144
    %v2147 = vadd.f32 %v2121, %v2140
    %v2148 = vadd.f32 %v2122, %v2144
    %v2149 = vadd.f32 %v2123, %v2140
    %v2150 = vadd.f32 %v2124, %v2144
    %v2151 = vadd.f32 %v2125, %v2140
    %v2152 = vadd.f32 %v2126, %v2144
    %vm2153 = vcmp.gt.f32.partialorder %v2145, 0.0
    %vm2154 = vcmp.gt.f32.partialorder %v2146, 0.0
    %vm2155 = vcmp.gt.f32.partialorder %v2147, 0.0
    %vm2156 = vcmp.gt.f32.partialorder %v2148, 0.0
    %vm2157 = vcmp.gt.f32.partialorder %v2149, 0.0
    %vm2158 = vcmp.gt.f32.partialorder %v2150, 0.0
    %vm2159 = vcmp.gt.f32.partialorder %v2151, 0.0
    %vm2160 = vcmp.gt.f32.partialorder %v2152, 0.0
    %v2161 = vmul.f32 %v2145, 0.1
    %v2162 = vmul.f32 %v2146, 0.1
    %v2163 = vmul.f32 %v2147, 0.1
    %v2164 = vmul.f32 %v2148, 0.1
    %v2165 = vmul.f32 %v2149, 0.1
    %v2166 = vmul.f32 %v2150, 0.1
    %v2167 = vmul.f32 %v2151, 0.1
    %v2168 = vmul.f32 %v2152, 0.1
    %v2169 = vsel %vm2153, %v2145, %v2161
    %v2170 = vsel %vm2154, %v2146, %v2162
    %v2171 = vsel %vm2155, %v2147, %v2163
    %v2172 = vsel %vm2156, %v2148, %v2164
    %v2173 = vsel %vm2157, %v2149, %v2165
    %v2174 = vsel %vm2158, %v2150, %v2166
    %v2175 = vsel %vm2159, %v2151, %v2167
    %v2176 = vsel %vm2160, %v2152, %v2168
    %v2177 = vld [vmem:[%s16] sm:$0xf]
    %v2178 = vld [vmem:[#allocation12] sm:$0xff]
    %v2179 = vld [vmem:[#allocation12 + $0x8] sm:$0xff]
    %v2180 = vld [vmem:[#allocation12 + $0x10] sm:$0xff]
    %v2181 = vld [vmem:[#allocation12 + $0x18] sm:$0xff]
    %v2182 = vld [vmem:[#allocation12 + $0x20] sm:$0xff]
    %v2183 = vld [vmem:[#allocation12 + $0x28] sm:$0xff]
    %v2184 = vld [vmem:[#allocation12 + $0x30] sm:$0xff]
    %v2185 = vld [vmem:[#allocation12 + $0x38] sm:$0xff]
    %v2186 = vld [vmem:[#allocation12 + $0x40] sm:$0xff]
    %v2187 = vld [vmem:[#allocation12 + $0x48] sm:$0xff]
    %v2188 = vld [vmem:[#allocation12 + $0x50] sm:$0xff]
    %v2189 = vld [vmem:[#allocation12 + $0x58] sm:$0xff]
    %v2190 = vld [vmem:[#allocation12 + $0x60] sm:$0xff]
    %v2191 = vld [vmem:[#allocation12 + $0x68] sm:$0xff]
    %v2192 = vld [vmem:[#allocation12 + $0x70] sm:$0xff]
    %v2193 = vld [vmem:[#allocation12 + $0x78] sm:$0xff]
    %v2194 = vld [vmem:[#allocation12 + $0x80] sm:$0xff]
    %v2195 = vld [vmem:[#allocation12 + $0x88] sm:$0xff]
    %v2196 = vld [vmem:[#allocation12 + $0x90] sm:$0xff]
    %v2197 = vld [vmem:[#allocation12 + $0x98] sm:$0xff]
    %v2198 = vld [vmem:[#allocation12 + $0xa0] sm:$0xff]
    %v2199 = vld [vmem:[#allocation12 + $0xa8] sm:$0xff]
    %v2200 = vld [vmem:[#allocation12 + $0xb0] sm:$0xff]
    %v2201 = vld [vmem:[#allocation12 + $0xb8] sm:$0xff]
    %v2202 = vld [vmem:[#allocation12 + $0xc0] sm:$0xff]
    %v2203 = vld [vmem:[#allocation12 + $0xc8] sm:$0xff]
    %v2204 = vld [vmem:[#allocation12 + $0xd0] sm:$0xff]
    %v2205 = vld [vmem:[#allocation12 + $0xd8] sm:$0xff]
    %v2206 = vld [vmem:[#allocation12 + $0xe0] sm:$0xff]
    %v2207 = vld [vmem:[#allocation12 + $0xe8] sm:$0xff]
    %v2208 = vld [vmem:[#allocation12 + $0xf0] sm:$0xff]
    %v2209 = vld [vmem:[#allocation12 + $0xf8] sm:$0xff]
    %2210 = vmatprep.subr.mxu0 %v2179
    %2211 = vmatpush1.msra.mxu0 %v2178
    %2212 = vmatprep.subr.mxu0 %v2181
    %2213 = vmatpush1.msra.mxu0 %v2180
    %2214 = vmatprep.subr.mxu0 %v2183
    %2215 = vmatpush1.msra.mxu0 %v2182
    %2216 = vmatprep.subr.mxu0 %v2185
    %2217 = vmatpush1.msra.mxu0 %v2184
    %2218 = vmatprep.subr.mxu0 %v2187
    %2219 = vmatpush1.msra.mxu0 %v2186
    %2220 = vmatprep.subr.mxu0 %v2189
    %2221 = vmatpush1.msra.mxu0 %v2188
    %2222 = vmatprep.subr.mxu0 %v2191
    %2223 = vmatpush1.msra.mxu0 %v2190
    %2224 = vmatprep.subr.mxu0 %v2193
    %2225 = vmatpush1.msra.mxu0 %v2192
    %2226 = vmatprep.subr.mxu0 %v2195
    %2227 = vmatpush1.msra.mxu0 %v2194
    %2228 = vmatprep.subr.mxu0 %v2197
    %2229 = vmatpush1.msra.mxu0 %v2196
    %2230 = vmatprep.subr.mxu0 %v2199
    %2231 = vmatpush1.msra.mxu0 %v2198
    %2232 = vmatprep.subr.mxu0 %v2201
    %2233 = vmatpush1.msra.mxu0 %v2200
    %2234 = vmatprep.subr.mxu0 %v2203
    %2235 = vmatpush1.msra.mxu0 %v2202
    %2236 = vmatprep.subr.mxu0 %v2205
    %2237 = vmatpush1.msra.mxu0 %v2204
    %2238 = vmatprep.subr.mxu0 %v2207
    %2239 = vmatpush1.msra.mxu0 %v2206
    %2240 = vmatprep.subr.mxu0 %v2209
    %2241 = vmatpush1.msra.mxu0 %v2208
    %2242 = vmatprep.subr.mxu0 0.0
    %2243 = vmatpush1.msra.mxu0 0.0
    %2244 = vmatprep.subr.mxu0 0.0
    %2245 = vmatpush1.msra.mxu0 0.0
    %2246 = vmatprep.subr.mxu0 0.0
    %2247 = vmatpush1.msra.mxu0 0.0
    %2248 = vmatprep.subr.mxu0 0.0
    %2249 = vmatpush1.msra.mxu0 0.0
    %2250 = vmatprep.subr.mxu0 0.0
    %2251 = vmatpush1.msra.mxu0 0.0
    %2252 = vmatprep.subr.mxu0 0.0
    %2253 = vmatpush1.msra.mxu0 0.0
    %2254 = vmatprep.subr.mxu0 0.0
    %2255 = vmatpush1.msra.mxu0 0.0
    %2256 = vmatprep.subr.mxu0 0.0
    %2257 = vmatpush1.msra.mxu0 0.0
    %2258 = vmatprep.subr.mxu0 0.0
    %2259 = vmatpush1.msra.mxu0 0.0
    %2260 = vmatprep.subr.mxu0 0.0
    %2261 = vmatpush1.msra.mxu0 0.0
    %2262 = vmatprep.subr.mxu0 0.0
    %2263 = vmatpush1.msra.mxu0 0.0
    %2264 = vmatprep.subr.mxu0 0.0
    %2265 = vmatpush1.msra.mxu0 0.0
    %2266 = vmatprep.subr.mxu0 0.0
    %2267 = vmatpush1.msra.mxu0 0.0
    %2268 = vmatprep.subr.mxu0 0.0
    %2269 = vmatpush1.msra.mxu0 0.0
    %2270 = vmatprep.subr.mxu0 0.0
    %2271 = vmatpush1.msra.mxu0 0.0
    %2272 = vmatprep.subr.mxu0 0.0
    %2273 = vmatpush1.msra.mxu0 0.0
    %2274 = vmatprep.mubr.f32.mxu0 0.0
    %2275 = vmatmul.mubr.f32.gmra.mrb[0].mxu0 %v1765
    %v2276 = vpop.f32.mrb[0].mxu0
    %v2277 = vadd.f32 0.0, %v2276
    %v2278 = vpop.f32.mrb[0].mxu0
    %v2279 = vadd.f32 0.0, %v2278
    %2280 = vmatprep.mubr.f32.mxu0 0.0
    %2281 = vmatmul.mubr.f32.gmra.mrb[0].mxu0 %v1766
    %v2282 = vpop.f32.mrb[0].mxu0
    %v2283 = vadd.f32 0.0, %v2282
    %v2284 = vpop.f32.mrb[0].mxu0
    %v2285 = vadd.f32 0.0, %v2284
    %2286 = vmatprep.mubr.f32.mxu0 0.0
    %2287 = vmatmul.mubr.f32.gmra.mrb[0].mxu0 %v1767
    %v2288 = vpop.f32.mrb[0].mxu0
    %v2289 = vadd.f32 0.0, %v2288
    %v2290 = vpop.f32.mrb[0].mxu0
    %v2291 = vadd.f32 0.0, %v2290
    %2292 = vmatprep.mubr.f32.mxu0 0.0
    %2293 = vmatmul.mubr.f32.gmra.mrb[0].mxu0 %v1768
    %v2294 = vpop.f32.mrb[0].mxu0
    %v2295 = vadd.f32 0.0, %v2294
    %v2296 = vpop.f32.mrb[0].mxu0
    %v2297 = vadd.f32 0.0, %v2296
    %2298 = vdwg.mxu0
    %v2300 = vlaneseq
    %v2301 = vshrl.u32 %v2300, 7
    %v2302 = vsub.s32 0, %v2301
    %v2303 = vrot.slane %v2177, %v2302
    %v2304 = vlaneseq
    %v2305 = vshrl.u32 %v2304, 7
    %v2306 = vsub.s32 2, %v2305
    %v2307 = vrot.slane %v2177, %v2306
    %v2310 = vlaneseq
    %v2311 = vshrl.u32 %v2310, 7
    %v2312 = vsub.s32 0, %v2311
    %v2313 = vrot.slane %v2303, %v2312
    %v2314 = vlaneseq
    %v2315 = vshrl.u32 %v2314, 7
    %v2316 = vsub.s32 0, %v2315
    %v2317 = vrot.slane %v2307, %v2316
    %v2318 = vmul.f32 %v2277, %v2313
    %v2319 = vmul.f32 %v2279, %v2317
    %v2320 = vmul.f32 %v2283, %v2313
    %v2321 = vmul.f32 %v2285, %v2317
    %v2322 = vmul.f32 %v2289, %v2313
    %v2323 = vmul.f32 %v2291, %v2317
    %v2324 = vmul.f32 %v2295, %v2313
    %v2325 = vmul.f32 %v2297, %v2317
    %v2326 = vlaneseq
    %v2327 = vshrl.u32 %v2326, 7
    %v2328 = vsub.s32 1, %v2327
    %v2329 = vrot.slane %v2177, %v2328
    %v2330 = vlaneseq
    %v2331 = vshrl.u32 %v2330, 7
    %v2332 = vsub.s32 3, %v2331
    %v2333 = vrot.slane %v2177, %v2332
    %v2336 = vlaneseq
    %v2337 = vshrl.u32 %v2336, 7
    %v2338 = vsub.s32 1, %v2337
    %v2339 = vrot.slane %v2329, %v2338
    %v2340 = vlaneseq
    %v2341 = vshrl.u32 %v2340, 7
    %v2342 = vsub.s32 1, %v2341
    %v2343 = vrot.slane %v2333, %v2342
    %v2344 = vadd.f32 %v2318, %v2339
    %v2345 = vadd.f32 %v2319, %v2343
    %v2346 = vadd.f32 %v2320, %v2339
    %v2347 = vadd.f32 %v2321, %v2343
    %v2348 = vadd.f32 %v2322, %v2339
    %v2349 = vadd.f32 %v2323, %v2343
    %v2350 = vadd.f32 %v2324, %v2339
    %v2351 = vadd.f32 %v2325, %v2343
    %v2352 = vadd.f32 %v2169, %v2344
    %v2353 = vadd.f32 %v2170, %v2345
    %v2354 = vadd.f32 %v2171, %v2346
    %v2355 = vadd.f32 %v2172, %v2347
    %v2356 = vadd.f32 %v2173, %v2348
    %v2357 = vadd.f32 %v2174, %v2349
    %v2358 = vadd.f32 %v2175, %v2350
    %v2359 = vadd.f32 %v2176, %v2351
    %v2360 = vmax.f32 %v2352, 0.0
    %v2361 = vmax.f32 %v2353, 0.0
    %v2362 = vmax.f32 %v2354, 0.0
    %v2363 = vmax.f32 %v2355, 0.0
    %v2364 = vmax.f32 %v2356, 0.0
    %v2365 = vmax.f32 %v2357, 0.0
    %v2366 = vmax.f32 %v2358, 0.0
    %v2367 = vmax.f32 %v2359, 0.0
    %v2368 = vadd.f32 %v2360, %v2362
    %v2369 = vrot.slane %v2368, 4
    %v2370 = vadd.f32 %v2368, %v2369
    %v2371 = vrot.slane %v2370, 2
    %v2372 = vadd.f32 %v2370, %v2371
    %v2373 = vrot.slane %v2372, 1
    %v2374 = vadd.f32 %v2372, %v2373
    %v2375 = vadd.f32 %v2361, %v2363
    %v2376 = vrot.slane %v2375, 4
    %v2377 = vadd.f32 %v2375, %v2376
    %v2378 = vrot.slane %v2377, 2
    %v2379 = vadd.f32 %v2377, %v2378
    %v2380 = vrot.slane %v2379, 1
    %v2381 = vadd.f32 %v2379, %v2380
    %v2382 = vadd.f32 %v2364, %v2366
    %v2383 = vrot.slane %v2382, 4
    %v2384 = vadd.f32 %v2382, %v2383
    %v2385 = vrot.slane %v2384, 2
    %v2386 = vadd.f32 %v2384, %v2385
    %v2387 = vrot.slane %v2386, 1
    %v2388 = vadd.f32 %v2386, %v2387
    %v2389 = vadd.f32 %v2365, %v2367
    %v2390 = vrot.slane %v2389, 4
    %v2391 = vadd.f32 %v2389, %v2390
    %v2392 = vrot.slane %v2391, 2
    %v2393 = vadd.f32 %v2391, %v2392
    %v2394 = vrot.slane %v2393, 1
    %v2395 = vadd.f32 %v2393, %v2394
    %v2396 = vrcp.pop 16.0
    %v2397 = vmul.f32 %v2374, %v2396
    %v2398 = vmul.f32 %v2381, %v2396
    %v2399 = vmul.f32 %v2388, %v2396
    %v2400 = vmul.f32 %v2395, %v2396
    %v2401 = vld [vmem:[%s17] sm:$0xff]
    %v2402 = vld [vmem:[%s17 + $0x8] sm:$0xff]
    %v2403 = vld [vmem:[%s17 + $0x10] sm:$0xff]
    %v2404 = vld [vmem:[%s17 + $0x18] sm:$0xff]
    %v2405 = vld [vmem:[%s17 + $0x20] sm:$0xff]
    %v2406 = vld [vmem:[%s17 + $0x28] sm:$0xff]
    %v2407 = vld [vmem:[%s17 + $0x30] sm:$0xff]
    %v2408 = vld [vmem:[%s17 + $0x38] sm:$0xff]
    %v2409 = vld [vmem:[%s17 + $0x40] sm:$0xff]
    %v2410 = vld [vmem:[%s17 + $0x48] sm:$0xff]
    %v2411 = vld [vmem:[%s17 + $0x50] sm:$0xff]
    %v2412 = vld [vmem:[%s17 + $0x58] sm:$0xff]
    %v2413 = vld [vmem:[%s17 + $0x60] sm:$0xff]
    %v2414 = vld [vmem:[%s17 + $0x68] sm:$0xff]
    %v2415 = vld [vmem:[%s17 + $0x70] sm:$0xff]
    %v2416 = vld [vmem:[%s17 + $0x78] sm:$0xff]
    %v2417 = vld [vmem:[%s17 + $0x80] sm:$0xff]
    %v2418 = vld [vmem:[%s17 + $0x88] sm:$0xff]
    %v2419 = vld [vmem:[%s17 + $0x90] sm:$0xff]
    %v2420 = vld [vmem:[%s17 + $0x98] sm:$0xff]
    %v2421 = vld [vmem:[%s17 + $0xa0] sm:$0xff]
    %v2422 = vld [vmem:[%s17 + $0xa8] sm:$0xff]
    %v2423 = vld [vmem:[%s17 + $0xb0] sm:$0xff]
    %v2424 = vld [vmem:[%s17 + $0xb8] sm:$0xff]
    %v2425 = vld [vmem:[%s17 + $0xc0] sm:$0xff]
    %v2426 = vld [vmem:[%s17 + $0xc8] sm:$0xff]
    %v2427 = vld [vmem:[%s17 + $0xd0] sm:$0xff]
    %v2428 = vld [vmem:[%s17 + $0xd8] sm:$0xff]
    %v2429 = vld [vmem:[%s17 + $0xe0] sm:$0xff]
    %v2430 = vld [vmem:[%s17 + $0xe8] sm:$0xff]
    %v2431 = vld [vmem:[%s17 + $0xf0] sm:$0xff]
    %v2432 = vld [vmem:[%s17 + $0xf8] sm:$0xff]
    %v2433 = vld [vmem:[%s18] sm:$0x1]
    %v2435 = vlaneseq
    %v2436 = vshrl.u32 %v2435, 7
    %v2437 = vsub.s32 0, %v2436
    %v2438 = vrot.slane %v2433, %v2437
    %vm2444 = vcmask 1041409
    %v2445 = vsel %vm2444, %v2399, %v2397
    %v2446 = vsel %vm2444, %v2400, %v2398
    %2449 = vmatprep.subr.mxu0 0.0
    %2450 = vmatpush1.msra.mxu0 %v2401
    %2451 = vmatprep.subr.mxu0 0.0
    %2452 = vmatpush1.msra.mxu0 %v2402
    %2453 = vmatprep.subr.mxu0 0.0
    %2454 = vmatpush1.msra.mxu0 %v2403
    %2455 = vmatprep.subr.mxu0 0.0
    %2456 = vmatpush1.msra.mxu0 %v2404
    %2457 = vmatprep.subr.mxu0 0.0
    %2458 = vmatpush1.msra.mxu0 %v2405
    %2459 = vmatprep.subr.mxu0 0.0
    %2460 = vmatpush1.msra.mxu0 %v2406
    %2461 = vmatprep.subr.mxu0 0.0
    %2462 = vmatpush1.msra.mxu0 %v2407
    %2463 = vmatprep.subr.mxu0 0.0
    %2464 = vmatpush1.msra.mxu0 %v2408
    %2465 = vmatprep.subr.mxu0 0.0
    %2466 = vmatpush1.msra.mxu0 %v2409
    %2467 = vmatprep.subr.mxu0 0.0
    %2468 = vmatpush1.msra.mxu0 %v2410
    %2469 = vmatprep.subr.mxu0 0.0
    %2470 = vmatpush1.msra.mxu0 %v2411
    %2471 = vmatprep.subr.mxu0 0.0
    %2472 = vmatpush1.msra.mxu0 %v2412
    %2473 = vmatprep.subr.mxu0 0.0
    %2474 = vmatpush1.msra.mxu0 %v2413
    %2475 = vmatprep.subr.mxu0 0.0
    %2476 = vmatpush1.msra.mxu0 %v2414
    %2477 = vmatprep.subr.mxu0 0.0
    %2478 = vmatpush1.msra.mxu0 %v2415
    %2479 = vmatprep.subr.mxu0 0.0
    %2480 = vmatpush1.msra.mxu0 %v2416
    %2481 = vmatprep.subr.mxu0 0.0
    %2482 = vmatpush1.msra.mxu0 %v2417
    %2483 = vmatprep.subr.mxu0 0.0
    %2484 = vmatpush1.msra.mxu0 %v2418
    %2485 = vmatprep.subr.mxu0 0.0
    %2486 = vmatpush1.msra.mxu0 %v2419
    %2487 = vmatprep.subr.mxu0 0.0
    %2488 = vmatpush1.msra.mxu0 %v2420
    %2489 = vmatprep.subr.mxu0 0.0
    %2490 = vmatpush1.msra.mxu0 %v2421
    %2491 = vmatprep.subr.mxu0 0.0
    %2492 = vmatpush1.msra.mxu0 %v2422
    %2493 = vmatprep.subr.mxu0 0.0
    %2494 = vmatpush1.msra.mxu0 %v2423
    %2495 = vmatprep.subr.mxu0 0.0
    %2496 = vmatpush1.msra.mxu0 %v2424
    %2497 = vmatprep.subr.mxu0 0.0
    %2498 = vmatpush1.msra.mxu0 %v2425
    %2499 = vmatprep.subr.mxu0 0.0
    %2500 = vmatpush1.msra.mxu0 %v2426
    %2501 = vmatprep.subr.mxu0 0.0
    %2502 = vmatpush1.msra.mxu0 %v2427
    %2503 = vmatprep.subr.mxu0 0.0
    %2504 = vmatpush1.msra.mxu0 %v2428
    %2505 = vmatprep.subr.mxu0 0.0
    %2506 = vmatpush1.msra.mxu0 %v2429
    %2507 = vmatprep.subr.mxu0 0.0
    %2508 = vmatpush1.msra.mxu0 %v2430
    %2509 = vmatprep.subr.mxu0 0.0
    %2510 = vmatpush1.msra.mxu0 %v2431
    %2511 = vmatprep.subr.mxu0 0.0
    %2512 = vmatpush1.msra.mxu0 %v2432
    %2513 = vmatprep.mubr.f32.mxu0 %v2446
    %2514 = vmatmul.mubr.f32.gmra.mrb[0].mxu0 %v2445
    %v2515 = vpop.f32.mrb[0].mxu0
    %v2516 = vadd.f32 %v2438, %v2515
    %v2517 = vpop.f32.mrb[0].mxu0
    %2518 = vdwg.mxu0
    %v2519 = vmax.f32 %v2516, 0.0
    %vm2520 = vcmask 123904
    %2521 = vst.msk [vmem:[%s19] sm:$0x3] %vm2520, %v2519
    // Predicated region
    $region106: #{cnn_forward.1} parent=1 // pred_check
      _
    $region107: #{cnn_forward.1} parent=1 // pred_check_branch
      %2523 = sbr.rel (0) target = $region109
    $region108: #{cnn_forward.1} parent=1 // pred_region
      _
    $region109: #{cnn_forward.1} parent=1 // pred_fallthru
      _
    // Predicated region
    $region110: #{cnn_forward.1} parent=1 // pred_check
      _
    $region111: #{cnn_forward.1} parent=1 // pred_check_branch
      %2525 = sbr.rel (0) target = $region113
    $region112: #{cnn_forward.1} parent=1 // pred_region
      _
    $region113: #{cnn_forward.1} parent=1 // pred_fallthru
      _
    %2526 = vsyncpa [#allocation3], 1
    %2527 = vsyncpa [#allocation5], 1
    %2528 = vsyncpa [#allocation8], 1
    %2529 = vsyncpa [#allocation11], 1

</llo_original>
